<compile_context>
chip_gen: v7x
topology: tpu7x:2x2x1
jax: 0.10.0
libtpu: 0.0.40
codegen_flags: <defaults>
</compile_context>

<pallas_src>
import functools

import jax
import jax.numpy as jnp
from jax.experimental import pallas as pl
from jax.experimental.pallas import tpu as pltpu

# ----------------------------------------------------------------------------
# Config (hidden sizes are hardcoded in the PyTorch module)
# ----------------------------------------------------------------------------
LATENT_DIM = 64
CHANNELS = 1
IMG_SIZE = 16
IMG_FLAT = CHANNELS * IMG_SIZE * IMG_SIZE      # 256
BN_EPS = 0.8
LRELU_SLOPE = 0.2
HIDDEN = [128, 256, 512, 1024]
DEFAULT_TILE_B = 128                           # rows generated per grid step

# Packed layout for the small per-feature vectors (single DMA, static slices).
_VEC_SEGMENTS = [
    ("b1", HIDDEN[0]),        # layer-1 bias (no BN follows -> keep)
    ("b5", IMG_FLAT),         # output-layer bias
    ("g2", HIDDEN[1]), ("be2", HIDDEN[1]),
    ("g3", HIDDEN[2]), ("be3", HIDDEN[2]),
    ("g4", HIDDEN[3]), ("be4", HIDDEN[3]),
]
VEC_OFFSETS = {}
_off = 0
for _name, _n in _VEC_SEGMENTS:
    VEC_OFFSETS[_name] = (_off, _n)
    _off += _n
VEC_TOTAL = _off  # 3968; every segment start is a multiple of 128 (lane aligned)


# ----------------------------------------------------------------------------
# Pallas kernel: full MLP forward for one batch tile; weights are VMEM-resident
# (constant-index BlockSpecs -> fetched once per core, reused every grid step).
# ----------------------------------------------------------------------------
def generator_kernel(z_ref, vec_ref, w1_ref, w2_ref, w3_ref, w4_ref, w5_ref,
                     out_ref):
    def seg(name):
        off, n = VEC_OFFSETS[name]
        return vec_ref[:, off:off + n]           # static, lane-aligned slice (1, n)

    def lrelu(x):
        return jnp.where(x > 0, x, LRELU_SLOPE * x)

    def batchnorm(x, gamma, beta):
        # Training-mode BatchNorm1d: per-feature batch mean / biased variance.
        mean = jnp.mean(x, axis=0, keepdims=True)
        var = jnp.mean((x - mean) * (x - mean), axis=0, keepdims=True)
        inv = jax.lax.rsqrt(var + BN_EPS)
        return (x - mean) * inv * gamma + beta

    def matmul(x, w_ref):
        # bf16 MXU matmul with f32 accumulation.
        return jnp.dot(x.astype(jnp.bfloat16), w_ref[...],
                       preferred_element_type=jnp.float32)

    # Layer 1: Linear(latent -> 128) + LeakyReLU (no BN).
    h = lrelu(matmul(z_ref[...], w1_ref) + seg("b1"))                       # (T, 128)

    # Layers 2-4: Linear (bias dropped -- cancelled by BN mean-sub) + BN + LeakyReLU.
    h = lrelu(batchnorm(matmul(h, w2_ref), seg("g2"), seg("be2")))          # (T, 256)
    h = lrelu(batchnorm(matmul(h, w3_ref), seg("g3"), seg("be3")))          # (T, 512)
    h = lrelu(batchnorm(matmul(h, w4_ref), seg("g4"), seg("be4")))          # (T, 1024)

    # Layer 5: Linear(1024 -> C*H*W) + Tanh.
    out_ref[...] = jnp.tanh(matmul(h, w5_ref) + seg("b5"))                  # (T, 256)


# ----------------------------------------------------------------------------
# Wrapper
# ----------------------------------------------------------------------------
@functools.partial(jax.jit, static_argnames=("tile_b",))
def generator_forward(z, params, tile_b=DEFAULT_TILE_B):
    batch = z.shape[0]
    tile_b = min(tile_b, batch)
    if tile_b % 8 != 0 or batch % tile_b != 0:
        raise ValueError(f"batch={batch} must be a multiple of tile_b={tile_b}, "
                         "and tile_b a multiple of 8")
    num_tiles = batch // tile_b

    def resident(shape):
        # Constant block index -> fetched once, VMEM-resident across grid steps.
        return pl.BlockSpec(shape, lambda i: (0, 0))

    img_flat = pl.pallas_call(
        generator_kernel,
        out_shape=jax.ShapeDtypeStruct((batch, IMG_FLAT), jnp.float32),
        grid=(num_tiles,),
        in_specs=[
            pl.BlockSpec((tile_b, LATENT_DIM), lambda i: (i, 0)),   # z streams
            resident((1, VEC_TOTAL)),                               # packed vectors
            resident((LATENT_DIM, HIDDEN[0])),                      # w1
            resident((HIDDEN[0], HIDDEN[1])),                       # w2
            resident((HIDDEN[1], HIDDEN[2])),                       # w3
            resident((HIDDEN[2], HIDDEN[3])),                       # w4
            resident((HIDDEN[3], IMG_FLAT)),                        # w5
        ],
        out_specs=pl.BlockSpec((tile_b, IMG_FLAT), lambda i: (i, 0)),
        compiler_params=pltpu.CompilerParams(
            # Batch-tile axis is independent work -> shard across v7x's 2 TCs.
            dimension_semantics=("parallel",)),
    )(z, params["vec"], params["w1"], params["w2"],
      params["w3"], params["w4"], params["w5"])

    # Equivalent of img.view(B, *img_shape) -> NCHW.
    return img_flat.reshape(batch, CHANNELS, IMG_SIZE, IMG_SIZE)


# ----------------------------------------------------------------------------
# Deterministic parameter init (synthetic; matches nn.Linear / BatchNorm1d shapes)
# NOTE: weights are stored (fan_in, fan_out) and used as x @ W; real PyTorch
#       checkpoints ((out, in)) must be transposed on load.
# ----------------------------------------------------------------------------
def init_params(key):
    dims = [LATENT_DIM] + HIDDEN + [IMG_FLAT]   # [64, 128, 256, 512, 1024, 256]
    keys = jax.random.split(key, 2 * (len(dims) - 1))
    params = {}
    vecs = {}

    def linear_init(kw, kb, fan_in, fan_out):
        # Uniform(-1/sqrt(fan_in), 1/sqrt(fan_in)), like torch.nn.Linear default.
        bound = 1.0 / float(fan_in) ** 0.5
        w = jax.random.uniform(kw, (fan_in, fan_out), jnp.float32, -bound, bound)
        b = jax.random.uniform(kb, (1, fan_out), jnp.float32, -bound, bound)
        return w, b

    for i in range(5):
        w, b = linear_init(keys[2 * i], keys[2 * i + 1], dims[i], dims[i + 1])
        # Weights are fed to the MXU in bf16 (accumulation stays f32 in-kernel).
        params[f"w{i + 1}"] = w.astype(jnp.bfloat16)
        if i in (0, 4):
            vecs[f"b{i + 1}"] = b
        # Biases for layers 2-4 are mathematically cancelled by training-mode
        # BatchNorm's mean subtraction -> intentionally not materialized.

    # BatchNorm affine params for layers 2..4 (gamma=1, beta=0, as in PyTorch init).
    for i, n in zip((2, 3, 4), HIDDEN[1:]):
        vecs[f"g{i}"] = jnp.ones((1, n), jnp.float32)
        vecs[f"be{i}"] = jnp.zeros((1, n), jnp.float32)

    # Pack all tiny (1, N) vectors into one lane-aligned f32 array (single DMA).
    params["vec"] = jnp.concatenate([vecs[name] for name, _ in _VEC_SEGMENTS], axis=1)
    assert params["vec"].shape == (1, VEC_TOTAL)
    return params


# ----------------------------------------------------------------------------
# Pure-JAX reference (f32 weights, same per-tile BN semantics) for a sanity check.
# ----------------------------------------------------------------------------
def generator_reference(z, params, tile_b):
    def seg(name):
        off, n = VEC_OFFSETS[name]
        return params["vec"][:, off:off + n]

    def lrelu(x):
        return jnp.where(x > 0, x, LRELU_SLOPE * x)

    def bn(x, g, b):
        mean = jnp.mean(x, axis=0, keepdims=True)
        var = jnp.mean((x - mean) ** 2, axis=0, keepdims=True)
        return (x - mean) * jax.lax.rsqrt(var + BN_EPS) * g + b

    w = {k: params[k].astype(jnp.float32) for k in ("w1", "w2", "w3", "w4", "w5")}

    def one_tile(zt):
        h = lrelu(zt @ w["w1"] + seg("b1"))
        h = lrelu(bn(h @ w["w2"], seg("g2"), seg("be2")))
        h = lrelu(bn(h @ w["w3"], seg("g3"), seg("be3")))
        h = lrelu(bn(h @ w["w4"], seg("g4"), seg("be4")))
        return jnp.tanh(h @ w["w5"] + seg("b5"))

    batch = z.shape[0]
    tile_b = min(tile_b, batch)
    tiles = [one_tile(z[i:i + tile_b]) for i in range(0, batch, tile_b)]
    return jnp.concatenate(tiles, axis=0).reshape(batch, CHANNELS, IMG_SIZE, IMG_SIZE)


if __name__ == "__main__":
    key = jax.random.PRNGKey(0)
    k_params, k_z = jax.random.split(key)
    params = init_params(k_params)

    BATCH = 64       # small demo batch
    TILE_B = 32      # 2 grid steps -> exercises the resident-weight batch-tile grid
    z = jax.random.normal(k_z, (BATCH, LATENT_DIM), jnp.float32)

    img = generator_forward(z, params, tile_b=TILE_B)
    img = jax.block_until_ready(img)

    assert img.shape == (BATCH, CHANNELS, IMG_SIZE, IMG_SIZE), img.shape
    assert bool(jnp.all(jnp.isfinite(img)))
    assert bool(jnp.all(jnp.abs(img) <= 1.0))   # tanh output range

    ref = generator_reference(z, params, TILE_B)
    max_err = float(jnp.max(jnp.abs(img - ref)))
    # bf16 weights/activation casts vs f32 reference -> loose tolerance.
    assert max_err < 0.1, max_err

    print("KERNEL_OK")
</pallas_src>

<mosaic_0001>
module attributes {stable_mosaic.version = 11 : i64} {
  func.func @generator_kernel(%arg0: i32, %arg1: memref<32x64xf32, #tpu.memory_space<vmem>>, %arg2: memref<1x3968xf32, #tpu.memory_space<vmem>>, %arg3: memref<64x128xbf16, #tpu.memory_space<vmem>>, %arg4: memref<128x256xbf16, #tpu.memory_space<vmem>>, %arg5: memref<256x512xbf16, #tpu.memory_space<vmem>>, %arg6: memref<512x1024xbf16, #tpu.memory_space<vmem>>, %arg7: memref<1024x256xbf16, #tpu.memory_space<vmem>>, %arg8: memref<32x256xf32, #tpu.memory_space<vmem>>) attributes {dimension_semantics = [#tpu.dimension_semantics<parallel>], iteration_bounds = array<i64: 2>, scalar_prefetch = 0 : i64, scratch_operands = 0 : i64, tpu.core_type = #tpu.core_type<tc>, window_params = [{transform_indices = @transform_0, window_bounds = array<i64: 32, 64>}, {pipeline_mode = #tpu.pipeline_mode<synchronous>, transform_indices = @transform_1, window_bounds = array<i64: 1, 3968>}, {pipeline_mode = #tpu.pipeline_mode<synchronous>, transform_indices = @transform_2, window_bounds = array<i64: 64, 128>}, {pipeline_mode = #tpu.pipeline_mode<synchronous>, transform_indices = @transform_3, window_bounds = array<i64: 128, 256>}, {pipeline_mode = #tpu.pipeline_mode<synchronous>, transform_indices = @transform_4, window_bounds = array<i64: 256, 512>}, {pipeline_mode = #tpu.pipeline_mode<synchronous>, transform_indices = @transform_5, window_bounds = array<i64: 512, 1024>}, {pipeline_mode = #tpu.pipeline_mode<synchronous>, transform_indices = @transform_6, window_bounds = array<i64: 1024, 256>}, {transform_indices = @transform_7, window_bounds = array<i64: 32, 256>}]} {
    %c0 = arith.constant 0 : index
    %c0_0 = arith.constant 0 : index
    %0 = vector.load %arg1[%c0, %c0_0] : memref<32x64xf32, #tpu.memory_space<vmem>>, vector<32x64xf32>
    %1 = arith.truncf %0 : vector<32x64xf32> to vector<32x64xbf16>
    %c0_1 = arith.constant 0 : index
    %c0_2 = arith.constant 0 : index
    %2 = vector.load %arg3[%c0_1, %c0_2] : memref<64x128xbf16, #tpu.memory_space<vmem>>, vector<64x128xbf16>
    %cst = arith.constant dense<0.000000e+00> : vector<32x128xf32>
    %3 = tpu.matmul %1, %2, %cst {dimension_numbers = #tpu.dot_dimension_numbers<[1], [0], [0], [1], [0, 0, 1, 1], [], []>} : vector<32x64xbf16>, vector<64x128xbf16>, vector<32x128xf32> -> vector<32x128xf32>
    %c0_3 = arith.constant 0 : index
    %c0_4 = arith.constant 0 : index
    %4 = vector.load %arg2[%c0_3, %c0_4] : memref<1x3968xf32, #tpu.memory_space<vmem>>, vector<1x128xf32>
    %5 = vector.broadcast %4 : vector<1x128xf32> to vector<32x128xf32>
    %6 = arith.addf %3, %5 : vector<32x128xf32>
    %cst_5 = arith.constant 0.000000e+00 : f32
    %7 = vector.broadcast %cst_5 : f32 to vector<32x128xf32>
    %8 = arith.cmpf ogt, %6, %7 : vector<32x128xf32>
    %cst_6 = arith.constant 2.000000e-01 : f32
    %9 = vector.broadcast %cst_6 : f32 to vector<32x128xf32>
    %10 = arith.mulf %9, %6 : vector<32x128xf32>
    %11 = arith.select %8, %6, %10 : vector<32x128xi1>, vector<32x128xf32>
    %12 = arith.truncf %11 : vector<32x128xf32> to vector<32x128xbf16>
    %c0_7 = arith.constant 0 : index
    %c0_8 = arith.constant 0 : index
    %13 = vector.load %arg4[%c0_7, %c0_8] : memref<128x256xbf16, #tpu.memory_space<vmem>>, vector<128x256xbf16>
    %cst_9 = arith.constant dense<0.000000e+00> : vector<32x256xf32>
    %14 = tpu.matmul %12, %13, %cst_9 {dimension_numbers = #tpu.dot_dimension_numbers<[1], [0], [0], [1], [0, 0, 1, 1], [], []>} : vector<32x128xbf16>, vector<128x256xbf16>, vector<32x256xf32> -> vector<32x256xf32>
    %c0_10 = arith.constant 0 : index
    %c384 = arith.constant 384 : index
    %15 = vector.load %arg2[%c0_10, %c384] : memref<1x3968xf32, #tpu.memory_space<vmem>>, vector<1x256xf32>
    %c0_11 = arith.constant 0 : index
    %c640 = arith.constant 640 : index
    %16 = vector.load %arg2[%c0_11, %c640] : memref<1x3968xf32, #tpu.memory_space<vmem>>, vector<1x256xf32>
    %cst_12 = arith.constant dense<0.000000e+00> : vector<256xf32>
    %17 = vector.multi_reduction <add>, %14, %cst_12 [0] : vector<32x256xf32> to vector<256xf32>
    %18 = vector.shape_cast %17 : vector<256xf32> to vector<1x256xf32>
    %cst_13 = arith.constant 3.200000e+01 : f32
    %19 = vector.broadcast %cst_13 : f32 to vector<1x256xf32>
    %20 = arith.divf %18, %19 : vector<1x256xf32>
    %21 = vector.broadcast %20 : vector<1x256xf32> to vector<32x256xf32>
    %22 = arith.subf %14, %21 : vector<32x256xf32>
    %23 = vector.broadcast %20 : vector<1x256xf32> to vector<32x256xf32>
    %24 = arith.subf %14, %23 : vector<32x256xf32>
    %25 = arith.mulf %22, %24 : vector<32x256xf32>
    %cst_14 = arith.constant dense<0.000000e+00> : vector<256xf32>
    %26 = vector.multi_reduction <add>, %25, %cst_14 [0] : vector<32x256xf32> to vector<256xf32>
    %27 = vector.shape_cast %26 : vector<256xf32> to vector<1x256xf32>
    %cst_15 = arith.constant 3.200000e+01 : f32
    %28 = vector.broadcast %cst_15 : f32 to vector<1x256xf32>
    %29 = arith.divf %27, %28 : vector<1x256xf32>
    %cst_16 = arith.constant 8.000000e-01 : f32
    %30 = vector.broadcast %cst_16 : f32 to vector<1x256xf32>
    %31 = arith.addf %29, %30 : vector<1x256xf32>
    %32 = math.rsqrt %31 : vector<1x256xf32>
    %33 = vector.broadcast %20 : vector<1x256xf32> to vector<32x256xf32>
    %34 = arith.subf %14, %33 : vector<32x256xf32>
    %35 = vector.broadcast %32 : vector<1x256xf32> to vector<32x256xf32>
    %36 = arith.mulf %34, %35 : vector<32x256xf32>
    %37 = vector.broadcast %15 : vector<1x256xf32> to vector<32x256xf32>
    %38 = arith.mulf %36, %37 : vector<32x256xf32>
    %39 = vector.broadcast %16 : vector<1x256xf32> to vector<32x256xf32>
    %40 = arith.addf %38, %39 : vector<32x256xf32>
    %cst_17 = arith.constant 0.000000e+00 : f32
    %41 = vector.broadcast %cst_17 : f32 to vector<32x256xf32>
    %42 = arith.cmpf ogt, %40, %41 : vector<32x256xf32>
    %cst_18 = arith.constant 2.000000e-01 : f32
    %43 = vector.broadcast %cst_18 : f32 to vector<32x256xf32>
    %44 = arith.mulf %43, %40 : vector<32x256xf32>
    %45 = arith.select %42, %40, %44 : vector<32x256xi1>, vector<32x256xf32>
    %46 = arith.truncf %45 : vector<32x256xf32> to vector<32x256xbf16>
    %c0_19 = arith.constant 0 : index
    %c0_20 = arith.constant 0 : index
    %47 = vector.load %arg5[%c0_19, %c0_20] : memref<256x512xbf16, #tpu.memory_space<vmem>>, vector<256x512xbf16>
    %cst_21 = arith.constant dense<0.000000e+00> : vector<32x512xf32>
    %48 = tpu.matmul %46, %47, %cst_21 {dimension_numbers = #tpu.dot_dimension_numbers<[1], [0], [0], [1], [0, 0, 1, 1], [], []>} : vector<32x256xbf16>, vector<256x512xbf16>, vector<32x512xf32> -> vector<32x512xf32>
    %c0_22 = arith.constant 0 : index
    %c896 = arith.constant 896 : index
    %49 = vector.load %arg2[%c0_22, %c896] : memref<1x3968xf32, #tpu.memory_space<vmem>>, vector<1x512xf32>
    %c0_23 = arith.constant 0 : index
    %c1408 = arith.constant 1408 : index
    %50 = vector.load %arg2[%c0_23, %c1408] : memref<1x3968xf32, #tpu.memory_space<vmem>>, vector<1x512xf32>
    %cst_24 = arith.constant dense<0.000000e+00> : vector<512xf32>
    %51 = vector.multi_reduction <add>, %48, %cst_24 [0] : vector<32x512xf32> to vector<512xf32>
    %52 = vector.shape_cast %51 : vector<512xf32> to vector<1x512xf32>
    %cst_25 = arith.constant 3.200000e+01 : f32
    %53 = vector.broadcast %cst_25 : f32 to vector<1x512xf32>
    %54 = arith.divf %52, %53 : vector<1x512xf32>
    %55 = vector.broadcast %54 : vector<1x512xf32> to vector<32x512xf32>
    %56 = arith.subf %48, %55 : vector<32x512xf32>
    %57 = vector.broadcast %54 : vector<1x512xf32> to vector<32x512xf32>
    %58 = arith.subf %48, %57 : vector<32x512xf32>
    %59 = arith.mulf %56, %58 : vector<32x512xf32>
    %cst_26 = arith.constant dense<0.000000e+00> : vector<512xf32>
    %60 = vector.multi_reduction <add>, %59, %cst_26 [0] : vector<32x512xf32> to vector<512xf32>
    %61 = vector.shape_cast %60 : vector<512xf32> to vector<1x512xf32>
    %cst_27 = arith.constant 3.200000e+01 : f32
    %62 = vector.broadcast %cst_27 : f32 to vector<1x512xf32>
    %63 = arith.divf %61, %62 : vector<1x512xf32>
    %cst_28 = arith.constant 8.000000e-01 : f32
    %64 = vector.broadcast %cst_28 : f32 to vector<1x512xf32>
    %65 = arith.addf %63, %64 : vector<1x512xf32>
    %66 = math.rsqrt %65 : vector<1x512xf32>
    %67 = vector.broadcast %54 : vector<1x512xf32> to vector<32x512xf32>
    %68 = arith.subf %48, %67 : vector<32x512xf32>
    %69 = vector.broadcast %66 : vector<1x512xf32> to vector<32x512xf32>
    %70 = arith.mulf %68, %69 : vector<32x512xf32>
    %71 = vector.broadcast %49 : vector<1x512xf32> to vector<32x512xf32>
    %72 = arith.mulf %70, %71 : vector<32x512xf32>
    %73 = vector.broadcast %50 : vector<1x512xf32> to vector<32x512xf32>
    %74 = arith.addf %72, %73 : vector<32x512xf32>
    %cst_29 = arith.constant 0.000000e+00 : f32
    %75 = vector.broadcast %cst_29 : f32 to vector<32x512xf32>
    %76 = arith.cmpf ogt, %74, %75 : vector<32x512xf32>
    %cst_30 = arith.constant 2.000000e-01 : f32
    %77 = vector.broadcast %cst_30 : f32 to vector<32x512xf32>
    %78 = arith.mulf %77, %74 : vector<32x512xf32>
    %79 = arith.select %76, %74, %78 : vector<32x512xi1>, vector<32x512xf32>
    %80 = arith.truncf %79 : vector<32x512xf32> to vector<32x512xbf16>
    %c0_31 = arith.constant 0 : index
    %c0_32 = arith.constant 0 : index
    %81 = vector.load %arg6[%c0_31, %c0_32] : memref<512x1024xbf16, #tpu.memory_space<vmem>>, vector<512x1024xbf16>
    %cst_33 = arith.constant dense<0.000000e+00> : vector<32x1024xf32>
    %82 = tpu.matmul %80, %81, %cst_33 {dimension_numbers = #tpu.dot_dimension_numbers<[1], [0], [0], [1], [0, 0, 1, 1], [], []>} : vector<32x512xbf16>, vector<512x1024xbf16>, vector<32x1024xf32> -> vector<32x1024xf32>
    %c0_34 = arith.constant 0 : index
    %c1920 = arith.constant 1920 : index
    %83 = vector.load %arg2[%c0_34, %c1920] : memref<1x3968xf32, #tpu.memory_space<vmem>>, vector<1x1024xf32>
    %c0_35 = arith.constant 0 : index
    %c2944 = arith.constant 2944 : index
    %84 = vector.load %arg2[%c0_35, %c2944] : memref<1x3968xf32, #tpu.memory_space<vmem>>, vector<1x1024xf32>
    %cst_36 = arith.constant dense<0.000000e+00> : vector<1024xf32>
    %85 = vector.multi_reduction <add>, %82, %cst_36 [0] : vector<32x1024xf32> to vector<1024xf32>
    %86 = vector.shape_cast %85 : vector<1024xf32> to vector<1x1024xf32>
    %cst_37 = arith.constant 3.200000e+01 : f32
    %87 = vector.broadcast %cst_37 : f32 to vector<1x1024xf32>
    %88 = arith.divf %86, %87 : vector<1x1024xf32>
    %89 = vector.broadcast %88 : vector<1x1024xf32> to vector<32x1024xf32>
    %90 = arith.subf %82, %89 : vector<32x1024xf32>
    %91 = vector.broadcast %88 : vector<1x1024xf32> to vector<32x1024xf32>
    %92 = arith.subf %82, %91 : vector<32x1024xf32>
    %93 = arith.mulf %90, %92 : vector<32x1024xf32>
    %cst_38 = arith.constant dense<0.000000e+00> : vector<1024xf32>
    %94 = vector.multi_reduction <add>, %93, %cst_38 [0] : vector<32x1024xf32> to vector<1024xf32>
    %95 = vector.shape_cast %94 : vector<1024xf32> to vector<1x1024xf32>
    %cst_39 = arith.constant 3.200000e+01 : f32
    %96 = vector.broadcast %cst_39 : f32 to vector<1x1024xf32>
    %97 = arith.divf %95, %96 : vector<1x1024xf32>
    %cst_40 = arith.constant 8.000000e-01 : f32
    %98 = vector.broadcast %cst_40 : f32 to vector<1x1024xf32>
    %99 = arith.addf %97, %98 : vector<1x1024xf32>
    %100 = math.rsqrt %99 : vector<1x1024xf32>
    %101 = vector.broadcast %88 : vector<1x1024xf32> to vector<32x1024xf32>
    %102 = arith.subf %82, %101 : vector<32x1024xf32>
    %103 = vector.broadcast %100 : vector<1x1024xf32> to vector<32x1024xf32>
    %104 = arith.mulf %102, %103 : vector<32x1024xf32>
    %105 = vector.broadcast %83 : vector<1x1024xf32> to vector<32x1024xf32>
    %106 = arith.mulf %104, %105 : vector<32x1024xf32>
    %107 = vector.broadcast %84 : vector<1x1024xf32> to vector<32x1024xf32>
    %108 = arith.addf %106, %107 : vector<32x1024xf32>
    %cst_41 = arith.constant 0.000000e+00 : f32
    %109 = vector.broadcast %cst_41 : f32 to vector<32x1024xf32>
    %110 = arith.cmpf ogt, %108, %109 : vector<32x1024xf32>
    %cst_42 = arith.constant 2.000000e-01 : f32
    %111 = vector.broadcast %cst_42 : f32 to vector<32x1024xf32>
    %112 = arith.mulf %111, %108 : vector<32x1024xf32>
    %113 = arith.select %110, %108, %112 : vector<32x1024xi1>, vector<32x1024xf32>
    %114 = arith.truncf %113 : vector<32x1024xf32> to vector<32x1024xbf16>
    %c0_43 = arith.constant 0 : index
    %c0_44 = arith.constant 0 : index
    %115 = vector.load %arg7[%c0_43, %c0_44] : memref<1024x256xbf16, #tpu.memory_space<vmem>>, vector<1024x256xbf16>
    %cst_45 = arith.constant dense<0.000000e+00> : vector<32x256xf32>
    %116 = tpu.matmul %114, %115, %cst_45 {dimension_numbers = #tpu.dot_dimension_numbers<[1], [0], [0], [1], [0, 0, 1, 1], [], []>} : vector<32x1024xbf16>, vector<1024x256xbf16>, vector<32x256xf32> -> vector<32x256xf32>
    %c0_46 = arith.constant 0 : index
    %c128 = arith.constant 128 : index
    %117 = vector.load %arg2[%c0_46, %c128] : memref<1x3968xf32, #tpu.memory_space<vmem>>, vector<1x256xf32>
    %118 = vector.broadcast %117 : vector<1x256xf32> to vector<32x256xf32>
    %119 = arith.addf %116, %118 : vector<32x256xf32>
    %120 = math.tanh %119 : vector<32x256xf32>
    %c0_47 = arith.constant 0 : index
    %c0_48 = arith.constant 0 : index
    %121 = vector.load %arg8[%c0_47, %c0_48] : memref<32x256xf32, #tpu.memory_space<vmem>>, vector<32x256xf32>
    tpu.vector_store %arg8[%c0_47, %c0_48], %120 {strides = array<i32>} : memref<32x256xf32, #tpu.memory_space<vmem>>, vector<32x256xf32>,
    return
  }
  func.func @transform_0(%arg0: i32) -> (i32, i32) {
    %c0_i32 = arith.constant 0 : i32
    %c0_i32_0 = arith.constant 0 : i32
    return %arg0, %c0_i32 : i32, i32
  }
  func.func @transform_1(%arg0: i32) -> (i32, i32) {
    %c0_i32 = arith.constant 0 : i32
    %c0_i32_0 = arith.constant 0 : i32
    %c0_i32_1 = arith.constant 0 : i32
    return %c0_i32, %c0_i32_0 : i32, i32
  }
  func.func @transform_2(%arg0: i32) -> (i32, i32) {
    %c0_i32 = arith.constant 0 : i32
    %c0_i32_0 = arith.constant 0 : i32
    %c0_i32_1 = arith.constant 0 : i32
    return %c0_i32, %c0_i32_0 : i32, i32
  }
  func.func @transform_3(%arg0: i32) -> (i32, i32) {
    %c0_i32 = arith.constant 0 : i32
    %c0_i32_0 = arith.constant 0 : i32
    %c0_i32_1 = arith.constant 0 : i32
    return %c0_i32, %c0_i32_0 : i32, i32
  }
  func.func @transform_4(%arg0: i32) -> (i32, i32) {
    %c0_i32 = arith.constant 0 : i32
    %c0_i32_0 = arith.constant 0 : i32
    %c0_i32_1 = arith.constant 0 : i32
    return %c0_i32, %c0_i32_0 : i32, i32
  }
  func.func @transform_5(%arg0: i32) -> (i32, i32) {
    %c0_i32 = arith.constant 0 : i32
    %c0_i32_0 = arith.constant 0 : i32
    %c0_i32_1 = arith.constant 0 : i32
    return %c0_i32, %c0_i32_0 : i32, i32
  }
  func.func @transform_6(%arg0: i32) -> (i32, i32) {
    %c0_i32 = arith.constant 0 : i32
    %c0_i32_0 = arith.constant 0 : i32
    %c0_i32_1 = arith.constant 0 : i32
    return %c0_i32, %c0_i32_0 : i32, i32
  }
  func.func @transform_7(%arg0: i32) -> (i32, i32) {
    %c0_i32 = arith.constant 0 : i32
    %c0_i32_0 = arith.constant 0 : i32
    return %arg0, %c0_i32 : i32, i32
  }
}

</mosaic_0001>

<llo_original>
// kernel: generator_forward.1
$region0: #{generator_forward.1}
  #allocation0 [shape = 'u32[]', space=smem, size = 0x4, offset = 0x4, fixed_abs, tag = 'smem constant byte address 0x4 - core index']
  #allocation1 [shape = 'u32[144,128]{1,0:T(1,128)}', space=vmem, size = 0x12000, scoped, tag = 'internal scratch']
  %s0 = inlined_call_operand.hbm [shape: f32[64,64], index: 0, kind: input, shape index: {}]
  %s1 = inlined_call_operand.hbm [shape: f32[1,3968], index: 1, kind: input, shape index: {}]
  %s2 = inlined_call_operand.hbm [shape: bf16[64,128], index: 2, kind: input, shape index: {}]
  %s3 = inlined_call_operand.hbm [shape: bf16[128,256], index: 3, kind: input, shape index: {}]
  %s4 = inlined_call_operand.hbm [shape: bf16[256,512], index: 4, kind: input, shape index: {}]
  %s5 = inlined_call_operand.hbm [shape: bf16[512,1024], index: 5, kind: input, shape index: {}]
  %s6 = inlined_call_operand.hbm [shape: bf16[1024,256], index: 6, kind: input, shape index: {}]
  %s7 = inlined_call_operand.vmem [shape: f32[64,256], index: 7, kind: output, shape index: {}]
  %s8 = sld [smem:[#allocation0]]
  $region89: #{generator_forward.1} parent=0
    _
  %s10 = ssub.s32 1, %s8
  %s11 = scalar_select 0, %s10, %s8
  $region1: #{generator_forward.1} parent=0
    #allocation2 [shape = 'u8[32768]{0}', space=vmem, size = 0x8000, scoped, tag = 'input window, operand 0']
    #allocation3 [shape = 's32[2]{0}', space=sflag, size = 0x8, scoped, tag = 'scoped memory for generator_forward.1']
    #allocation4 [shape = 'u8[15872]{0}', space=vmem, size = 0x4000, scoped, tag = 'input window, operand 1, single buffered']
    #allocation5 [shape = 's32[1]{0}', space=sflag, size = 0x4, scoped, tag = 'scoped memory for generator_forward.1']
    #allocation6 [shape = 'u8[16384]{0}', space=vmem, size = 0x4000, scoped, tag = 'input window, operand 2, single buffered']
    #allocation7 [shape = 'u8[65536]{0}', space=vmem, size = 0x10000, scoped, tag = 'input window, operand 3, single buffered']
    #allocation8 [shape = 's32[1]{0}', space=sflag, size = 0x4, scoped, tag = 'scoped memory for generator_forward.1']
    #allocation9 [shape = 'u8[262144]{0}', space=vmem, size = 0x40000, scoped, tag = 'input window, operand 4, single buffered']
    #allocation10 [shape = 'u8[1048576]{0}', space=vmem, size = 0x100000, scoped, tag = 'input window, operand 5, single buffered']
    #allocation11 [shape = 's32[1]{0}', space=sflag, size = 0x4, scoped, tag = 'scoped memory for generator_forward.1']
    #allocation12 [shape = 'u8[524288]{0}', space=vmem, size = 0x80000, scoped, tag = 'input window, operand 6, single buffered']
    %12 = vsyncpa [#allocation3], 0
    %s13 = scalar_lea.sflag [#allocation3], 1
    %14 = vsyncpa %s13, 0
    %15 = vsyncpa [#allocation5], 0
    %16 = vsyncpa [#allocation8], 0
    %17 = vsyncpa [#allocation11], 0
    loop: start=0, step=1, limit=4
    $region2: #{generator_forward.1} parent=1 // loop_pre_header
      _
    $region3: #{generator_forward.1} parent=1 // loop_header
      %s19 = sphi 0, %s23
      %p20 = scmp.ge.s32.totalorder %s19, 4
      %s29 = sphi 0, %s31
      %s32 = sphi 0, %s29
      %s33 = sphi 0, %s32
      %s49 = sphi 0, %s33
      %s53 = sphi 0, %s53
      %s55 = sphi 0, %s53
      %s56 = sphi 0, %s55
      %s70 = sphi 0, %s56
      %s74 = sphi 0, %s74
      %s76 = sphi 0, %s74
      %s77 = sphi 0, %s76
      %s91 = sphi 0, %s77
      %s95 = sphi 0, %s95
      %s97 = sphi 0, %s95
      %s98 = sphi 0, %s97
      %s112 = sphi 0, %s98
      %s116 = sphi 0, %s116
      %s118 = sphi 0, %s116
      %s119 = sphi 0, %s118
      %s133 = sphi 0, %s119
      %s137 = sphi 0, %s137
      %s139 = sphi 0, %s137
      %s140 = sphi 0, %s139
      %s154 = sphi 0, %s140
      %s158 = sphi 0, %s158
      %s160 = sphi 0, %s158
      %s161 = sphi 0, %s160
      %s175 = sphi 0, %s161
      %s181 = sphi 0, %s183
      %s184 = sphi 0, %s181
      %s185 = sphi 0, %s184
      %s201 = sphi 0, %s185
    $region4: #{generator_forward.1} parent=1 // loop_header_branch
      %22 = sbr.rel (%p20) target = $region8
    $region5: #{generator_forward.1} parent=1 // loop_body
      %s24 = ssub.s32 %s19, 1
      %s25 = ssub.s32 %s19, 2
      %s26 = sadd.s32 %s19, 1
      %s27 = ssub.s32 %s19, %s26
      %p28 = scmp.eq.s32.totalorder %s27, 0
      %s30 = sadd.s32 %s29, 1
      %s31 = scalar_select %p28, %s29, %s30
      %p34 = pneg %p28
      %p35 = scmp.eq.s32.totalorder %s19, 1
      %p36 = por %p34, %p35
      %p37 = scmp.ne.s32.totalorder %s29, %s32
      %p38 = scmp.eq.s32.totalorder %s19, 0
      %p39 = por %p37, %p38
      %p40 = scmp.ne.s32.totalorder %s29, %s32
      %p41 = scmp.eq.s32.totalorder %s24, 1
      %p42 = por %p40, %p41
      %p43 = scmp.ne.s32.totalorder %s32, %s33
      %p44 = scmp.eq.s32.totalorder %s24, 0
      %p45 = por %p43, %p44
      %p46 = scmp.ne.s32.totalorder %s32, %s33
      %p47 = scmp.eq.s32.totalorder %s25, 1
      %p48 = por %p46, %p47
      %p50 = scmp.ne.s32.totalorder %s33, %s49
      %p51 = scmp.eq.s32.totalorder %s25, 0
      %p52 = por %p50, %p51
      %s54 = sadd.s32 %s53, 1
      %p57 = scmp.eq.s32.totalorder %s19, 1
      %p58 = scmp.ne.s32.totalorder %s53, %s55
      %p59 = scmp.eq.s32.totalorder %s19, 0
      %p60 = por %p58, %p59
      %p61 = scmp.ne.s32.totalorder %s53, %s55
      %p62 = scmp.eq.s32.totalorder %s24, 1
      %p63 = por %p61, %p62
      %p64 = scmp.ne.s32.totalorder %s55, %s56
      %p65 = scmp.eq.s32.totalorder %s24, 0
      %p66 = por %p64, %p65
      %p67 = scmp.ne.s32.totalorder %s55, %s56
      %p68 = scmp.eq.s32.totalorder %s25, 1
      %p69 = por %p67, %p68
      %p71 = scmp.ne.s32.totalorder %s56, %s70
      %p72 = scmp.eq.s32.totalorder %s25, 0
      %p73 = por %p71, %p72
      %s75 = sadd.s32 %s74, 1
      %p78 = scmp.eq.s32.totalorder %s19, 1
      %p79 = scmp.ne.s32.totalorder %s74, %s76
      %p80 = scmp.eq.s32.totalorder %s19, 0
      %p81 = por %p79, %p80
      %p82 = scmp.ne.s32.totalorder %s74, %s76
      %p83 = scmp.eq.s32.totalorder %s24, 1
      %p84 = por %p82, %p83
      %p85 = scmp.ne.s32.totalorder %s76, %s77
      %p86 = scmp.eq.s32.totalorder %s24, 0
      %p87 = por %p85, %p86
      %p88 = scmp.ne.s32.totalorder %s76, %s77
      %p89 = scmp.eq.s32.totalorder %s25, 1
      %p90 = por %p88, %p89
      %p92 = scmp.ne.s32.totalorder %s77, %s91
      %p93 = scmp.eq.s32.totalorder %s25, 0
      %p94 = por %p92, %p93
      %s96 = sadd.s32 %s95, 1
      %p99 = scmp.eq.s32.totalorder %s19, 1
      %p100 = scmp.ne.s32.totalorder %s95, %s97
      %p101 = scmp.eq.s32.totalorder %s19, 0
      %p102 = por %p100, %p101
      %p103 = scmp.ne.s32.totalorder %s95, %s97
      %p104 = scmp.eq.s32.totalorder %s24, 1
      %p105 = por %p103, %p104
      %p106 = scmp.ne.s32.totalorder %s97, %s98
      %p107 = scmp.eq.s32.totalorder %s24, 0
      %p108 = por %p106, %p107
      %p109 = scmp.ne.s32.totalorder %s97, %s98
      %p110 = scmp.eq.s32.totalorder %s25, 1
      %p111 = por %p109, %p110
      %p113 = scmp.ne.s32.totalorder %s98, %s112
      %p114 = scmp.eq.s32.totalorder %s25, 0
      %p115 = por %p113, %p114
      %s117 = sadd.s32 %s116, 1
      %p120 = scmp.eq.s32.totalorder %s19, 1
      %p121 = scmp.ne.s32.totalorder %s116, %s118
      %p122 = scmp.eq.s32.totalorder %s19, 0
      %p123 = por %p121, %p122
      %p124 = scmp.ne.s32.totalorder %s116, %s118
      %p125 = scmp.eq.s32.totalorder %s24, 1
      %p126 = por %p124, %p125
      %p127 = scmp.ne.s32.totalorder %s118, %s119
      %p128 = scmp.eq.s32.totalorder %s24, 0
      %p129 = por %p127, %p128
      %p130 = scmp.ne.s32.totalorder %s118, %s119
      %p131 = scmp.eq.s32.totalorder %s25, 1
      %p132 = por %p130, %p131
      %p134 = scmp.ne.s32.totalorder %s119, %s133
      %p135 = scmp.eq.s32.totalorder %s25, 0
      %p136 = por %p134, %p135
      %s138 = sadd.s32 %s137, 1
      %p141 = scmp.eq.s32.totalorder %s19, 1
      %p142 = scmp.ne.s32.totalorder %s137, %s139
      %p143 = scmp.eq.s32.totalorder %s19, 0
      %p144 = por %p142, %p143
      %p145 = scmp.ne.s32.totalorder %s137, %s139
      %p146 = scmp.eq.s32.totalorder %s24, 1
      %p147 = por %p145, %p146
      %p148 = scmp.ne.s32.totalorder %s139, %s140
      %p149 = scmp.eq.s32.totalorder %s24, 0
      %p150 = por %p148, %p149
      %p151 = scmp.ne.s32.totalorder %s139, %s140
      %p152 = scmp.eq.s32.totalorder %s25, 1
      %p153 = por %p151, %p152
      %p155 = scmp.ne.s32.totalorder %s140, %s154
      %p156 = scmp.eq.s32.totalorder %s25, 0
      %p157 = por %p155, %p156
      %s159 = sadd.s32 %s158, 1
      %p162 = scmp.eq.s32.totalorder %s19, 1
      %p163 = scmp.ne.s32.totalorder %s158, %s160
      %p164 = scmp.eq.s32.totalorder %s19, 0
      %p165 = por %p163, %p164
      %p166 = scmp.ne.s32.totalorder %s158, %s160
      %p167 = scmp.eq.s32.totalorder %s24, 1
      %p168 = por %p166, %p167
      %p169 = scmp.ne.s32.totalorder %s160, %s161
      %p170 = scmp.eq.s32.totalorder %s24, 0
      %p171 = por %p169, %p170
      %p172 = scmp.ne.s32.totalorder %s160, %s161
      %p173 = scmp.eq.s32.totalorder %s25, 1
      %p174 = por %p172, %p173
      %p176 = scmp.ne.s32.totalorder %s161, %s175
      %p177 = scmp.eq.s32.totalorder %s25, 0
      %p178 = por %p176, %p177
      %s179 = ssub.s32 %s19, %s26
      %p180 = scmp.eq.s32.totalorder %s179, 0
      %s182 = sadd.s32 %s181, 1
      %s183 = scalar_select %p180, %s181, %s182
      %p186 = pneg %p180
      %p187 = scmp.eq.s32.totalorder %s19, 1
      %p188 = por %p186, %p187
      %p189 = scmp.ne.s32.totalorder %s181, %s184
      %p190 = scmp.eq.s32.totalorder %s19, 0
      %p191 = por %p189, %p190
      %p192 = scmp.ne.s32.totalorder %s181, %s184
      %p193 = scmp.eq.s32.totalorder %s24, 1
      %p194 = por %p192, %p193
      %p195 = scmp.ne.s32.totalorder %s184, %s185
      %p196 = scmp.eq.s32.totalorder %s24, 0
      %p197 = por %p195, %p196
      %p198 = scmp.ne.s32.totalorder %s184, %s185
      %p199 = scmp.eq.s32.totalorder %s25, 1
      %p200 = por %p198, %p199
      %p202 = scmp.ne.s32.totalorder %s185, %s201
      %p203 = scmp.eq.s32.totalorder %s25, 0
      %p204 = por %p202, %p203
      %p205 = scmp.le.s32.totalorder 1, %s19
      %p206 = scmp.lt.s32.totalorder %s19, 3
      %p207 = pnand %p205, %p206
      %p208 = pneg %p207
      // Predicated region
      $region9: #{generator_forward.1} parent=5 // pred_check
        _
      $region10: #{generator_forward.1} parent=5 // pred_check_branch
        %210 = sbr.rel (%p207) target = $region12
      $region11: #{generator_forward.1} parent=5 // pred_region
        %s211 = ssub.s32 %s19, 1
        // Predicated region
        $region13: #{generator_forward.1} parent=11 // pred_check
          %p212 = pneg %p66
        $region14: #{generator_forward.1} parent=11 // pred_check_branch
          %214 = sbr.rel (%p212) target = $region16
        $region15: #{generator_forward.1} parent=11 // pred_region
          %s216 = ssub.s32 496, 496
          %217 = vsyncadd [#allocation5], %s216
          %s219 = sshll.u32 [#allocation4], 4
          %s220 = int_to_ptr.vmem [resolvable:$true] %s219
          %222 = dma.hbm_to_vmem [thread:$0]  %s1, 496, %s220, [#allocation5]
        $region16: #{generator_forward.1} parent=11 // pred_fallthru
          _
        // Predicated region
        $region17: #{generator_forward.1} parent=11 // pred_check
          %p223 = pneg %p87
        $region18: #{generator_forward.1} parent=11 // pred_check_branch
          %225 = sbr.rel (%p223) target = $region20
        $region19: #{generator_forward.1} parent=11 // pred_region
          %s227 = ssub.s32 512, 512
          %228 = vsyncadd [#allocation5], %s227
          %s229 = sshll.u32 [#allocation6], 4
          %s230 = int_to_ptr.vmem [resolvable:$true] %s229
          %235 = dma.hbm_to_vmem [thread:$0]  %s2, 512, %s230, [#allocation5], 64, 64, 4
        $region20: #{generator_forward.1} parent=11 // pred_fallthru
          _
        // Predicated region
        $region21: #{generator_forward.1} parent=11 // pred_check
          %p236 = pneg %p108
        $region22: #{generator_forward.1} parent=11 // pred_check_branch
          %238 = sbr.rel (%p236) target = $region24
        $region23: #{generator_forward.1} parent=11 // pred_region
          %s240 = ssub.s32 2048, 2048
          %241 = vsyncadd [#allocation8], %s240
          %s242 = sshll.u32 [#allocation7], 4
          %s243 = int_to_ptr.vmem [resolvable:$true] %s242
          %248 = dma.hbm_to_vmem [thread:$0]  %s3, 2048, %s243, [#allocation8], 128, 128, 8
        $region24: #{generator_forward.1} parent=11 // pred_fallthru
          _
        // Predicated region
        $region25: #{generator_forward.1} parent=11 // pred_check
          %p249 = pneg %p129
        $region26: #{generator_forward.1} parent=11 // pred_check_branch
          %251 = sbr.rel (%p249) target = $region28
        $region27: #{generator_forward.1} parent=11 // pred_region
          %s253 = ssub.s32 8192, 8192
          %254 = vsyncadd [#allocation8], %s253
          %s255 = sshll.u32 [#allocation9], 4
          %s256 = int_to_ptr.vmem [resolvable:$true] %s255
          %261 = dma.hbm_to_vmem [thread:$0]  %s4, 8192, %s256, [#allocation8], 256, 256, 16
        $region28: #{generator_forward.1} parent=11 // pred_fallthru
          _
        // Predicated region
        $region29: #{generator_forward.1} parent=11 // pred_check
          %p262 = pneg %p150
        $region30: #{generator_forward.1} parent=11 // pred_check_branch
          %264 = sbr.rel (%p262) target = $region32
        $region31: #{generator_forward.1} parent=11 // pred_region
          %s266 = ssub.s32 32768, 32768
          %267 = vsyncadd [#allocation11], %s266
          %s268 = sshll.u32 [#allocation10], 4
          %s269 = int_to_ptr.vmem [resolvable:$true] %s268
          %274 = dma.hbm_to_vmem [thread:$0]  %s5, 32768, %s269, [#allocation11], 512, 512, 32
        $region32: #{generator_forward.1} parent=11 // pred_fallthru
          _
        // Predicated region
        $region33: #{generator_forward.1} parent=11 // pred_check
          %p275 = pneg %p171
        $region34: #{generator_forward.1} parent=11 // pred_check_branch
          %277 = sbr.rel (%p275) target = $region36
        $region35: #{generator_forward.1} parent=11 // pred_region
          %s279 = ssub.s32 16384, 16384
          %280 = vsyncadd [#allocation11], %s279
          %s281 = sshll.u32 [#allocation12], 4
          %s282 = int_to_ptr.vmem [resolvable:$true] %s281
          %287 = dma.hbm_to_vmem [thread:$0]  %s6, 16384, %s282, [#allocation11], 128, 128, 8
        $region36: #{generator_forward.1} parent=11 // pred_fallthru
          _
      $region12: #{generator_forward.1} parent=5 // pred_fallthru
        _
      %p288 = scmp.lt.s32.totalorder %s19, 2
      // Predicated region
      $region37: #{generator_forward.1} parent=5 // pred_check
        %p289 = pneg %p288
      $region38: #{generator_forward.1} parent=5 // pred_check_branch
        %291 = sbr.rel (%p289) target = $region40
      $region39: #{generator_forward.1} parent=5 // pred_region
        // Predicated region
        $region41: #{generator_forward.1} parent=39 // pred_check
          %p292 = pneg %p39
        $region42: #{generator_forward.1} parent=39 // pred_check_branch
          %294 = sbr.rel (%p292) target = $region44
        $region43: #{generator_forward.1} parent=39 // pred_region
          %s295 = sand.u32 %s29, 1
          %s296 = scalar_lea.sflag [#allocation3], %s295
          %s297 = sand.u32 %s29, 1
          %s298 = smul.addr %s297, 32
          %s299 = scalar_lea.vmem [#allocation2], %s298
          %s300 = smul.u32 4, %s19
          %s302 = ssub.s32 512, 512
          %303 = vsyncadd %s296, %s302
          %s304 = smul.addr %s300, 128
          %s305 = scalar_lea.hbm %s0, %s304
          %s306 = sshll.u32 %s299, 4
          %s307 = int_to_ptr.vmem [resolvable:$true] %s306
          %312 = dma.hbm_to_vmem [thread:$0]  %s305, 512, %s307, %s296, 128, 128, 8
        $region44: #{generator_forward.1} parent=39 // pred_fallthru
          _
      $region40: #{generator_forward.1} parent=5 // pred_fallthru
        _
      %p313 = scmp.le.s32.totalorder 1, %s19
      %p314 = scmp.lt.s32.totalorder %s19, 3
      %p315 = pnand %p313, %p314
      %p316 = pneg %p315
      // Predicated region
      $region45: #{generator_forward.1} parent=5 // pred_check
        _
      $region46: #{generator_forward.1} parent=5 // pred_check_branch
        %318 = sbr.rel (%p315) target = $region48
      $region47: #{generator_forward.1} parent=5 // pred_region
        %s319 = ssub.s32 %s19, 1
        %s320 = sand.u32 %s32, 1
        %s321 = scalar_lea.sflag [#allocation3], %s320
        %s322 = sand.u32 %s32, 1
        %s323 = smul.addr %s322, 32
        %s324 = scalar_lea.vmem [#allocation2], %s323
        // Predicated region
        $region49: #{generator_forward.1} parent=47 // pred_check
          %p325 = pneg %p45
        $region50: #{generator_forward.1} parent=47 // pred_check_branch
          %327 = sbr.rel (%p325) target = $region52
        $region51: #{generator_forward.1} parent=47 // pred_region
          %328 = dma.done %s321, 512
        $region52: #{generator_forward.1} parent=47 // pred_fallthru
          _
        // Predicated region
        $region53: #{generator_forward.1} parent=47 // pred_check
          %p329 = pneg %p66
        $region54: #{generator_forward.1} parent=47 // pred_check_branch
          %331 = sbr.rel (%p329) target = $region56
        $region55: #{generator_forward.1} parent=47 // pred_region
          %332 = dma.done [#allocation5], 496
        $region56: #{generator_forward.1} parent=47 // pred_fallthru
          _
        // Predicated region
        $region57: #{generator_forward.1} parent=47 // pred_check
          %p333 = pneg %p87
        $region58: #{generator_forward.1} parent=47 // pred_check_branch
          %335 = sbr.rel (%p333) target = $region60
        $region59: #{generator_forward.1} parent=47 // pred_region
          %336 = dma.done [#allocation5], 512
        $region60: #{generator_forward.1} parent=47 // pred_fallthru
          _
        // Predicated region
        $region61: #{generator_forward.1} parent=47 // pred_check
          %p337 = pneg %p108
        $region62: #{generator_forward.1} parent=47 // pred_check_branch
          %339 = sbr.rel (%p337) target = $region64
        $region63: #{generator_forward.1} parent=47 // pred_region
          %340 = dma.done [#allocation8], 2048
        $region64: #{generator_forward.1} parent=47 // pred_fallthru
          _
        // Predicated region
        $region65: #{generator_forward.1} parent=47 // pred_check
          %p341 = pneg %p129
        $region66: #{generator_forward.1} parent=47 // pred_check_branch
          %343 = sbr.rel (%p341) target = $region68
        $region67: #{generator_forward.1} parent=47 // pred_region
          %344 = dma.done [#allocation8], 8192
        $region68: #{generator_forward.1} parent=47 // pred_fallthru
          _
        // Predicated region
        $region69: #{generator_forward.1} parent=47 // pred_check
          %p345 = pneg %p150
        $region70: #{generator_forward.1} parent=47 // pred_check_branch
          %347 = sbr.rel (%p345) target = $region72
        $region71: #{generator_forward.1} parent=47 // pred_region
          %348 = dma.done [#allocation11], 32768
        $region72: #{generator_forward.1} parent=47 // pred_fallthru
          _
        // Predicated region
        $region73: #{generator_forward.1} parent=47 // pred_check
          %p349 = pneg %p171
        $region74: #{generator_forward.1} parent=47 // pred_check_branch
          %351 = sbr.rel (%p349) target = $region76
        $region75: #{generator_forward.1} parent=47 // pred_region
          %352 = dma.done [#allocation11], 16384
        $region76: #{generator_forward.1} parent=47 // pred_fallthru
          _
        %s353 = sand.u32 %s32, 1
        %s354 = scalar_lea.sflag [#allocation3], %s353
        %s355 = sand.u32 %s32, 1
        %s356 = smul.addr %s355, 32
        %s357 = scalar_lea.vmem [#allocation2], %s356
        %p358 = pneg %p45
        %p359 = pneg %p42
        %p360 = pneg %p66
        %p361 = pneg %p63
        %p362 = pneg %p87
        %p363 = pneg %p84
        %p364 = pneg %p108
        %p365 = pneg %p105
        %p366 = pneg %p129
        %p367 = pneg %p126
        %p368 = pneg %p150
        %p369 = pneg %p147
        %p370 = pneg %p171
        %p371 = pneg %p168
        %p372 = pneg %p197
        %p373 = pneg %p194
        %s374 = smul.u32 4, %s24
        %p375 = scmp.lt.s32.totalorder %s374, 7
        %s376 = scalar_select %p375, %s374, 7
        %s377 = smul.addr %s376, 2
        %s378 = smul.addr %s377, 8
        %s379 = scalar_lea.vmem %s7, %s378
        %s380 = smul.u32 4, %s24
        %s381 = smul.u32 4, %s24
        %p382 = scmp.lt.s32.totalorder %s381, 7
        %s383 = scalar_select %p382, %s381, 7
        %s384 = smul.addr %s383, 2
        %s385 = smul.addr %s384, 8
        %s386 = scalar_lea.vmem %s7, %s385
        %s387 = smul.u32 4, %s24
        %v389 = vld [vmem:[%s324] sm:$0xff]
        %v390 = vld [vmem:[%s324 + $0x8] sm:$0xff]
        %v391 = vld [vmem:[%s324 + $0x10] sm:$0xff]
        %v392 = vld [vmem:[%s324 + $0x18] sm:$0xff]
        %v393 = vpack.c.bf16 %v390, %v389
        %v394 = vpack.c.bf16 %v392, %v391
        %v395 = vld [vmem:[#allocation6] sm:$0xf]
        %v396 = vld [vmem:[#allocation6 + $0x4] sm:$0xf]
        %v397 = vld [vmem:[#allocation6 + $0x8] sm:$0xf]
        %v398 = vld [vmem:[#allocation6 + $0xc] sm:$0xf]
        %v399 = vld [vmem:[#allocation6 + $0x10] sm:$0xf]
        %v400 = vld [vmem:[#allocation6 + $0x14] sm:$0xf]
        %v401 = vld [vmem:[#allocation6 + $0x18] sm:$0xf]
        %v402 = vld [vmem:[#allocation6 + $0x1c] sm:$0xf]
        %v403 = vld [vmem:[#allocation4] sm:$0x1]
        %v405 = vlaneseq
        %v406 = vshrl.u32 %v405, 7
        %v407 = vsub.s32 0, %v406
        %v408 = vrot.slane %v403, %v407
        %v418 = vunpack.c.l.b16 %v395
        %v419 = vunpack.c.l.b16 %v396
        %v420 = vunpack.c.l.b16 %v397
        %v421 = vunpack.c.l.b16 %v398
        %v422 = vunpack.c.l.b16 %v399
        %v423 = vunpack.c.l.b16 %v400
        %v424 = vunpack.c.l.b16 %v401
        %v425 = vunpack.c.l.b16 %v402
        %v426 = vpack.c.b16 %v419, %v418
        %v427 = vpack.c.b16 %v421, %v420
        %v428 = vpack.c.b16 %v423, %v422
        %v429 = vpack.c.b16 %v425, %v424
        %vm434 = vcmask 523264
        %v436 = vsel %vm434, %v393, 0
        %v439 = vsel %vm434, %v394, 0
        %441 = vmatprep.subr.bf16.mxu0 0
        %442 = vmatpush1.bf16.msra.mxu0 %v426
        %443 = vmatprep.subr.bf16.mxu0 0
        %444 = vmatpush1.bf16.msra.mxu0 %v427
        %445 = vmatprep.subr.bf16.mxu0 0
        %446 = vmatpush1.bf16.msra.mxu0 %v428
        %447 = vmatprep.subr.bf16.mxu0 0
        %448 = vmatpush1.bf16.msra.mxu0 %v429
        %449 = vmatprep.subr.bf16.mxu0 0
        %450 = vmatpush1.bf16.msra.mxu0 0
        %451 = vmatprep.subr.bf16.mxu0 0
        %452 = vmatpush1.bf16.msra.mxu0 0
        %453 = vmatprep.subr.bf16.mxu0 0
        %454 = vmatpush1.bf16.msra.mxu0 0
        %455 = vmatprep.subr.bf16.mxu0 0
        %456 = vmatpush1.bf16.msra.mxu0 0
        %457 = vmatprep.subr.bf16.mxu0 0
        %458 = vmatpush1.bf16.msra.mxu0 0
        %459 = vmatprep.subr.bf16.mxu0 0
        %460 = vmatpush1.bf16.msra.mxu0 0
        %461 = vmatprep.subr.bf16.mxu0 0
        %462 = vmatpush1.bf16.msra.mxu0 0
        %463 = vmatprep.subr.bf16.mxu0 0
        %464 = vmatpush1.bf16.msra.mxu0 0
        %465 = vmatprep.subr.bf16.mxu0 0
        %466 = vmatpush1.bf16.msra.mxu0 0
        %467 = vmatprep.subr.bf16.mxu0 0
        %468 = vmatpush1.bf16.msra.mxu0 0
        %469 = vmatprep.subr.bf16.mxu0 0
        %470 = vmatpush1.bf16.msra.mxu0 0
        %471 = vmatprep.subr.bf16.mxu0 0
        %472 = vmatpush1.bf16.msra.mxu0 0
        %473 = vmatprep.mubr.bf16.mxu0 0
        %474 = vmatmul.mubr.bf16.gmra.mrb[0].mxu0 %v436
        %v475 = vpop.f32.mrb[0].mxu0
        %v476 = vadd.f32 %v408, %v475
        %v477 = vpop.f32.mrb[0].mxu0
        %v478 = vpop.f32.mrb[0].mxu0
        %v479 = vadd.f32 %v408, %v478
        %v480 = vpop.f32.mrb[0].mxu0
        %481 = vmatprep.mubr.bf16.mxu0 0
        %482 = vmatmul.mubr.bf16.gmra.mrb[0].mxu0 %v439
        %v483 = vpop.f32.mrb[0].mxu0
        %v484 = vadd.f32 %v408, %v483
        %v485 = vpop.f32.mrb[0].mxu0
        %v486 = vpop.f32.mrb[0].mxu0
        %v487 = vadd.f32 %v408, %v486
        %v488 = vpop.f32.mrb[0].mxu0
        %489 = vdwg.mxu0
        %vm490 = vcmp.gt.f32.partialorder %v476, 0.0
        %vm491 = vcmp.gt.f32.partialorder %v479, 0.0
        %vm492 = vcmp.gt.f32.partialorder %v484, 0.0
        %vm493 = vcmp.gt.f32.partialorder %v487, 0.0
        %v494 = vmul.f32 %v476, 0.2
        %v495 = vmul.f32 %v479, 0.2
        %v496 = vmul.f32 %v484, 0.2
        %v497 = vmul.f32 %v487, 0.2
        %v498 = vsel %vm490, %v476, %v494
        %v499 = vsel %vm491, %v479, %v495
        %v500 = vsel %vm492, %v484, %v496
        %v501 = vsel %vm493, %v487, %v497
        %v502 = vpack.c.bf16 %v499, %v498
        %v503 = vpack.c.bf16 %v501, %v500
        %v504 = vld [vmem:[#allocation7] sm:$0xff]
        %v505 = vld [vmem:[#allocation7 + $0x8] sm:$0xff]
        %v506 = vld [vmem:[#allocation7 + $0x10] sm:$0xff]
        %v507 = vld [vmem:[#allocation7 + $0x18] sm:$0xff]
        %v508 = vld [vmem:[#allocation7 + $0x20] sm:$0xff]
        %v509 = vld [vmem:[#allocation7 + $0x28] sm:$0xff]
        %v510 = vld [vmem:[#allocation7 + $0x30] sm:$0xff]
        %v511 = vld [vmem:[#allocation7 + $0x38] sm:$0xff]
        %v512 = vld [vmem:[#allocation7 + $0x40] sm:$0xff]
        %v513 = vld [vmem:[#allocation7 + $0x48] sm:$0xff]
        %v514 = vld [vmem:[#allocation7 + $0x50] sm:$0xff]
        %v515 = vld [vmem:[#allocation7 + $0x58] sm:$0xff]
        %v516 = vld [vmem:[#allocation7 + $0x60] sm:$0xff]
        %v517 = vld [vmem:[#allocation7 + $0x68] sm:$0xff]
        %v518 = vld [vmem:[#allocation7 + $0x70] sm:$0xff]
        %v519 = vld [vmem:[#allocation7 + $0x78] sm:$0xff]
        %v536 = vunpack.c.l.b16 %v504
        %v537 = vunpack.c.h.b16 %v504
        %v538 = vunpack.c.l.b16 %v505
        %v539 = vunpack.c.h.b16 %v505
        %v540 = vunpack.c.l.b16 %v506
        %v541 = vunpack.c.h.b16 %v506
        %v542 = vunpack.c.l.b16 %v507
        %v543 = vunpack.c.h.b16 %v507
        %v544 = vunpack.c.l.b16 %v508
        %v545 = vunpack.c.h.b16 %v508
        %v546 = vunpack.c.l.b16 %v509
        %v547 = vunpack.c.h.b16 %v509
        %v548 = vunpack.c.l.b16 %v510
        %v549 = vunpack.c.h.b16 %v510
        %v550 = vunpack.c.l.b16 %v511
        %v551 = vunpack.c.h.b16 %v511
        %v552 = vunpack.c.l.b16 %v512
        %v553 = vunpack.c.h.b16 %v512
        %v554 = vunpack.c.l.b16 %v513
        %v555 = vunpack.c.h.b16 %v513
        %v556 = vunpack.c.l.b16 %v514
        %v557 = vunpack.c.h.b16 %v514
        %v558 = vunpack.c.l.b16 %v515
        %v559 = vunpack.c.h.b16 %v515
        %v560 = vunpack.c.l.b16 %v516
        %v561 = vunpack.c.h.b16 %v516
        %v562 = vunpack.c.l.b16 %v517
        %v563 = vunpack.c.h.b16 %v517
        %v564 = vunpack.c.l.b16 %v518
        %v565 = vunpack.c.h.b16 %v518
        %v566 = vunpack.c.l.b16 %v519
        %v567 = vunpack.c.h.b16 %v519
        %v568 = vpack.c.b16 %v538, %v536
        %v569 = vpack.c.b16 %v539, %v537
        %v570 = vpack.c.b16 %v542, %v540
        %v571 = vpack.c.b16 %v543, %v541
        %v572 = vpack.c.b16 %v546, %v544
        %v573 = vpack.c.b16 %v547, %v545
        %v574 = vpack.c.b16 %v550, %v548
        %v575 = vpack.c.b16 %v551, %v549
        %v576 = vpack.c.b16 %v554, %v552
        %v577 = vpack.c.b16 %v555, %v553
        %v578 = vpack.c.b16 %v558, %v556
        %v579 = vpack.c.b16 %v559, %v557
        %v580 = vpack.c.b16 %v562, %v560
        %v581 = vpack.c.b16 %v563, %v561
        %v582 = vpack.c.b16 %v566, %v564
        %v583 = vpack.c.b16 %v567, %v565
        %600 = vmatprep.subr.bf16.mxu0 %v569
        %601 = vmatpush1.bf16.msra.mxu0 %v568
        %602 = vmatprep.subr.bf16.mxu0 %v571
        %603 = vmatpush1.bf16.msra.mxu0 %v570
        %604 = vmatprep.subr.bf16.mxu0 %v573
        %605 = vmatpush1.bf16.msra.mxu0 %v572
        %606 = vmatprep.subr.bf16.mxu0 %v575
        %607 = vmatpush1.bf16.msra.mxu0 %v574
        %608 = vmatprep.subr.bf16.mxu0 %v577
        %609 = vmatpush1.bf16.msra.mxu0 %v576
        %610 = vmatprep.subr.bf16.mxu0 %v579
        %611 = vmatpush1.bf16.msra.mxu0 %v578
        %612 = vmatprep.subr.bf16.mxu0 %v581
        %613 = vmatpush1.bf16.msra.mxu0 %v580
        %614 = vmatprep.subr.bf16.mxu0 %v583
        %615 = vmatpush1.bf16.msra.mxu0 %v582
        %616 = vmatprep.subr.bf16.mxu0 0
        %617 = vmatpush1.bf16.msra.mxu0 0
        %618 = vmatprep.subr.bf16.mxu0 0
        %619 = vmatpush1.bf16.msra.mxu0 0
        %620 = vmatprep.subr.bf16.mxu0 0
        %621 = vmatpush1.bf16.msra.mxu0 0
        %622 = vmatprep.subr.bf16.mxu0 0
        %623 = vmatpush1.bf16.msra.mxu0 0
        %624 = vmatprep.subr.bf16.mxu0 0
        %625 = vmatpush1.bf16.msra.mxu0 0
        %626 = vmatprep.subr.bf16.mxu0 0
        %627 = vmatpush1.bf16.msra.mxu0 0
        %628 = vmatprep.subr.bf16.mxu0 0
        %629 = vmatpush1.bf16.msra.mxu0 0
        %630 = vmatprep.subr.bf16.mxu0 0
        %631 = vmatpush1.bf16.msra.mxu0 0
        %632 = vmatprep.mubr.bf16.mxu0 0
        %633 = vmatmul.mubr.bf16.gmra.mrb[0].mxu0 %v502
        %v634 = vpop.f32.mrb[0].mxu0
        %v635 = vadd.f32 0.0, %v634
        %v636 = vpop.f32.mrb[0].mxu0
        %v637 = vadd.f32 0.0, %v636
        %v638 = vpop.f32.mrb[0].mxu0
        %v639 = vadd.f32 0.0, %v638
        %v640 = vpop.f32.mrb[0].mxu0
        %v641 = vadd.f32 0.0, %v640
        %642 = vmatprep.mubr.bf16.mxu0 0
        %643 = vmatmul.mubr.bf16.gmra.mrb[0].mxu0 %v503
        %v644 = vpop.f32.mrb[0].mxu0
        %v645 = vadd.f32 0.0, %v644
        %v646 = vpop.f32.mrb[0].mxu0
        %v647 = vadd.f32 0.0, %v646
        %v648 = vpop.f32.mrb[0].mxu0
        %v649 = vadd.f32 0.0, %v648
        %v650 = vpop.f32.mrb[0].mxu0
        %v651 = vadd.f32 0.0, %v650
        %652 = vdwg.mxu0
        %v653 = vld [vmem:[#allocation4 + $0x3] sm:$0x3]
        %v654 = vld [vmem:[#allocation4 + $0x5] sm:$0x3]
        %v655 = vadd.f32 %v635, %v639
        %v656 = vadd.f32 %v655, %v645
        %v657 = vadd.f32 %v656, %v649
        %v658 = vrot.slane %v657, 4
        %v659 = vadd.f32 %v657, %v658
        %v660 = vrot.slane %v659, 2
        %v661 = vadd.f32 %v659, %v660
        %v662 = vrot.slane %v661, 1
        %v663 = vadd.f32 %v661, %v662
        %v664 = vadd.f32 %v637, %v641
        %v665 = vadd.f32 %v664, %v647
        %v666 = vadd.f32 %v665, %v651
        %v667 = vrot.slane %v666, 4
        %v668 = vadd.f32 %v666, %v667
        %v669 = vrot.slane %v668, 2
        %v670 = vadd.f32 %v668, %v669
        %v671 = vrot.slane %v670, 1
        %v672 = vadd.f32 %v670, %v671
        %v673 = vrcp.pop 32.0
        %v674 = vmul.f32 %v663, %v673
        %v675 = vmul.f32 %v672, %v673
        %v676 = vsub.f32 %v635, %v674
        %v677 = vsub.f32 %v637, %v675
        %v678 = vsub.f32 %v639, %v674
        %v679 = vsub.f32 %v641, %v675
        %v680 = vsub.f32 %v645, %v674
        %v681 = vsub.f32 %v647, %v675
        %v682 = vsub.f32 %v649, %v674
        %v683 = vsub.f32 %v651, %v675
        %v684 = vmul.f32 %v676, %v676
        %v685 = vmul.f32 %v677, %v677
        %v686 = vmul.f32 %v678, %v678
        %v687 = vmul.f32 %v679, %v679
        %v688 = vmul.f32 %v680, %v680
        %v689 = vmul.f32 %v681, %v681
        %v690 = vmul.f32 %v682, %v682
        %v691 = vmul.f32 %v683, %v683
        %v692 = vadd.f32 %v684, %v686
        %v693 = vadd.f32 %v692, %v688
        %v694 = vadd.f32 %v693, %v690
        %v695 = vrot.slane %v694, 4
        %v696 = vadd.f32 %v694, %v695
        %v697 = vrot.slane %v696, 2
        %v698 = vadd.f32 %v696, %v697
        %v699 = vrot.slane %v698, 1
        %v700 = vadd.f32 %v698, %v699
        %v701 = vadd.f32 %v685, %v687
        %v702 = vadd.f32 %v701, %v689
        %v703 = vadd.f32 %v702, %v691
        %v704 = vrot.slane %v703, 4
        %v705 = vadd.f32 %v703, %v704
        %v706 = vrot.slane %v705, 2
        %v707 = vadd.f32 %v705, %v706
        %v708 = vrot.slane %v707, 1
        %v709 = vadd.f32 %v707, %v708
        %v710 = vmul.f32 %v700, %v673
        %v711 = vmul.f32 %v709, %v673
        %v712 = vadd.f32 %v710, 0.8
        %v713 = vadd.f32 %v711, 0.8
        %v714 = vrsqrt.pop %v712
        %v715 = vrsqrt.pop %v713
        %v716 = vmul.f32 %v676, %v714
        %v717 = vmul.f32 %v677, %v715
        %v718 = vmul.f32 %v678, %v714
        %v719 = vmul.f32 %v679, %v715
        %v720 = vmul.f32 %v680, %v714
        %v721 = vmul.f32 %v681, %v715
        %v722 = vmul.f32 %v682, %v714
        %v723 = vmul.f32 %v683, %v715
        %v725 = vlaneseq
        %v726 = vshrl.u32 %v725, 7
        %v727 = vsub.s32 0, %v726
        %v728 = vrot.slane %v653, %v727
        %v729 = vlaneseq
        %v730 = vshrl.u32 %v729, 7
        %v731 = vsub.s32 1, %v730
        %v732 = vrot.slane %v653, %v731
        %v735 = vmul.f32 %v716, %v728
        %v736 = vmul.f32 %v717, %v732
        %v737 = vmul.f32 %v718, %v728
        %v738 = vmul.f32 %v719, %v732
        %v739 = vmul.f32 %v720, %v728
        %v740 = vmul.f32 %v721, %v732
        %v741 = vmul.f32 %v722, %v728
        %v742 = vmul.f32 %v723, %v732
        %v744 = vlaneseq
        %v745 = vshrl.u32 %v744, 7
        %v746 = vsub.s32 0, %v745
        %v747 = vrot.slane %v654, %v746
        %v748 = vlaneseq
        %v749 = vshrl.u32 %v748, 7
        %v750 = vsub.s32 1, %v749
        %v751 = vrot.slane %v654, %v750
        %v754 = vadd.f32 %v735, %v747
        %v755 = vadd.f32 %v736, %v751
        %v756 = vadd.f32 %v737, %v747
        %v757 = vadd.f32 %v738, %v751
        %v758 = vadd.f32 %v739, %v747
        %v759 = vadd.f32 %v740, %v751
        %v760 = vadd.f32 %v741, %v747
        %v761 = vadd.f32 %v742, %v751
        %vm762 = vcmp.gt.f32.partialorder %v754, 0.0
        %vm763 = vcmp.gt.f32.partialorder %v755, 0.0
        %vm764 = vcmp.gt.f32.partialorder %v756, 0.0
        %vm765 = vcmp.gt.f32.partialorder %v757, 0.0
        %vm766 = vcmp.gt.f32.partialorder %v758, 0.0
        %vm767 = vcmp.gt.f32.partialorder %v759, 0.0
        %vm768 = vcmp.gt.f32.partialorder %v760, 0.0
        %vm769 = vcmp.gt.f32.partialorder %v761, 0.0
        %v770 = vmul.f32 %v754, 0.2
        %v771 = vmul.f32 %v755, 0.2
        %v772 = vmul.f32 %v756, 0.2
        %v773 = vmul.f32 %v757, 0.2
        %v774 = vmul.f32 %v758, 0.2
        %v775 = vmul.f32 %v759, 0.2
        %v776 = vmul.f32 %v760, 0.2
        %v777 = vmul.f32 %v761, 0.2
        %v778 = vsel %vm762, %v754, %v770
        %v779 = vsel %vm763, %v755, %v771
        %v780 = vsel %vm764, %v756, %v772
        %v781 = vsel %vm765, %v757, %v773
        %v782 = vsel %vm766, %v758, %v774
        %v783 = vsel %vm767, %v759, %v775
        %v784 = vsel %vm768, %v760, %v776
        %v785 = vsel %vm769, %v761, %v777
        %v786 = vpack.c.bf16 %v780, %v778
        %v787 = vpack.c.bf16 %v781, %v779
        %v788 = vpack.c.bf16 %v784, %v782
        %v789 = vpack.c.bf16 %v785, %v783
        %v790 = vld [vmem:[#allocation9] sm:$0xff]
        %v791 = vld [vmem:[#allocation9 + $0x8] sm:$0xff]
        %v792 = vld [vmem:[#allocation9 + $0x10] sm:$0xff]
        %v793 = vld [vmem:[#allocation9 + $0x18] sm:$0xff]
        %v794 = vld [vmem:[#allocation9 + $0x20] sm:$0xff]
        %v795 = vld [vmem:[#allocation9 + $0x28] sm:$0xff]
        %v796 = vld [vmem:[#allocation9 + $0x30] sm:$0xff]
        %v797 = vld [vmem:[#allocation9 + $0x38] sm:$0xff]
        %v798 = vld [vmem:[#allocation9 + $0x40] sm:$0xff]
        %v799 = vld [vmem:[#allocation9 + $0x48] sm:$0xff]
        %v800 = vld [vmem:[#allocation9 + $0x50] sm:$0xff]
        %v801 = vld [vmem:[#allocation9 + $0x58] sm:$0xff]
        %v802 = vld [vmem:[#allocation9 + $0x60] sm:$0xff]
        %v803 = vld [vmem:[#allocation9 + $0x68] sm:$0xff]
        %v804 = vld [vmem:[#allocation9 + $0x70] sm:$0xff]
        %v805 = vld [vmem:[#allocation9 + $0x78] sm:$0xff]
        %v806 = vld [vmem:[#allocation9 + $0x80] sm:$0xff]
        %v807 = vld [vmem:[#allocation9 + $0x88] sm:$0xff]
        %v808 = vld [vmem:[#allocation9 + $0x90] sm:$0xff]
        %v809 = vld [vmem:[#allocation9 + $0x98] sm:$0xff]
        %v810 = vld [vmem:[#allocation9 + $0xa0] sm:$0xff]
        %v811 = vld [vmem:[#allocation9 + $0xa8] sm:$0xff]
        %v812 = vld [vmem:[#allocation9 + $0xb0] sm:$0xff]
        %v813 = vld [vmem:[#allocation9 + $0xb8] sm:$0xff]
        %v814 = vld [vmem:[#allocation9 + $0xc0] sm:$0xff]
        %v815 = vld [vmem:[#allocation9 + $0xc8] sm:$0xff]
        %v816 = vld [vmem:[#allocation9 + $0xd0] sm:$0xff]
        %v817 = vld [vmem:[#allocation9 + $0xd8] sm:$0xff]
        %v818 = vld [vmem:[#allocation9 + $0xe0] sm:$0xff]
        %v819 = vld [vmem:[#allocation9 + $0xe8] sm:$0xff]
        %v820 = vld [vmem:[#allocation9 + $0xf0] sm:$0xff]
        %v821 = vld [vmem:[#allocation9 + $0xf8] sm:$0xff]
        %v822 = vld [vmem:[#allocation9 + $0x100] sm:$0xff]
        %v823 = vld [vmem:[#allocation9 + $0x108] sm:$0xff]
        %v824 = vld [vmem:[#allocation9 + $0x110] sm:$0xff]
        %v825 = vld [vmem:[#allocation9 + $0x118] sm:$0xff]
        %v826 = vld [vmem:[#allocation9 + $0x120] sm:$0xff]
        %v827 = vld [vmem:[#allocation9 + $0x128] sm:$0xff]
        %v828 = vld [vmem:[#allocation9 + $0x130] sm:$0xff]
        %v829 = vld [vmem:[#allocation9 + $0x138] sm:$0xff]
        %v830 = vld [vmem:[#allocation9 + $0x140] sm:$0xff]
        %v831 = vld [vmem:[#allocation9 + $0x148] sm:$0xff]
        %v832 = vld [vmem:[#allocation9 + $0x150] sm:$0xff]
        %v833 = vld [vmem:[#allocation9 + $0x158] sm:$0xff]
        %v834 = vld [vmem:[#allocation9 + $0x160] sm:$0xff]
        %v835 = vld [vmem:[#allocation9 + $0x168] sm:$0xff]
        %v836 = vld [vmem:[#allocation9 + $0x170] sm:$0xff]
        %v837 = vld [vmem:[#allocation9 + $0x178] sm:$0xff]
        %v838 = vld [vmem:[#allocation9 + $0x180] sm:$0xff]
        %v839 = vld [vmem:[#allocation9 + $0x188] sm:$0xff]
        %v840 = vld [vmem:[#allocation9 + $0x190] sm:$0xff]
        %v841 = vld [vmem:[#allocation9 + $0x198] sm:$0xff]
        %v842 = vld [vmem:[#allocation9 + $0x1a0] sm:$0xff]
        %v843 = vld [vmem:[#allocation9 + $0x1a8] sm:$0xff]
        %v844 = vld [vmem:[#allocation9 + $0x1b0] sm:$0xff]
        %v845 = vld [vmem:[#allocation9 + $0x1b8] sm:$0xff]
        %v846 = vld [vmem:[#allocation9 + $0x1c0] sm:$0xff]
        %v847 = vld [vmem:[#allocation9 + $0x1c8] sm:$0xff]
        %v848 = vld [vmem:[#allocation9 + $0x1d0] sm:$0xff]
        %v849 = vld [vmem:[#allocation9 + $0x1d8] sm:$0xff]
        %v850 = vld [vmem:[#allocation9 + $0x1e0] sm:$0xff]
        %v851 = vld [vmem:[#allocation9 + $0x1e8] sm:$0xff]
        %v852 = vld [vmem:[#allocation9 + $0x1f0] sm:$0xff]
        %v853 = vld [vmem:[#allocation9 + $0x1f8] sm:$0xff]
        %v918 = vunpack.c.l.b16 %v790
        %v919 = vunpack.c.h.b16 %v790
        %v920 = vunpack.c.l.b16 %v791
        %v921 = vunpack.c.h.b16 %v791
        %v922 = vunpack.c.l.b16 %v792
        %v923 = vunpack.c.h.b16 %v792
        %v924 = vunpack.c.l.b16 %v793
        %v925 = vunpack.c.h.b16 %v793
        %v926 = vunpack.c.l.b16 %v794
        %v927 = vunpack.c.h.b16 %v794
        %v928 = vunpack.c.l.b16 %v795
        %v929 = vunpack.c.h.b16 %v795
        %v930 = vunpack.c.l.b16 %v796
        %v931 = vunpack.c.h.b16 %v796
        %v932 = vunpack.c.l.b16 %v797
        %v933 = vunpack.c.h.b16 %v797
        %v934 = vunpack.c.l.b16 %v798
        %v935 = vunpack.c.h.b16 %v798
        %v936 = vunpack.c.l.b16 %v799
        %v937 = vunpack.c.h.b16 %v799
        %v938 = vunpack.c.l.b16 %v800
        %v939 = vunpack.c.h.b16 %v800
        %v940 = vunpack.c.l.b16 %v801
        %v941 = vunpack.c.h.b16 %v801
        %v942 = vunpack.c.l.b16 %v802
        %v943 = vunpack.c.h.b16 %v802
        %v944 = vunpack.c.l.b16 %v803
        %v945 = vunpack.c.h.b16 %v803
        %v946 = vunpack.c.l.b16 %v804
        %v947 = vunpack.c.h.b16 %v804
        %v948 = vunpack.c.l.b16 %v805
        %v949 = vunpack.c.h.b16 %v805
        %v950 = vunpack.c.l.b16 %v806
        %v951 = vunpack.c.h.b16 %v806
        %v952 = vunpack.c.l.b16 %v807
        %v953 = vunpack.c.h.b16 %v807
        %v954 = vunpack.c.l.b16 %v808
        %v955 = vunpack.c.h.b16 %v808
        %v956 = vunpack.c.l.b16 %v809
        %v957 = vunpack.c.h.b16 %v809
        %v958 = vunpack.c.l.b16 %v810
        %v959 = vunpack.c.h.b16 %v810
        %v960 = vunpack.c.l.b16 %v811
        %v961 = vunpack.c.h.b16 %v811
        %v962 = vunpack.c.l.b16 %v812
        %v963 = vunpack.c.h.b16 %v812
        %v964 = vunpack.c.l.b16 %v813
        %v965 = vunpack.c.h.b16 %v813
        %v966 = vunpack.c.l.b16 %v814
        %v967 = vunpack.c.h.b16 %v814
        %v968 = vunpack.c.l.b16 %v815
        %v969 = vunpack.c.h.b16 %v815
        %v970 = vunpack.c.l.b16 %v816
        %v971 = vunpack.c.h.b16 %v816
        %v972 = vunpack.c.l.b16 %v817
        %v973 = vunpack.c.h.b16 %v817
        %v974 = vunpack.c.l.b16 %v818
        %v975 = vunpack.c.h.b16 %v818
        %v976 = vunpack.c.l.b16 %v819
        %v977 = vunpack.c.h.b16 %v819
        %v978 = vunpack.c.l.b16 %v820
        %v979 = vunpack.c.h.b16 %v820
        %v980 = vunpack.c.l.b16 %v821
        %v981 = vunpack.c.h.b16 %v821
        %v982 = vunpack.c.l.b16 %v822
        %v983 = vunpack.c.h.b16 %v822
        %v984 = vunpack.c.l.b16 %v823
        %v985 = vunpack.c.h.b16 %v823
        %v986 = vunpack.c.l.b16 %v824
        %v987 = vunpack.c.h.b16 %v824
        %v988 = vunpack.c.l.b16 %v825
        %v989 = vunpack.c.h.b16 %v825
        %v990 = vunpack.c.l.b16 %v826
        %v991 = vunpack.c.h.b16 %v826
        %v992 = vunpack.c.l.b16 %v827
        %v993 = vunpack.c.h.b16 %v827
        %v994 = vunpack.c.l.b16 %v828
        %v995 = vunpack.c.h.b16 %v828
        %v996 = vunpack.c.l.b16 %v829
        %v997 = vunpack.c.h.b16 %v829
        %v998 = vunpack.c.l.b16 %v830
        %v999 = vunpack.c.h.b16 %v830
        %v1000 = vunpack.c.l.b16 %v831
        %v1001 = vunpack.c.h.b16 %v831
        %v1002 = vunpack.c.l.b16 %v832
        %v1003 = vunpack.c.h.b16 %v832
        %v1004 = vunpack.c.l.b16 %v833
        %v1005 = vunpack.c.h.b16 %v833
        %v1006 = vunpack.c.l.b16 %v834
        %v1007 = vunpack.c.h.b16 %v834
        %v1008 = vunpack.c.l.b16 %v835
        %v1009 = vunpack.c.h.b16 %v835
        %v1010 = vunpack.c.l.b16 %v836
        %v1011 = vunpack.c.h.b16 %v836
        %v1012 = vunpack.c.l.b16 %v837
        %v1013 = vunpack.c.h.b16 %v837
        %v1014 = vunpack.c.l.b16 %v838
        %v1015 = vunpack.c.h.b16 %v838
        %v1016 = vunpack.c.l.b16 %v839
        %v1017 = vunpack.c.h.b16 %v839
        %v1018 = vunpack.c.l.b16 %v840
        %v1019 = vunpack.c.h.b16 %v840
        %v1020 = vunpack.c.l.b16 %v841
        %v1021 = vunpack.c.h.b16 %v841
        %v1022 = vunpack.c.l.b16 %v842
        %v1023 = vunpack.c.h.b16 %v842
        %v1024 = vunpack.c.l.b16 %v843
        %v1025 = vunpack.c.h.b16 %v843
        %v1026 = vunpack.c.l.b16 %v844
        %v1027 = vunpack.c.h.b16 %v844
        %v1028 = vunpack.c.l.b16 %v845
        %v1029 = vunpack.c.h.b16 %v845
        %v1030 = vunpack.c.l.b16 %v846
        %v1031 = vunpack.c.h.b16 %v846
        %v1032 = vunpack.c.l.b16 %v847
        %v1033 = vunpack.c.h.b16 %v847
        %v1034 = vunpack.c.l.b16 %v848
        %v1035 = vunpack.c.h.b16 %v848
        %v1036 = vunpack.c.l.b16 %v849
        %v1037 = vunpack.c.h.b16 %v849
        %v1038 = vunpack.c.l.b16 %v850
        %v1039 = vunpack.c.h.b16 %v850
        %v1040 = vunpack.c.l.b16 %v851
        %v1041 = vunpack.c.h.b16 %v851
        %v1042 = vunpack.c.l.b16 %v852
        %v1043 = vunpack.c.h.b16 %v852
        %v1044 = vunpack.c.l.b16 %v853
        %v1045 = vunpack.c.h.b16 %v853
        %v1046 = vpack.c.b16 %v922, %v918
        %v1047 = vpack.c.b16 %v923, %v919
        %v1048 = vpack.c.b16 %v924, %v920
        %v1049 = vpack.c.b16 %v925, %v921
        %v1050 = vpack.c.b16 %v930, %v926
        %v1051 = vpack.c.b16 %v931, %v927
        %v1052 = vpack.c.b16 %v932, %v928
        %v1053 = vpack.c.b16 %v933, %v929
        %v1054 = vpack.c.b16 %v938, %v934
        %v1055 = vpack.c.b16 %v939, %v935
        %v1056 = vpack.c.b16 %v940, %v936
        %v1057 = vpack.c.b16 %v941, %v937
        %v1058 = vpack.c.b16 %v946, %v942
        %v1059 = vpack.c.b16 %v947, %v943
        %v1060 = vpack.c.b16 %v948, %v944
        %v1061 = vpack.c.b16 %v949, %v945
        %v1062 = vpack.c.b16 %v954, %v950
        %v1063 = vpack.c.b16 %v955, %v951
        %v1064 = vpack.c.b16 %v956, %v952
        %v1065 = vpack.c.b16 %v957, %v953
        %v1066 = vpack.c.b16 %v962, %v958
        %v1067 = vpack.c.b16 %v963, %v959
        %v1068 = vpack.c.b16 %v964, %v960
        %v1069 = vpack.c.b16 %v965, %v961
        %v1070 = vpack.c.b16 %v970, %v966
        %v1071 = vpack.c.b16 %v971, %v967
        %v1072 = vpack.c.b16 %v972, %v968
        %v1073 = vpack.c.b16 %v973, %v969
        %v1074 = vpack.c.b16 %v978, %v974
        %v1075 = vpack.c.b16 %v979, %v975
        %v1076 = vpack.c.b16 %v980, %v976
        %v1077 = vpack.c.b16 %v981, %v977
        %v1078 = vpack.c.b16 %v986, %v982
        %v1079 = vpack.c.b16 %v987, %v983
        %v1080 = vpack.c.b16 %v988, %v984
        %v1081 = vpack.c.b16 %v989, %v985
        %v1082 = vpack.c.b16 %v994, %v990
        %v1083 = vpack.c.b16 %v995, %v991
        %v1084 = vpack.c.b16 %v996, %v992
        %v1085 = vpack.c.b16 %v997, %v993
        %v1086 = vpack.c.b16 %v1002, %v998
        %v1087 = vpack.c.b16 %v1003, %v999
        %v1088 = vpack.c.b16 %v1004, %v1000
        %v1089 = vpack.c.b16 %v1005, %v1001
        %v1090 = vpack.c.b16 %v1010, %v1006
        %v1091 = vpack.c.b16 %v1011, %v1007
        %v1092 = vpack.c.b16 %v1012, %v1008
        %v1093 = vpack.c.b16 %v1013, %v1009
        %v1094 = vpack.c.b16 %v1018, %v1014
        %v1095 = vpack.c.b16 %v1019, %v1015
        %v1096 = vpack.c.b16 %v1020, %v1016
        %v1097 = vpack.c.b16 %v1021, %v1017
        %v1098 = vpack.c.b16 %v1026, %v1022
        %v1099 = vpack.c.b16 %v1027, %v1023
        %v1100 = vpack.c.b16 %v1028, %v1024
        %v1101 = vpack.c.b16 %v1029, %v1025
        %v1102 = vpack.c.b16 %v1034, %v1030
        %v1103 = vpack.c.b16 %v1035, %v1031
        %v1104 = vpack.c.b16 %v1036, %v1032
        %v1105 = vpack.c.b16 %v1037, %v1033
        %v1106 = vpack.c.b16 %v1042, %v1038
        %v1107 = vpack.c.b16 %v1043, %v1039
        %v1108 = vpack.c.b16 %v1044, %v1040
        %v1109 = vpack.c.b16 %v1045, %v1041
        %1174 = vmatprep.subr.bf16.mxu0 %v1047
        %1175 = vmatpush1.bf16.msra.mxu0 %v1046
        %1176 = vmatprep.subr.bf16.mxu0 %v1051
        %1177 = vmatpush1.bf16.msra.mxu0 %v1050
        %1178 = vmatprep.subr.bf16.mxu0 %v1055
        %1179 = vmatpush1.bf16.msra.mxu0 %v1054
        %1180 = vmatprep.subr.bf16.mxu0 %v1059
        %1181 = vmatpush1.bf16.msra.mxu0 %v1058
        %1182 = vmatprep.subr.bf16.mxu0 %v1063
        %1183 = vmatpush1.bf16.msra.mxu0 %v1062
        %1184 = vmatprep.subr.bf16.mxu0 %v1067
        %1185 = vmatpush1.bf16.msra.mxu0 %v1066
        %1186 = vmatprep.subr.bf16.mxu0 %v1071
        %1187 = vmatpush1.bf16.msra.mxu0 %v1070
        %1188 = vmatprep.subr.bf16.mxu0 %v1075
        %1189 = vmatpush1.bf16.msra.mxu0 %v1074
        %1190 = vmatprep.subr.bf16.mxu0 %v1079
        %1191 = vmatpush1.bf16.msra.mxu0 %v1078
        %1192 = vmatprep.subr.bf16.mxu0 %v1083
        %1193 = vmatpush1.bf16.msra.mxu0 %v1082
        %1194 = vmatprep.subr.bf16.mxu0 %v1087
        %1195 = vmatpush1.bf16.msra.mxu0 %v1086
        %1196 = vmatprep.subr.bf16.mxu0 %v1091
        %1197 = vmatpush1.bf16.msra.mxu0 %v1090
        %1198 = vmatprep.subr.bf16.mxu0 %v1095
        %1199 = vmatpush1.bf16.msra.mxu0 %v1094
        %1200 = vmatprep.subr.bf16.mxu0 %v1099
        %1201 = vmatpush1.bf16.msra.mxu0 %v1098
        %1202 = vmatprep.subr.bf16.mxu0 %v1103
        %1203 = vmatpush1.bf16.msra.mxu0 %v1102
        %1204 = vmatprep.subr.bf16.mxu0 %v1107
        %1205 = vmatpush1.bf16.msra.mxu0 %v1106
        %1206 = vmatprep.mubr.bf16.mxu0 %v787
        %1207 = vmatmul.mubr.bf16.gmra.mrb[0].mxu0 %v786
        %v1208 = vpop.f32.mrb[0].mxu0
        %v1209 = vadd.f32 0.0, %v1208
        %v1210 = vpop.f32.mrb[0].mxu0
        %v1211 = vadd.f32 0.0, %v1210
        %v1212 = vpop.f32.mrb[0].mxu0
        %v1213 = vadd.f32 0.0, %v1212
        %v1214 = vpop.f32.mrb[0].mxu0
        %v1215 = vadd.f32 0.0, %v1214
        %1216 = vmatprep.mubr.bf16.mxu0 %v789
        %1217 = vmatmul.mubr.bf16.gmra.mrb[0].mxu0 %v788
        %v1218 = vpop.f32.mrb[0].mxu0
        %v1219 = vadd.f32 0.0, %v1218
        %v1220 = vpop.f32.mrb[0].mxu0
        %v1221 = vadd.f32 0.0, %v1220
        %v1222 = vpop.f32.mrb[0].mxu0
        %v1223 = vadd.f32 0.0, %v1222
        %v1224 = vpop.f32.mrb[0].mxu0
        %v1225 = vadd.f32 0.0, %v1224
        %1226 = vdwg.mxu0
        %1227 = vmatprep.subr.bf16.mxu0 %v1049
        %1228 = vmatpush1.bf16.msra.mxu0 %v1048
        %1229 = vmatprep.subr.bf16.mxu0 %v1053
        %1230 = vmatpush1.bf16.msra.mxu0 %v1052
        %1231 = vmatprep.subr.bf16.mxu0 %v1057
        %1232 = vmatpush1.bf16.msra.mxu0 %v1056
        %1233 = vmatprep.subr.bf16.mxu0 %v1061
        %1234 = vmatpush1.bf16.msra.mxu0 %v1060
        %1235 = vmatprep.subr.bf16.mxu0 %v1065
        %1236 = vmatpush1.bf16.msra.mxu0 %v1064
        %1237 = vmatprep.subr.bf16.mxu0 %v1069
        %1238 = vmatpush1.bf16.msra.mxu0 %v1068
        %1239 = vmatprep.subr.bf16.mxu0 %v1073
        %1240 = vmatpush1.bf16.msra.mxu0 %v1072
        %1241 = vmatprep.subr.bf16.mxu0 %v1077
        %1242 = vmatpush1.bf16.msra.mxu0 %v1076
        %1243 = vmatprep.subr.bf16.mxu0 %v1081
        %1244 = vmatpush1.bf16.msra.mxu0 %v1080
        %1245 = vmatprep.subr.bf16.mxu0 %v1085
        %1246 = vmatpush1.bf16.msra.mxu0 %v1084
        %1247 = vmatprep.subr.bf16.mxu0 %v1089
        %1248 = vmatpush1.bf16.msra.mxu0 %v1088
        %1249 = vmatprep.subr.bf16.mxu0 %v1093
        %1250 = vmatpush1.bf16.msra.mxu0 %v1092
        %1251 = vmatprep.subr.bf16.mxu0 %v1097
        %1252 = vmatpush1.bf16.msra.mxu0 %v1096
        %1253 = vmatprep.subr.bf16.mxu0 %v1101
        %1254 = vmatpush1.bf16.msra.mxu0 %v1100
        %1255 = vmatprep.subr.bf16.mxu0 %v1105
        %1256 = vmatpush1.bf16.msra.mxu0 %v1104
        %1257 = vmatprep.subr.bf16.mxu0 %v1109
        %1258 = vmatpush1.bf16.msra.mxu0 %v1108
        %1259 = vmatprep.mubr.bf16.mxu0 %v787
        %1260 = vmatmul.mubr.bf16.gmra.mrb[0].mxu0 %v786
        %v1261 = vpop.f32.mrb[0].mxu0
        %v1262 = vadd.f32 0.0, %v1261
        %v1263 = vpop.f32.mrb[0].mxu0
        %v1264 = vadd.f32 0.0, %v1263
        %v1265 = vpop.f32.mrb[0].mxu0
        %v1266 = vadd.f32 0.0, %v1265
        %v1267 = vpop.f32.mrb[0].mxu0
        %v1268 = vadd.f32 0.0, %v1267
        %1269 = vmatprep.mubr.bf16.mxu0 %v789
        %1270 = vmatmul.mubr.bf16.gmra.mrb[0].mxu0 %v788
        %v1271 = vpop.f32.mrb[0].mxu0
        %v1272 = vadd.f32 0.0, %v1271
        %v1273 = vpop.f32.mrb[0].mxu0
        %v1274 = vadd.f32 0.0, %v1273
        %v1275 = vpop.f32.mrb[0].mxu0
        %v1276 = vadd.f32 0.0, %v1275
        %v1277 = vpop.f32.mrb[0].mxu0
        %v1278 = vadd.f32 0.0, %v1277
        %1279 = vdwg.mxu0
        %v1280 = vld [vmem:[#allocation4 + $0x7] sm:$0xf]
        %v1281 = vld [vmem:[#allocation4 + $0xb] sm:$0xf]
        %v1282 = vadd.f32 %v1209, %v1213
        %v1283 = vadd.f32 %v1282, %v1219
        %v1284 = vadd.f32 %v1283, %v1223
        %v1285 = vrot.slane %v1284, 4
        %v1286 = vadd.f32 %v1284, %v1285
        %v1287 = vrot.slane %v1286, 2
        %v1288 = vadd.f32 %v1286, %v1287
        %v1289 = vrot.slane %v1288, 1
        %v1290 = vadd.f32 %v1288, %v1289
        %v1291 = vadd.f32 %v1211, %v1215
        %v1292 = vadd.f32 %v1291, %v1221
        %v1293 = vadd.f32 %v1292, %v1225
        %v1294 = vrot.slane %v1293, 4
        %v1295 = vadd.f32 %v1293, %v1294
        %v1296 = vrot.slane %v1295, 2
        %v1297 = vadd.f32 %v1295, %v1296
        %v1298 = vrot.slane %v1297, 1
        %v1299 = vadd.f32 %v1297, %v1298
        %v1300 = vadd.f32 %v1262, %v1266
        %v1301 = vadd.f32 %v1300, %v1272
        %v1302 = vadd.f32 %v1301, %v1276
        %v1303 = vrot.slane %v1302, 4
        %v1304 = vadd.f32 %v1302, %v1303
        %v1305 = vrot.slane %v1304, 2
        %v1306 = vadd.f32 %v1304, %v1305
        %v1307 = vrot.slane %v1306, 1
        %v1308 = vadd.f32 %v1306, %v1307
        %v1309 = vadd.f32 %v1264, %v1268
        %v1310 = vadd.f32 %v1309, %v1274
        %v1311 = vadd.f32 %v1310, %v1278
        %v1312 = vrot.slane %v1311, 4
        %v1313 = vadd.f32 %v1311, %v1312
        %v1314 = vrot.slane %v1313, 2
        %v1315 = vadd.f32 %v1313, %v1314
        %v1316 = vrot.slane %v1315, 1
        %v1317 = vadd.f32 %v1315, %v1316
        %v1318 = vmul.f32 %v1290, %v673
        %v1319 = vmul.f32 %v1299, %v673
        %v1320 = vmul.f32 %v1308, %v673
        %v1321 = vmul.f32 %v1317, %v673
        %v1322 = vsub.f32 %v1209, %v1318
        %v1323 = vsub.f32 %v1211, %v1319
        %v1324 = vsub.f32 %v1262, %v1320
        %v1325 = vsub.f32 %v1264, %v1321
        %v1326 = vsub.f32 %v1213, %v1318
        %v1327 = vsub.f32 %v1215, %v1319
        %v1328 = vsub.f32 %v1266, %v1320
        %v1329 = vsub.f32 %v1268, %v1321
        %v1330 = vsub.f32 %v1219, %v1318
        %v1331 = vsub.f32 %v1221, %v1319
        %v1332 = vsub.f32 %v1272, %v1320
        %v1333 = vsub.f32 %v1274, %v1321
        %v1334 = vsub.f32 %v1223, %v1318
        %v1335 = vsub.f32 %v1225, %v1319
        %v1336 = vsub.f32 %v1276, %v1320
        %v1337 = vsub.f32 %v1278, %v1321
        %v1338 = vmul.f32 %v1322, %v1322
        %v1339 = vmul.f32 %v1323, %v1323
        %v1340 = vmul.f32 %v1324, %v1324
        %v1341 = vmul.f32 %v1325, %v1325
        %v1342 = vmul.f32 %v1326, %v1326
        %v1343 = vmul.f32 %v1327, %v1327
        %v1344 = vmul.f32 %v1328, %v1328
        %v1345 = vmul.f32 %v1329, %v1329
        %v1346 = vmul.f32 %v1330, %v1330
        %v1347 = vmul.f32 %v1331, %v1331
        %v1348 = vmul.f32 %v1332, %v1332
        %v1349 = vmul.f32 %v1333, %v1333
        %v1350 = vmul.f32 %v1334, %v1334
        %v1351 = vmul.f32 %v1335, %v1335
        %v1352 = vmul.f32 %v1336, %v1336
        %v1353 = vmul.f32 %v1337, %v1337
        %v1354 = vadd.f32 %v1338, %v1342
        %v1355 = vadd.f32 %v1354, %v1346
        %v1356 = vadd.f32 %v1355, %v1350
        %v1357 = vrot.slane %v1356, 4
        %v1358 = vadd.f32 %v1356, %v1357
        %v1359 = vrot.slane %v1358, 2
        %v1360 = vadd.f32 %v1358, %v1359
        %v1361 = vrot.slane %v1360, 1
        %v1362 = vadd.f32 %v1360, %v1361
        %v1363 = vadd.f32 %v1339, %v1343
        %v1364 = vadd.f32 %v1363, %v1347
        %v1365 = vadd.f32 %v1364, %v1351
        %v1366 = vrot.slane %v1365, 4
        %v1367 = vadd.f32 %v1365, %v1366
        %v1368 = vrot.slane %v1367, 2
        %v1369 = vadd.f32 %v1367, %v1368
        %v1370 = vrot.slane %v1369, 1
        %v1371 = vadd.f32 %v1369, %v1370
        %v1372 = vadd.f32 %v1340, %v1344
        %v1373 = vadd.f32 %v1372, %v1348
        %v1374 = vadd.f32 %v1373, %v1352
        %v1375 = vrot.slane %v1374, 4
        %v1376 = vadd.f32 %v1374, %v1375
        %v1377 = vrot.slane %v1376, 2
        %v1378 = vadd.f32 %v1376, %v1377
        %v1379 = vrot.slane %v1378, 1
        %v1380 = vadd.f32 %v1378, %v1379
        %v1381 = vadd.f32 %v1341, %v1345
        %v1382 = vadd.f32 %v1381, %v1349
        %v1383 = vadd.f32 %v1382, %v1353
        %v1384 = vrot.slane %v1383, 4
        %v1385 = vadd.f32 %v1383, %v1384
        %v1386 = vrot.slane %v1385, 2
        %v1387 = vadd.f32 %v1385, %v1386
        %v1388 = vrot.slane %v1387, 1
        %v1389 = vadd.f32 %v1387, %v1388
        %v1390 = vmul.f32 %v1362, %v673
        %v1391 = vmul.f32 %v1371, %v673
        %v1392 = vmul.f32 %v1380, %v673
        %v1393 = vmul.f32 %v1389, %v673
        %v1394 = vadd.f32 %v1390, 0.8
        %v1395 = vadd.f32 %v1391, 0.8
        %v1396 = vadd.f32 %v1392, 0.8
        %v1397 = vadd.f32 %v1393, 0.8
        %v1398 = vrsqrt.pop %v1394
        %v1399 = vrsqrt.pop %v1395
        %v1400 = vrsqrt.pop %v1396
        %v1401 = vrsqrt.pop %v1397
        %v1402 = vmul.f32 %v1322, %v1398
        %v1403 = vmul.f32 %v1323, %v1399
        %v1404 = vmul.f32 %v1324, %v1400
        %v1405 = vmul.f32 %v1325, %v1401
        %v1406 = vmul.f32 %v1326, %v1398
        %v1407 = vmul.f32 %v1327, %v1399
        %v1408 = vmul.f32 %v1328, %v1400
        %v1409 = vmul.f32 %v1329, %v1401
        %v1410 = vmul.f32 %v1330, %v1398
        %v1411 = vmul.f32 %v1331, %v1399
        %v1412 = vmul.f32 %v1332, %v1400
        %v1413 = vmul.f32 %v1333, %v1401
        %v1414 = vmul.f32 %v1334, %v1398
        %v1415 = vmul.f32 %v1335, %v1399
        %v1416 = vmul.f32 %v1336, %v1400
        %v1417 = vmul.f32 %v1337, %v1401
        %v1419 = vlaneseq
        %v1420 = vshrl.u32 %v1419, 7
        %v1421 = vsub.s32 0, %v1420
        %v1422 = vrot.slane %v1280, %v1421
        %v1423 = vlaneseq
        %v1424 = vshrl.u32 %v1423, 7
        %v1425 = vsub.s32 1, %v1424
        %v1426 = vrot.slane %v1280, %v1425
        %v1427 = vlaneseq
        %v1428 = vshrl.u32 %v1427, 7
        %v1429 = vsub.s32 2, %v1428
        %v1430 = vrot.slane %v1280, %v1429
        %v1431 = vlaneseq
        %v1432 = vshrl.u32 %v1431, 7
        %v1433 = vsub.s32 3, %v1432
        %v1434 = vrot.slane %v1280, %v1433
        %v1439 = vmul.f32 %v1402, %v1422
        %v1440 = vmul.f32 %v1403, %v1426
        %v1441 = vmul.f32 %v1404, %v1430
        %v1442 = vmul.f32 %v1405, %v1434
        %v1443 = vmul.f32 %v1406, %v1422
        %v1444 = vmul.f32 %v1407, %v1426
        %v1445 = vmul.f32 %v1408, %v1430
        %v1446 = vmul.f32 %v1409, %v1434
        %v1447 = vmul.f32 %v1410, %v1422
        %v1448 = vmul.f32 %v1411, %v1426
        %v1449 = vmul.f32 %v1412, %v1430
        %v1450 = vmul.f32 %v1413, %v1434
        %v1451 = vmul.f32 %v1414, %v1422
        %v1452 = vmul.f32 %v1415, %v1426
        %v1453 = vmul.f32 %v1416, %v1430
        %v1454 = vmul.f32 %v1417, %v1434
        %v1456 = vlaneseq
        %v1457 = vshrl.u32 %v1456, 7
        %v1458 = vsub.s32 0, %v1457
        %v1459 = vrot.slane %v1281, %v1458
        %v1460 = vlaneseq
        %v1461 = vshrl.u32 %v1460, 7
        %v1462 = vsub.s32 1, %v1461
        %v1463 = vrot.slane %v1281, %v1462
        %v1464 = vlaneseq
        %v1465 = vshrl.u32 %v1464, 7
        %v1466 = vsub.s32 2, %v1465
        %v1467 = vrot.slane %v1281, %v1466
        %v1468 = vlaneseq
        %v1469 = vshrl.u32 %v1468, 7
        %v1470 = vsub.s32 3, %v1469
        %v1471 = vrot.slane %v1281, %v1470
        %v1476 = vadd.f32 %v1439, %v1459
        %v1477 = vadd.f32 %v1440, %v1463
        %v1478 = vadd.f32 %v1441, %v1467
        %v1479 = vadd.f32 %v1442, %v1471
        %v1480 = vadd.f32 %v1443, %v1459
        %v1481 = vadd.f32 %v1444, %v1463
        %v1482 = vadd.f32 %v1445, %v1467
        %v1483 = vadd.f32 %v1446, %v1471
        %v1484 = vadd.f32 %v1447, %v1459
        %v1485 = vadd.f32 %v1448, %v1463
        %v1486 = vadd.f32 %v1449, %v1467
        %v1487 = vadd.f32 %v1450, %v1471
        %v1488 = vadd.f32 %v1451, %v1459
        %v1489 = vadd.f32 %v1452, %v1463
        %v1490 = vadd.f32 %v1453, %v1467
        %v1491 = vadd.f32 %v1454, %v1471
        %vm1492 = vcmp.gt.f32.partialorder %v1476, 0.0
        %vm1493 = vcmp.gt.f32.partialorder %v1477, 0.0
        %vm1494 = vcmp.gt.f32.partialorder %v1478, 0.0
        %vm1495 = vcmp.gt.f32.partialorder %v1479, 0.0
        %vm1496 = vcmp.gt.f32.partialorder %v1480, 0.0
        %vm1497 = vcmp.gt.f32.partialorder %v1481, 0.0
        %vm1498 = vcmp.gt.f32.partialorder %v1482, 0.0
        %vm1499 = vcmp.gt.f32.partialorder %v1483, 0.0
        %vm1500 = vcmp.gt.f32.partialorder %v1484, 0.0
        %vm1501 = vcmp.gt.f32.partialorder %v1485, 0.0
        %vm1502 = vcmp.gt.f32.partialorder %v1486, 0.0
        %vm1503 = vcmp.gt.f32.partialorder %v1487, 0.0
        %vm1504 = vcmp.gt.f32.partialorder %v1488, 0.0
        %vm1505 = vcmp.gt.f32.partialorder %v1489, 0.0
        %vm1506 = vcmp.gt.f32.partialorder %v1490, 0.0
        %vm1507 = vcmp.gt.f32.partialorder %v1491, 0.0
        %v1508 = vmul.f32 %v1476, 0.2
        %v1509 = vmul.f32 %v1477, 0.2
        %v1510 = vmul.f32 %v1478, 0.2
        %v1511 = vmul.f32 %v1479, 0.2
        %v1512 = vmul.f32 %v1480, 0.2
        %v1513 = vmul.f32 %v1481, 0.2
        %v1514 = vmul.f32 %v1482, 0.2
        %v1515 = vmul.f32 %v1483, 0.2
        %v1516 = vmul.f32 %v1484, 0.2
        %v1517 = vmul.f32 %v1485, 0.2
        %v1518 = vmul.f32 %v1486, 0.2
        %v1519 = vmul.f32 %v1487, 0.2
        %v1520 = vmul.f32 %v1488, 0.2
        %v1521 = vmul.f32 %v1489, 0.2
        %v1522 = vmul.f32 %v1490, 0.2
        %v1523 = vmul.f32 %v1491, 0.2
        %v1524 = vsel %vm1492, %v1476, %v1508
        %v1525 = vsel %vm1493, %v1477, %v1509
        %v1526 = vsel %vm1494, %v1478, %v1510
        %v1527 = vsel %vm1495, %v1479, %v1511
        %v1528 = vsel %vm1496, %v1480, %v1512
        %v1529 = vsel %vm1497, %v1481, %v1513
        %v1530 = vsel %vm1498, %v1482, %v1514
        %v1531 = vsel %vm1499, %v1483, %v1515
        %v1532 = vsel %vm1500, %v1484, %v1516
        %v1533 = vsel %vm1501, %v1485, %v1517
        %v1534 = vsel %vm1502, %v1486, %v1518
        %v1535 = vsel %vm1503, %v1487, %v1519
        %v1536 = vsel %vm1504, %v1488, %v1520
        %v1537 = vsel %vm1505, %v1489, %v1521
        %v1538 = vsel %vm1506, %v1490, %v1522
        %v1539 = vsel %vm1507, %v1491, %v1523
        %v1540 = vpack.c.bf16 %v1528, %v1524
        %v1541 = vpack.c.bf16 %v1529, %v1525
        %v1542 = vpack.c.bf16 %v1530, %v1526
        %v1543 = vpack.c.bf16 %v1531, %v1527
        %v1544 = vpack.c.bf16 %v1536, %v1532
        %v1545 = vpack.c.bf16 %v1537, %v1533
        %v1546 = vpack.c.bf16 %v1538, %v1534
        %v1547 = vpack.c.bf16 %v1539, %v1535
        %v1548 = vld [vmem:[#allocation10] sm:$0xff]
        %v1549 = vld [vmem:[#allocation10 + $0x8] sm:$0xff]
        %v1550 = vld [vmem:[#allocation10 + $0x10] sm:$0xff]
        %v1551 = vld [vmem:[#allocation10 + $0x18] sm:$0xff]
        %v1552 = vld [vmem:[#allocation10 + $0x20] sm:$0xff]
        %v1553 = vld [vmem:[#allocation10 + $0x28] sm:$0xff]
        %v1554 = vld [vmem:[#allocation10 + $0x30] sm:$0xff]
        %v1555 = vld [vmem:[#allocation10 + $0x38] sm:$0xff]
        %v1556 = vld [vmem:[#allocation10 + $0x40] sm:$0xff]
        %v1557 = vld [vmem:[#allocation10 + $0x48] sm:$0xff]
        %v1558 = vld [vmem:[#allocation10 + $0x50] sm:$0xff]
        %v1559 = vld [vmem:[#allocation10 + $0x58] sm:$0xff]
        %v1560 = vld [vmem:[#allocation10 + $0x60] sm:$0xff]
        %v1561 = vld [vmem:[#allocation10 + $0x68] sm:$0xff]
        %v1562 = vld [vmem:[#allocation10 + $0x70] sm:$0xff]
        %v1563 = vld [vmem:[#allocation10 + $0x78] sm:$0xff]
        %v1564 = vld [vmem:[#allocation10 + $0x80] sm:$0xff]
        %v1565 = vld [vmem:[#allocation10 + $0x88] sm:$0xff]
        %v1566 = vld [vmem:[#allocation10 + $0x90] sm:$0xff]
        %v1567 = vld [vmem:[#allocation10 + $0x98] sm:$0xff]
        %v1568 = vld [vmem:[#allocation10 + $0xa0] sm:$0xff]
        %v1569 = vld [vmem:[#allocation10 + $0xa8] sm:$0xff]
        %v1570 = vld [vmem:[#allocation10 + $0xb0] sm:$0xff]
        %v1571 = vld [vmem:[#allocation10 + $0xb8] sm:$0xff]
        %v1572 = vld [vmem:[#allocation10 + $0xc0] sm:$0xff]
        %v1573 = vld [vmem:[#allocation10 + $0xc8] sm:$0xff]
        %v1574 = vld [vmem:[#allocation10 + $0xd0] sm:$0xff]
        %v1575 = vld [vmem:[#allocation10 + $0xd8] sm:$0xff]
        %v1576 = vld [vmem:[#allocation10 + $0xe0] sm:$0xff]
        %v1577 = vld [vmem:[#allocation10 + $0xe8] sm:$0xff]
        %v1578 = vld [vmem:[#allocation10 + $0xf0] sm:$0xff]
        %v1579 = vld [vmem:[#allocation10 + $0xf8] sm:$0xff]
        %v1580 = vld [vmem:[#allocation10 + $0x100] sm:$0xff]
        %v1581 = vld [vmem:[#allocation10 + $0x108] sm:$0xff]
        %v1582 = vld [vmem:[#allocation10 + $0x110] sm:$0xff]
        %v1583 = vld [vmem:[#allocation10 + $0x118] sm:$0xff]
        %v1584 = vld [vmem:[#allocation10 + $0x120] sm:$0xff]
        %v1585 = vld [vmem:[#allocation10 + $0x128] sm:$0xff]
        %v1586 = vld [vmem:[#allocation10 + $0x130] sm:$0xff]
        %v1587 = vld [vmem:[#allocation10 + $0x138] sm:$0xff]
        %v1588 = vld [vmem:[#allocation10 + $0x140] sm:$0xff]
        %v1589 = vld [vmem:[#allocation10 + $0x148] sm:$0xff]
        %v1590 = vld [vmem:[#allocation10 + $0x150] sm:$0xff]
        %v1591 = vld [vmem:[#allocation10 + $0x158] sm:$0xff]
        %v1592 = vld [vmem:[#allocation10 + $0x160] sm:$0xff]
        %v1593 = vld [vmem:[#allocation10 + $0x168] sm:$0xff]
        %v1594 = vld [vmem:[#allocation10 + $0x170] sm:$0xff]
        %v1595 = vld [vmem:[#allocation10 + $0x178] sm:$0xff]
        %v1596 = vld [vmem:[#allocation10 + $0x180] sm:$0xff]
        %v1597 = vld [vmem:[#allocation10 + $0x188] sm:$0xff]
        %v1598 = vld [vmem:[#allocation10 + $0x190] sm:$0xff]
        %v1599 = vld [vmem:[#allocation10 + $0x198] sm:$0xff]
        %v1600 = vld [vmem:[#allocation10 + $0x1a0] sm:$0xff]
        %v1601 = vld [vmem:[#allocation10 + $0x1a8] sm:$0xff]
        %v1602 = vld [vmem:[#allocation10 + $0x1b0] sm:$0xff]
        %v1603 = vld [vmem:[#allocation10 + $0x1b8] sm:$0xff]
        %v1604 = vld [vmem:[#allocation10 + $0x1c0] sm:$0xff]
        %v1605 = vld [vmem:[#allocation10 + $0x1c8] sm:$0xff]
        %v1606 = vld [vmem:[#allocation10 + $0x1d0] sm:$0xff]
        %v1607 = vld [vmem:[#allocation10 + $0x1d8] sm:$0xff]
        %v1608 = vld [vmem:[#allocation10 + $0x1e0] sm:$0xff]
        %v1609 = vld [vmem:[#allocation10 + $0x1e8] sm:$0xff]
        %v1610 = vld [vmem:[#allocation10 + $0x1f0] sm:$0xff]
        %v1611 = vld [vmem:[#allocation10 + $0x1f8] sm:$0xff]
        %v1612 = vld [vmem:[#allocation10 + $0x200] sm:$0xff]
        %v1613 = vld [vmem:[#allocation10 + $0x208] sm:$0xff]
        %v1614 = vld [vmem:[#allocation10 + $0x210] sm:$0xff]
        %v1615 = vld [vmem:[#allocation10 + $0x218] sm:$0xff]
        %v1616 = vld [vmem:[#allocation10 + $0x220] sm:$0xff]
        %v1617 = vld [vmem:[#allocation10 + $0x228] sm:$0xff]
        %v1618 = vld [vmem:[#allocation10 + $0x230] sm:$0xff]
        %v1619 = vld [vmem:[#allocation10 + $0x238] sm:$0xff]
        %v1620 = vld [vmem:[#allocation10 + $0x240] sm:$0xff]
        %v1621 = vld [vmem:[#allocation10 + $0x248] sm:$0xff]
        %v1622 = vld [vmem:[#allocation10 + $0x250] sm:$0xff]
        %v1623 = vld [vmem:[#allocation10 + $0x258] sm:$0xff]
        %v1624 = vld [vmem:[#allocation10 + $0x260] sm:$0xff]
        %v1625 = vld [vmem:[#allocation10 + $0x268] sm:$0xff]
        %v1626 = vld [vmem:[#allocation10 + $0x270] sm:$0xff]
        %v1627 = vld [vmem:[#allocation10 + $0x278] sm:$0xff]
        %v1628 = vld [vmem:[#allocation10 + $0x280] sm:$0xff]
        %v1629 = vld [vmem:[#allocation10 + $0x288] sm:$0xff]
        %v1630 = vld [vmem:[#allocation10 + $0x290] sm:$0xff]
        %v1631 = vld [vmem:[#allocation10 + $0x298] sm:$0xff]
        %v1632 = vld [vmem:[#allocation10 + $0x2a0] sm:$0xff]
        %v1633 = vld [vmem:[#allocation10 + $0x2a8] sm:$0xff]
        %v1634 = vld [vmem:[#allocation10 + $0x2b0] sm:$0xff]
        %v1635 = vld [vmem:[#allocation10 + $0x2b8] sm:$0xff]
        %v1636 = vld [vmem:[#allocation10 + $0x2c0] sm:$0xff]
        %v1637 = vld [vmem:[#allocation10 + $0x2c8] sm:$0xff]
        %v1638 = vld [vmem:[#allocation10 + $0x2d0] sm:$0xff]
        %v1639 = vld [vmem:[#allocation10 + $0x2d8] sm:$0xff]
        %v1640 = vld [vmem:[#allocation10 + $0x2e0] sm:$0xff]
        %v1641 = vld [vmem:[#allocation10 + $0x2e8] sm:$0xff]
        %v1642 = vld [vmem:[#allocation10 + $0x2f0] sm:$0xff]
        %v1643 = vld [vmem:[#allocation10 + $0x2f8] sm:$0xff]
        %v1644 = vld [vmem:[#allocation10 + $0x300] sm:$0xff]
        %v1645 = vld [vmem:[#allocation10 + $0x308] sm:$0xff]
        %v1646 = vld [vmem:[#allocation10 + $0x310] sm:$0xff]
        %v1647 = vld [vmem:[#allocation10 + $0x318] sm:$0xff]
        %v1648 = vld [vmem:[#allocation10 + $0x320] sm:$0xff]
        %v1649 = vld [vmem:[#allocation10 + $0x328] sm:$0xff]
        %v1650 = vld [vmem:[#allocation10 + $0x330] sm:$0xff]
        %v1651 = vld [vmem:[#allocation10 + $0x338] sm:$0xff]
        %v1652 = vld [vmem:[#allocation10 + $0x340] sm:$0xff]
        %v1653 = vld [vmem:[#allocation10 + $0x348] sm:$0xff]
        %v1654 = vld [vmem:[#allocation10 + $0x350] sm:$0xff]
        %v1655 = vld [vmem:[#allocation10 + $0x358] sm:$0xff]
        %v1656 = vld [vmem:[#allocation10 + $0x360] sm:$0xff]
        %v1657 = vld [vmem:[#allocation10 + $0x368] sm:$0xff]
        %v1658 = vld [vmem:[#allocation10 + $0x370] sm:$0xff]
        %v1659 = vld [vmem:[#allocation10 + $0x378] sm:$0xff]
        %v1660 = vld [vmem:[#allocation10 + $0x380] sm:$0xff]
        %v1661 = vld [vmem:[#allocation10 + $0x388] sm:$0xff]
        %v1662 = vld [vmem:[#allocation10 + $0x390] sm:$0xff]
        %v1663 = vld [vmem:[#allocation10 + $0x398] sm:$0xff]
        %v1664 = vld [vmem:[#allocation10 + $0x3a0] sm:$0xff]
        %v1665 = vld [vmem:[#allocation10 + $0x3a8] sm:$0xff]
        %v1666 = vld [vmem:[#allocation10 + $0x3b0] sm:$0xff]
        %v1667 = vld [vmem:[#allocation10 + $0x3b8] sm:$0xff]
        %v1668 = vld [vmem:[#allocation10 + $0x3c0] sm:$0xff]
        %v1669 = vld [vmem:[#allocation10 + $0x3c8] sm:$0xff]
        %v1670 = vld [vmem:[#allocation10 + $0x3d0] sm:$0xff]
        %v1671 = vld [vmem:[#allocation10 + $0x3d8] sm:$0xff]
        %v1672 = vld [vmem:[#allocation10 + $0x3e0] sm:$0xff]
        %v1673 = vld [vmem:[#allocation10 + $0x3e8] sm:$0xff]
        %v1674 = vld [vmem:[#allocation10 + $0x3f0] sm:$0xff]
        %v1675 = vld [vmem:[#allocation10 + $0x3f8] sm:$0xff]
        %v1676 = vld [vmem:[#allocation10 + $0x400] sm:$0xff]
        %v1677 = vld [vmem:[#allocation10 + $0x408] sm:$0xff]
        %v1678 = vld [vmem:[#allocation10 + $0x410] sm:$0xff]
        %v1679 = vld [vmem:[#allocation10 + $0x418] sm:$0xff]
        %v1680 = vld [vmem:[#allocation10 + $0x420] sm:$0xff]
        %v1681 = vld [vmem:[#allocation10 + $0x428] sm:$0xff]
        %v1682 = vld [vmem:[#allocation10 + $0x430] sm:$0xff]
        %v1683 = vld [vmem:[#allocation10 + $0x438] sm:$0xff]
        %v1684 = vld [vmem:[#allocation10 + $0x440] sm:$0xff]
        %v1685 = vld [vmem:[#allocation10 + $0x448] sm:$0xff]
        %v1686 = vld [vmem:[#allocation10 + $0x450] sm:$0xff]
        %v1687 = vld [vmem:[#allocation10 + $0x458] sm:$0xff]
        %v1688 = vld [vmem:[#allocation10 + $0x460] sm:$0xff]
        %v1689 = vld [vmem:[#allocation10 + $0x468] sm:$0xff]
        %v1690 = vld [vmem:[#allocation10 + $0x470] sm:$0xff]
        %v1691 = vld [vmem:[#allocation10 + $0x478] sm:$0xff]
        %v1692 = vld [vmem:[#allocation10 + $0x480] sm:$0xff]
        %v1693 = vld [vmem:[#allocation10 + $0x488] sm:$0xff]
        %v1694 = vld [vmem:[#allocation10 + $0x490] sm:$0xff]
        %v1695 = vld [vmem:[#allocation10 + $0x498] sm:$0xff]
        %v1696 = vld [vmem:[#allocation10 + $0x4a0] sm:$0xff]
        %v1697 = vld [vmem:[#allocation10 + $0x4a8] sm:$0xff]
        %v1698 = vld [vmem:[#allocation10 + $0x4b0] sm:$0xff]
        %v1699 = vld [vmem:[#allocation10 + $0x4b8] sm:$0xff]
        %v1700 = vld [vmem:[#allocation10 + $0x4c0] sm:$0xff]
        %v1701 = vld [vmem:[#allocation10 + $0x4c8] sm:$0xff]
        %v1702 = vld [vmem:[#allocation10 + $0x4d0] sm:$0xff]
        %v1703 = vld [vmem:[#allocation10 + $0x4d8] sm:$0xff]
        %v1704 = vld [vmem:[#allocation10 + $0x4e0] sm:$0xff]
        %v1705 = vld [vmem:[#allocation10 + $0x4e8] sm:$0xff]
        %v1706 = vld [vmem:[#allocation10 + $0x4f0] sm:$0xff]
        %v1707 = vld [vmem:[#allocation10 + $0x4f8] sm:$0xff]
        %v1708 = vld [vmem:[#allocation10 + $0x500] sm:$0xff]
        %v1709 = vld [vmem:[#allocation10 + $0x508] sm:$0xff]
        %v1710 = vld [vmem:[#allocation10 + $0x510] sm:$0xff]
        %v1711 = vld [vmem:[#allocation10 + $0x518] sm:$0xff]
        %v1712 = vld [vmem:[#allocation10 + $0x520] sm:$0xff]
        %v1713 = vld [vmem:[#allocation10 + $0x528] sm:$0xff]
        %v1714 = vld [vmem:[#allocation10 + $0x530] sm:$0xff]
        %v1715 = vld [vmem:[#allocation10 + $0x538] sm:$0xff]
        %v1716 = vld [vmem:[#allocation10 + $0x540] sm:$0xff]
        %v1717 = vld [vmem:[#allocation10 + $0x548] sm:$0xff]
        %v1718 = vld [vmem:[#allocation10 + $0x550] sm:$0xff]
        %v1719 = vld [vmem:[#allocation10 + $0x558] sm:$0xff]
        %v1720 = vld [vmem:[#allocation10 + $0x560] sm:$0xff]
        %v1721 = vld [vmem:[#allocation10 + $0x568] sm:$0xff]
        %v1722 = vld [vmem:[#allocation10 + $0x570] sm:$0xff]
        %v1723 = vld [vmem:[#allocation10 + $0x578] sm:$0xff]
        %v1724 = vld [vmem:[#allocation10 + $0x580] sm:$0xff]
        %v1725 = vld [vmem:[#allocation10 + $0x588] sm:$0xff]
        %v1726 = vld [vmem:[#allocation10 + $0x590] sm:$0xff]
        %v1727 = vld [vmem:[#allocation10 + $0x598] sm:$0xff]
        %v1728 = vld [vmem:[#allocation10 + $0x5a0] sm:$0xff]
        %v1729 = vld [vmem:[#allocation10 + $0x5a8] sm:$0xff]
        %v1730 = vld [vmem:[#allocation10 + $0x5b0] sm:$0xff]
        %v1731 = vld [vmem:[#allocation10 + $0x5b8] sm:$0xff]
        %v1732 = vld [vmem:[#allocation10 + $0x5c0] sm:$0xff]
        %v1733 = vld [vmem:[#allocation10 + $0x5c8] sm:$0xff]
        %v1734 = vld [vmem:[#allocation10 + $0x5d0] sm:$0xff]
        %v1735 = vld [vmem:[#allocation10 + $0x5d8] sm:$0xff]
        %v1736 = vld [vmem:[#allocation10 + $0x5e0] sm:$0xff]
        %v1737 = vld [vmem:[#allocation10 + $0x5e8] sm:$0xff]
        %v1738 = vld [vmem:[#allocation10 + $0x5f0] sm:$0xff]
        %v1739 = vld [vmem:[#allocation10 + $0x5f8] sm:$0xff]
        %v1740 = vld [vmem:[#allocation10 + $0x600] sm:$0xff]
        %v1741 = vld [vmem:[#allocation10 + $0x608] sm:$0xff]
        %v1742 = vld [vmem:[#allocation10 + $0x610] sm:$0xff]
        %v1743 = vld [vmem:[#allocation10 + $0x618] sm:$0xff]
        %v1744 = vld [vmem:[#allocation10 + $0x620] sm:$0xff]
        %v1745 = vld [vmem:[#allocation10 + $0x628] sm:$0xff]
        %v1746 = vld [vmem:[#allocation10 + $0x630] sm:$0xff]
        %v1747 = vld [vmem:[#allocation10 + $0x638] sm:$0xff]
        %v1748 = vld [vmem:[#allocation10 + $0x640] sm:$0xff]
        %v1749 = vld [vmem:[#allocation10 + $0x648] sm:$0xff]
        %v1750 = vld [vmem:[#allocation10 + $0x650] sm:$0xff]
        %v1751 = vld [vmem:[#allocation10 + $0x658] sm:$0xff]
        %v1752 = vld [vmem:[#allocation10 + $0x660] sm:$0xff]
        %v1753 = vld [vmem:[#allocation10 + $0x668] sm:$0xff]
        %v1754 = vld [vmem:[#allocation10 + $0x670] sm:$0xff]
        %v1755 = vld [vmem:[#allocation10 + $0x678] sm:$0xff]
        %v1756 = vld [vmem:[#allocation10 + $0x680] sm:$0xff]
        %v1757 = vld [vmem:[#allocation10 + $0x688] sm:$0xff]
        %v1758 = vld [vmem:[#allocation10 + $0x690] sm:$0xff]
        %v1759 = vld [vmem:[#allocation10 + $0x698] sm:$0xff]
        %v1760 = vld [vmem:[#allocation10 + $0x6a0] sm:$0xff]
        %v1761 = vld [vmem:[#allocation10 + $0x6a8] sm:$0xff]
        %v1762 = vld [vmem:[#allocation10 + $0x6b0] sm:$0xff]
        %v1763 = vld [vmem:[#allocation10 + $0x6b8] sm:$0xff]
        %v1764 = vld [vmem:[#allocation10 + $0x6c0] sm:$0xff]
        %v1765 = vld [vmem:[#allocation10 + $0x6c8] sm:$0xff]
        %v1766 = vld [vmem:[#allocation10 + $0x6d0] sm:$0xff]
        %v1767 = vld [vmem:[#allocation10 + $0x6d8] sm:$0xff]
        %v1768 = vld [vmem:[#allocation10 + $0x6e0] sm:$0xff]
        %v1769 = vld [vmem:[#allocation10 + $0x6e8] sm:$0xff]
        %v1770 = vld [vmem:[#allocation10 + $0x6f0] sm:$0xff]
        %v1771 = vld [vmem:[#allocation10 + $0x6f8] sm:$0xff]
        %v1772 = vld [vmem:[#allocation10 + $0x700] sm:$0xff]
        %v1773 = vld [vmem:[#allocation10 + $0x708] sm:$0xff]
        %v1774 = vld [vmem:[#allocation10 + $0x710] sm:$0xff]
        %v1775 = vld [vmem:[#allocation10 + $0x718] sm:$0xff]
        %v1776 = vld [vmem:[#allocation10 + $0x720] sm:$0xff]
        %v1777 = vld [vmem:[#allocation10 + $0x728] sm:$0xff]
        %v1778 = vld [vmem:[#allocation10 + $0x730] sm:$0xff]
        %v1779 = vld [vmem:[#allocation10 + $0x738] sm:$0xff]
        %v1780 = vld [vmem:[#allocation10 + $0x740] sm:$0xff]
        %v1781 = vld [vmem:[#allocation10 + $0x748] sm:$0xff]
        %v1782 = vld [vmem:[#allocation10 + $0x750] sm:$0xff]
        %v1783 = vld [vmem:[#allocation10 + $0x758] sm:$0xff]
        %v1784 = vld [vmem:[#allocation10 + $0x760] sm:$0xff]
        %v1785 = vld [vmem:[#allocation10 + $0x768] sm:$0xff]
        %v1786 = vld [vmem:[#allocation10 + $0x770] sm:$0xff]
        %v1787 = vld [vmem:[#allocation10 + $0x778] sm:$0xff]
        %v1788 = vld [vmem:[#allocation10 + $0x780] sm:$0xff]
        %v1789 = vld [vmem:[#allocation10 + $0x788] sm:$0xff]
        %v1790 = vld [vmem:[#allocation10 + $0x790] sm:$0xff]
        %v1791 = vld [vmem:[#allocation10 + $0x798] sm:$0xff]
        %v1792 = vld [vmem:[#allocation10 + $0x7a0] sm:$0xff]
        %v1793 = vld [vmem:[#allocation10 + $0x7a8] sm:$0xff]
        %v1794 = vld [vmem:[#allocation10 + $0x7b0] sm:$0xff]
        %v1795 = vld [vmem:[#allocation10 + $0x7b8] sm:$0xff]
        %v1796 = vld [vmem:[#allocation10 + $0x7c0] sm:$0xff]
        %v1797 = vld [vmem:[#allocation10 + $0x7c8] sm:$0xff]
        %v1798 = vld [vmem:[#allocation10 + $0x7d0] sm:$0xff]
        %v1799 = vld [vmem:[#allocation10 + $0x7d8] sm:$0xff]
        %v1800 = vld [vmem:[#allocation10 + $0x7e0] sm:$0xff]
        %v1801 = vld [vmem:[#allocation10 + $0x7e8] sm:$0xff]
        %v1802 = vld [vmem:[#allocation10 + $0x7f0] sm:$0xff]
        %v1803 = vld [vmem:[#allocation10 + $0x7f8] sm:$0xff]
        %v2060 = vunpack.c.l.b16 %v1548
        %v2061 = vunpack.c.h.b16 %v1548
        %v2062 = vunpack.c.l.b16 %v1549
        %v2063 = vunpack.c.h.b16 %v1549
        %v2064 = vunpack.c.l.b16 %v1550
        %v2065 = vunpack.c.h.b16 %v1550
        %v2066 = vunpack.c.l.b16 %v1551
        %v2067 = vunpack.c.h.b16 %v1551
        %v2068 = vunpack.c.l.b16 %v1552
        %v2069 = vunpack.c.h.b16 %v1552
        %v2070 = vunpack.c.l.b16 %v1553
        %v2071 = vunpack.c.h.b16 %v1553
        %v2072 = vunpack.c.l.b16 %v1554
        %v2073 = vunpack.c.h.b16 %v1554
        %v2074 = vunpack.c.l.b16 %v1555
        %v2075 = vunpack.c.h.b16 %v1555
        %v2076 = vunpack.c.l.b16 %v1556
        %v2077 = vunpack.c.h.b16 %v1556
        %v2078 = vunpack.c.l.b16 %v1557
        %v2079 = vunpack.c.h.b16 %v1557
        %v2080 = vunpack.c.l.b16 %v1558
        %v2081 = vunpack.c.h.b16 %v1558
        %v2082 = vunpack.c.l.b16 %v1559
        %v2083 = vunpack.c.h.b16 %v1559
        %v2084 = vunpack.c.l.b16 %v1560
        %v2085 = vunpack.c.h.b16 %v1560
        %v2086 = vunpack.c.l.b16 %v1561
        %v2087 = vunpack.c.h.b16 %v1561
        %v2088 = vunpack.c.l.b16 %v1562
        %v2089 = vunpack.c.h.b16 %v1562
        %v2090 = vunpack.c.l.b16 %v1563
        %v2091 = vunpack.c.h.b16 %v1563
        %v2092 = vunpack.c.l.b16 %v1564
        %v2093 = vunpack.c.h.b16 %v1564
        %v2094 = vunpack.c.l.b16 %v1565
        %v2095 = vunpack.c.h.b16 %v1565
        %v2096 = vunpack.c.l.b16 %v1566
        %v2097 = vunpack.c.h.b16 %v1566
        %v2098 = vunpack.c.l.b16 %v1567
        %v2099 = vunpack.c.h.b16 %v1567
        %v2100 = vunpack.c.l.b16 %v1568
        %v2101 = vunpack.c.h.b16 %v1568
        %v2102 = vunpack.c.l.b16 %v1569
        %v2103 = vunpack.c.h.b16 %v1569
        %v2104 = vunpack.c.l.b16 %v1570
        %v2105 = vunpack.c.h.b16 %v1570
        %v2106 = vunpack.c.l.b16 %v1571
        %v2107 = vunpack.c.h.b16 %v1571
        %v2108 = vunpack.c.l.b16 %v1572
        %v2109 = vunpack.c.h.b16 %v1572
        %v2110 = vunpack.c.l.b16 %v1573
        %v2111 = vunpack.c.h.b16 %v1573
        %v2112 = vunpack.c.l.b16 %v1574
        %v2113 = vunpack.c.h.b16 %v1574
        %v2114 = vunpack.c.l.b16 %v1575
        %v2115 = vunpack.c.h.b16 %v1575
        %v2116 = vunpack.c.l.b16 %v1576
        %v2117 = vunpack.c.h.b16 %v1576
        %v2118 = vunpack.c.l.b16 %v1577
        %v2119 = vunpack.c.h.b16 %v1577
        %v2120 = vunpack.c.l.b16 %v1578
        %v2121 = vunpack.c.h.b16 %v1578
        %v2122 = vunpack.c.l.b16 %v1579
        %v2123 = vunpack.c.h.b16 %v1579
        %v2124 = vunpack.c.l.b16 %v1580
        %v2125 = vunpack.c.h.b16 %v1580
        %v2126 = vunpack.c.l.b16 %v1581
        %v2127 = vunpack.c.h.b16 %v1581
        %v2128 = vunpack.c.l.b16 %v1582
        %v2129 = vunpack.c.h.b16 %v1582
        %v2130 = vunpack.c.l.b16 %v1583
        %v2131 = vunpack.c.h.b16 %v1583
        %v2132 = vunpack.c.l.b16 %v1584
        %v2133 = vunpack.c.h.b16 %v1584
        %v2134 = vunpack.c.l.b16 %v1585
        %v2135 = vunpack.c.h.b16 %v1585
        %v2136 = vunpack.c.l.b16 %v1586
        %v2137 = vunpack.c.h.b16 %v1586
        %v2138 = vunpack.c.l.b16 %v1587
        %v2139 = vunpack.c.h.b16 %v1587
        %v2140 = vunpack.c.l.b16 %v1588
        %v2141 = vunpack.c.h.b16 %v1588
        %v2142 = vunpack.c.l.b16 %v1589
        %v2143 = vunpack.c.h.b16 %v1589
        %v2144 = vunpack.c.l.b16 %v1590
        %v2145 = vunpack.c.h.b16 %v1590
        %v2146 = vunpack.c.l.b16 %v1591
        %v2147 = vunpack.c.h.b16 %v1591
        %v2148 = vunpack.c.l.b16 %v1592
        %v2149 = vunpack.c.h.b16 %v1592
        %v2150 = vunpack.c.l.b16 %v1593
        %v2151 = vunpack.c.h.b16 %v1593
        %v2152 = vunpack.c.l.b16 %v1594
        %v2153 = vunpack.c.h.b16 %v1594
        %v2154 = vunpack.c.l.b16 %v1595
        %v2155 = vunpack.c.h.b16 %v1595
        %v2156 = vunpack.c.l.b16 %v1596
        %v2157 = vunpack.c.h.b16 %v1596
        %v2158 = vunpack.c.l.b16 %v1597
        %v2159 = vunpack.c.h.b16 %v1597
        %v2160 = vunpack.c.l.b16 %v1598
        %v2161 = vunpack.c.h.b16 %v1598
        %v2162 = vunpack.c.l.b16 %v1599
        %v2163 = vunpack.c.h.b16 %v1599
        %v2164 = vunpack.c.l.b16 %v1600
        %v2165 = vunpack.c.h.b16 %v1600
        %v2166 = vunpack.c.l.b16 %v1601
        %v2167 = vunpack.c.h.b16 %v1601
        %v2168 = vunpack.c.l.b16 %v1602
        %v2169 = vunpack.c.h.b16 %v1602
        %v2170 = vunpack.c.l.b16 %v1603
        %v2171 = vunpack.c.h.b16 %v1603
        %v2172 = vunpack.c.l.b16 %v1604
        %v2173 = vunpack.c.h.b16 %v1604
        %v2174 = vunpack.c.l.b16 %v1605
        %v2175 = vunpack.c.h.b16 %v1605
        %v2176 = vunpack.c.l.b16 %v1606
        %v2177 = vunpack.c.h.b16 %v1606
        %v2178 = vunpack.c.l.b16 %v1607
        %v2179 = vunpack.c.h.b16 %v1607
        %v2180 = vunpack.c.l.b16 %v1608
        %v2181 = vunpack.c.h.b16 %v1608
        %v2182 = vunpack.c.l.b16 %v1609
        %v2183 = vunpack.c.h.b16 %v1609
        %v2184 = vunpack.c.l.b16 %v1610
        %v2185 = vunpack.c.h.b16 %v1610
        %v2186 = vunpack.c.l.b16 %v1611
        %v2187 = vunpack.c.h.b16 %v1611
        %v2188 = vunpack.c.l.b16 %v1612
        %v2189 = vunpack.c.h.b16 %v1612
        %v2190 = vunpack.c.l.b16 %v1613
        %v2191 = vunpack.c.h.b16 %v1613
        %v2192 = vunpack.c.l.b16 %v1614
        %v2193 = vunpack.c.h.b16 %v1614
        %v2194 = vunpack.c.l.b16 %v1615
        %v2195 = vunpack.c.h.b16 %v1615
        %v2196 = vunpack.c.l.b16 %v1616
        %v2197 = vunpack.c.h.b16 %v1616
        %v2198 = vunpack.c.l.b16 %v1617
        %v2199 = vunpack.c.h.b16 %v1617
        %v2200 = vunpack.c.l.b16 %v1618
        %v2201 = vunpack.c.h.b16 %v1618
        %v2202 = vunpack.c.l.b16 %v1619
        %v2203 = vunpack.c.h.b16 %v1619
        %v2204 = vunpack.c.l.b16 %v1620
        %v2205 = vunpack.c.h.b16 %v1620
        %v2206 = vunpack.c.l.b16 %v1621
        %v2207 = vunpack.c.h.b16 %v1621
        %v2208 = vunpack.c.l.b16 %v1622
        %v2209 = vunpack.c.h.b16 %v1622
        %v2210 = vunpack.c.l.b16 %v1623
        %v2211 = vunpack.c.h.b16 %v1623
        %v2212 = vunpack.c.l.b16 %v1624
        %v2213 = vunpack.c.h.b16 %v1624
        %v2214 = vunpack.c.l.b16 %v1625
        %v2215 = vunpack.c.h.b16 %v1625
        %v2216 = vunpack.c.l.b16 %v1626
        %v2217 = vunpack.c.h.b16 %v1626
        %v2218 = vunpack.c.l.b16 %v1627
        %v2219 = vunpack.c.h.b16 %v1627
        %v2220 = vunpack.c.l.b16 %v1628
        %v2221 = vunpack.c.h.b16 %v1628
        %v2222 = vunpack.c.l.b16 %v1629
        %v2223 = vunpack.c.h.b16 %v1629
        %v2224 = vunpack.c.l.b16 %v1630
        %v2225 = vunpack.c.h.b16 %v1630
        %v2226 = vunpack.c.l.b16 %v1631
        %v2227 = vunpack.c.h.b16 %v1631
        %v2228 = vunpack.c.l.b16 %v1632
        %v2229 = vunpack.c.h.b16 %v1632
        %v2230 = vunpack.c.l.b16 %v1633
        %v2231 = vunpack.c.h.b16 %v1633
        %v2232 = vunpack.c.l.b16 %v1634
        %v2233 = vunpack.c.h.b16 %v1634
        %v2234 = vunpack.c.l.b16 %v1635
        %v2235 = vunpack.c.h.b16 %v1635
        %v2236 = vunpack.c.l.b16 %v1636
        %v2237 = vunpack.c.h.b16 %v1636
        %v2238 = vunpack.c.l.b16 %v1637
        %v2239 = vunpack.c.h.b16 %v1637
        %v2240 = vunpack.c.l.b16 %v1638
        %v2241 = vunpack.c.h.b16 %v1638
        %v2242 = vunpack.c.l.b16 %v1639
        %v2243 = vunpack.c.h.b16 %v1639
        %v2244 = vunpack.c.l.b16 %v1640
        %v2245 = vunpack.c.h.b16 %v1640
        %v2246 = vunpack.c.l.b16 %v1641
        %v2247 = vunpack.c.h.b16 %v1641
        %v2248 = vunpack.c.l.b16 %v1642
        %v2249 = vunpack.c.h.b16 %v1642
        %v2250 = vunpack.c.l.b16 %v1643
        %v2251 = vunpack.c.h.b16 %v1643
        %v2252 = vunpack.c.l.b16 %v1644
        %v2253 = vunpack.c.h.b16 %v1644
        %v2254 = vunpack.c.l.b16 %v1645
        %v2255 = vunpack.c.h.b16 %v1645
        %v2256 = vunpack.c.l.b16 %v1646
        %v2257 = vunpack.c.h.b16 %v1646
        %v2258 = vunpack.c.l.b16 %v1647
        %v2259 = vunpack.c.h.b16 %v1647
        %v2260 = vunpack.c.l.b16 %v1648
        %v2261 = vunpack.c.h.b16 %v1648
        %v2262 = vunpack.c.l.b16 %v1649
        %v2263 = vunpack.c.h.b16 %v1649
        %v2264 = vunpack.c.l.b16 %v1650
        %v2265 = vunpack.c.h.b16 %v1650
        %v2266 = vunpack.c.l.b16 %v1651
        %v2267 = vunpack.c.h.b16 %v1651
        %v2268 = vunpack.c.l.b16 %v1652
        %v2269 = vunpack.c.h.b16 %v1652
        %v2270 = vunpack.c.l.b16 %v1653
        %v2271 = vunpack.c.h.b16 %v1653
        %v2272 = vunpack.c.l.b16 %v1654
        %v2273 = vunpack.c.h.b16 %v1654
        %v2274 = vunpack.c.l.b16 %v1655
        %v2275 = vunpack.c.h.b16 %v1655
        %v2276 = vunpack.c.l.b16 %v1656
        %v2277 = vunpack.c.h.b16 %v1656
        %v2278 = vunpack.c.l.b16 %v1657
        %v2279 = vunpack.c.h.b16 %v1657
        %v2280 = vunpack.c.l.b16 %v1658
        %v2281 = vunpack.c.h.b16 %v1658
        %v2282 = vunpack.c.l.b16 %v1659
        %v2283 = vunpack.c.h.b16 %v1659
        %v2284 = vunpack.c.l.b16 %v1660
        %v2285 = vunpack.c.h.b16 %v1660
        %v2286 = vunpack.c.l.b16 %v1661
        %v2287 = vunpack.c.h.b16 %v1661
        %v2288 = vunpack.c.l.b16 %v1662
        %v2289 = vunpack.c.h.b16 %v1662
        %v2290 = vunpack.c.l.b16 %v1663
        %v2291 = vunpack.c.h.b16 %v1663
        %v2292 = vunpack.c.l.b16 %v1664
        %v2293 = vunpack.c.h.b16 %v1664
        %v2294 = vunpack.c.l.b16 %v1665
        %v2295 = vunpack.c.h.b16 %v1665
        %v2296 = vunpack.c.l.b16 %v1666
        %v2297 = vunpack.c.h.b16 %v1666
        %v2298 = vunpack.c.l.b16 %v1667
        %v2299 = vunpack.c.h.b16 %v1667
        %v2300 = vunpack.c.l.b16 %v1668
        %v2301 = vunpack.c.h.b16 %v1668
        %v2302 = vunpack.c.l.b16 %v1669
        %v2303 = vunpack.c.h.b16 %v1669
        %v2304 = vunpack.c.l.b16 %v1670
        %v2305 = vunpack.c.h.b16 %v1670
        %v2306 = vunpack.c.l.b16 %v1671
        %v2307 = vunpack.c.h.b16 %v1671
        %v2308 = vunpack.c.l.b16 %v1672
        %v2309 = vunpack.c.h.b16 %v1672
        %v2310 = vunpack.c.l.b16 %v1673
        %v2311 = vunpack.c.h.b16 %v1673
        %v2312 = vunpack.c.l.b16 %v1674
        %v2313 = vunpack.c.h.b16 %v1674
        %v2314 = vunpack.c.l.b16 %v1675
        %v2315 = vunpack.c.h.b16 %v1675
        %v2316 = vunpack.c.l.b16 %v1676
        %v2317 = vunpack.c.h.b16 %v1676
        %v2318 = vunpack.c.l.b16 %v1677
        %v2319 = vunpack.c.h.b16 %v1677
        %v2320 = vunpack.c.l.b16 %v1678
        %v2321 = vunpack.c.h.b16 %v1678
        %v2322 = vunpack.c.l.b16 %v1679
        %v2323 = vunpack.c.h.b16 %v1679
        %v2324 = vunpack.c.l.b16 %v1680
        %v2325 = vunpack.c.h.b16 %v1680
        %v2326 = vunpack.c.l.b16 %v1681
        %v2327 = vunpack.c.h.b16 %v1681
        %v2328 = vunpack.c.l.b16 %v1682
        %v2329 = vunpack.c.h.b16 %v1682
        %v2330 = vunpack.c.l.b16 %v1683
        %v2331 = vunpack.c.h.b16 %v1683
        %v2332 = vunpack.c.l.b16 %v1684
        %v2333 = vunpack.c.h.b16 %v1684
        %v2334 = vunpack.c.l.b16 %v1685
        %v2335 = vunpack.c.h.b16 %v1685
        %v2336 = vunpack.c.l.b16 %v1686
        %v2337 = vunpack.c.h.b16 %v1686
        %v2338 = vunpack.c.l.b16 %v1687
        %v2339 = vunpack.c.h.b16 %v1687
        %v2340 = vunpack.c.l.b16 %v1688
        %v2341 = vunpack.c.h.b16 %v1688
        %v2342 = vunpack.c.l.b16 %v1689
        %v2343 = vunpack.c.h.b16 %v1689
        %v2344 = vunpack.c.l.b16 %v1690
        %v2345 = vunpack.c.h.b16 %v1690
        %v2346 = vunpack.c.l.b16 %v1691
        %v2347 = vunpack.c.h.b16 %v1691
        %v2348 = vunpack.c.l.b16 %v1692
        %v2349 = vunpack.c.h.b16 %v1692
        %v2350 = vunpack.c.l.b16 %v1693
        %v2351 = vunpack.c.h.b16 %v1693
        %v2352 = vunpack.c.l.b16 %v1694
        %v2353 = vunpack.c.h.b16 %v1694
        %v2354 = vunpack.c.l.b16 %v1695
        %v2355 = vunpack.c.h.b16 %v1695
        %v2356 = vunpack.c.l.b16 %v1696
        %v2357 = vunpack.c.h.b16 %v1696
        %v2358 = vunpack.c.l.b16 %v1697
        %v2359 = vunpack.c.h.b16 %v1697
        %v2360 = vunpack.c.l.b16 %v1698
        %v2361 = vunpack.c.h.b16 %v1698
        %v2362 = vunpack.c.l.b16 %v1699
        %v2363 = vunpack.c.h.b16 %v1699
        %v2364 = vunpack.c.l.b16 %v1700
        %v2365 = vunpack.c.h.b16 %v1700
        %v2366 = vunpack.c.l.b16 %v1701
        %v2367 = vunpack.c.h.b16 %v1701
        %v2368 = vunpack.c.l.b16 %v1702
        %v2369 = vunpack.c.h.b16 %v1702
        %v2370 = vunpack.c.l.b16 %v1703
        %v2371 = vunpack.c.h.b16 %v1703
        %v2372 = vunpack.c.l.b16 %v1704
        %v2373 = vunpack.c.h.b16 %v1704
        %v2374 = vunpack.c.l.b16 %v1705
        %v2375 = vunpack.c.h.b16 %v1705
        %v2376 = vunpack.c.l.b16 %v1706
        %v2377 = vunpack.c.h.b16 %v1706
        %v2378 = vunpack.c.l.b16 %v1707
        %v2379 = vunpack.c.h.b16 %v1707
        %v2380 = vunpack.c.l.b16 %v1708
        %v2381 = vunpack.c.h.b16 %v1708
        %v2382 = vunpack.c.l.b16 %v1709
        %v2383 = vunpack.c.h.b16 %v1709
        %v2384 = vunpack.c.l.b16 %v1710
        %v2385 = vunpack.c.h.b16 %v1710
        %v2386 = vunpack.c.l.b16 %v1711
        %v2387 = vunpack.c.h.b16 %v1711
        %v2388 = vunpack.c.l.b16 %v1712
        %v2389 = vunpack.c.h.b16 %v1712
        %v2390 = vunpack.c.l.b16 %v1713
        %v2391 = vunpack.c.h.b16 %v1713
        %v2392 = vunpack.c.l.b16 %v1714
        %v2393 = vunpack.c.h.b16 %v1714
        %v2394 = vunpack.c.l.b16 %v1715
        %v2395 = vunpack.c.h.b16 %v1715
        %v2396 = vunpack.c.l.b16 %v1716
        %v2397 = vunpack.c.h.b16 %v1716
        %v2398 = vunpack.c.l.b16 %v1717
        %v2399 = vunpack.c.h.b16 %v1717
        %v2400 = vunpack.c.l.b16 %v1718
        %v2401 = vunpack.c.h.b16 %v1718
        %v2402 = vunpack.c.l.b16 %v1719
        %v2403 = vunpack.c.h.b16 %v1719
        %v2404 = vunpack.c.l.b16 %v1720
        %v2405 = vunpack.c.h.b16 %v1720
        %v2406 = vunpack.c.l.b16 %v1721
        %v2407 = vunpack.c.h.b16 %v1721
        %v2408 = vunpack.c.l.b16 %v1722
        %v2409 = vunpack.c.h.b16 %v1722
        %v2410 = vunpack.c.l.b16 %v1723
        %v2411 = vunpack.c.h.b16 %v1723
        %v2412 = vunpack.c.l.b16 %v1724
        %v2413 = vunpack.c.h.b16 %v1724
        %v2414 = vunpack.c.l.b16 %v1725
        %v2415 = vunpack.c.h.b16 %v1725
        %v2416 = vunpack.c.l.b16 %v1726
        %v2417 = vunpack.c.h.b16 %v1726
        %v2418 = vunpack.c.l.b16 %v1727
        %v2419 = vunpack.c.h.b16 %v1727
        %v2420 = vunpack.c.l.b16 %v1728
        %v2421 = vunpack.c.h.b16 %v1728
        %v2422 = vunpack.c.l.b16 %v1729
        %v2423 = vunpack.c.h.b16 %v1729
        %v2424 = vunpack.c.l.b16 %v1730
        %v2425 = vunpack.c.h.b16 %v1730
        %v2426 = vunpack.c.l.b16 %v1731
        %v2427 = vunpack.c.h.b16 %v1731
        %v2428 = vunpack.c.l.b16 %v1732
        %v2429 = vunpack.c.h.b16 %v1732
        %v2430 = vunpack.c.l.b16 %v1733
        %v2431 = vunpack.c.h.b16 %v1733
        %v2432 = vunpack.c.l.b16 %v1734
        %v2433 = vunpack.c.h.b16 %v1734
        %v2434 = vunpack.c.l.b16 %v1735
        %v2435 = vunpack.c.h.b16 %v1735
        %v2436 = vunpack.c.l.b16 %v1736
        %v2437 = vunpack.c.h.b16 %v1736
        %v2438 = vunpack.c.l.b16 %v1737
        %v2439 = vunpack.c.h.b16 %v1737
        %v2440 = vunpack.c.l.b16 %v1738
        %v2441 = vunpack.c.h.b16 %v1738
        %v2442 = vunpack.c.l.b16 %v1739
        %v2443 = vunpack.c.h.b16 %v1739
        %v2444 = vunpack.c.l.b16 %v1740
        %v2445 = vunpack.c.h.b16 %v1740
        %v2446 = vunpack.c.l.b16 %v1741
        %v2447 = vunpack.c.h.b16 %v1741
        %v2448 = vunpack.c.l.b16 %v1742
        %v2449 = vunpack.c.h.b16 %v1742
        %v2450 = vunpack.c.l.b16 %v1743
        %v2451 = vunpack.c.h.b16 %v1743
        %v2452 = vunpack.c.l.b16 %v1744
        %v2453 = vunpack.c.h.b16 %v1744
        %v2454 = vunpack.c.l.b16 %v1745
        %v2455 = vunpack.c.h.b16 %v1745
        %v2456 = vunpack.c.l.b16 %v1746
        %v2457 = vunpack.c.h.b16 %v1746
        %v2458 = vunpack.c.l.b16 %v1747
        %v2459 = vunpack.c.h.b16 %v1747
        %v2460 = vunpack.c.l.b16 %v1748
        %v2461 = vunpack.c.h.b16 %v1748
        %v2462 = vunpack.c.l.b16 %v1749
        %v2463 = vunpack.c.h.b16 %v1749
        %v2464 = vunpack.c.l.b16 %v1750
        %v2465 = vunpack.c.h.b16 %v1750
        %v2466 = vunpack.c.l.b16 %v1751
        %v2467 = vunpack.c.h.b16 %v1751
        %v2468 = vunpack.c.l.b16 %v1752
        %v2469 = vunpack.c.h.b16 %v1752
        %v2470 = vunpack.c.l.b16 %v1753
        %v2471 = vunpack.c.h.b16 %v1753
        %v2472 = vunpack.c.l.b16 %v1754
        %v2473 = vunpack.c.h.b16 %v1754
        %v2474 = vunpack.c.l.b16 %v1755
        %v2475 = vunpack.c.h.b16 %v1755
        %v2476 = vunpack.c.l.b16 %v1756
        %v2477 = vunpack.c.h.b16 %v1756
        %v2478 = vunpack.c.l.b16 %v1757
        %v2479 = vunpack.c.h.b16 %v1757
        %v2480 = vunpack.c.l.b16 %v1758
        %v2481 = vunpack.c.h.b16 %v1758
        %v2482 = vunpack.c.l.b16 %v1759
        %v2483 = vunpack.c.h.b16 %v1759
        %v2484 = vunpack.c.l.b16 %v1760
        %v2485 = vunpack.c.h.b16 %v1760
        %v2486 = vunpack.c.l.b16 %v1761
        %v2487 = vunpack.c.h.b16 %v1761
        %v2488 = vunpack.c.l.b16 %v1762
        %v2489 = vunpack.c.h.b16 %v1762
        %v2490 = vunpack.c.l.b16 %v1763
        %v2491 = vunpack.c.h.b16 %v1763
        %v2492 = vunpack.c.l.b16 %v1764
        %v2493 = vunpack.c.h.b16 %v1764
        %v2494 = vunpack.c.l.b16 %v1765
        %v2495 = vunpack.c.h.b16 %v1765
        %v2496 = vunpack.c.l.b16 %v1766
        %v2497 = vunpack.c.h.b16 %v1766
        %v2498 = vunpack.c.l.b16 %v1767
        %v2499 = vunpack.c.h.b16 %v1767
        %v2500 = vunpack.c.l.b16 %v1768
        %v2501 = vunpack.c.h.b16 %v1768
        %v2502 = vunpack.c.l.b16 %v1769
        %v2503 = vunpack.c.h.b16 %v1769
        %v2504 = vunpack.c.l.b16 %v1770
        %v2505 = vunpack.c.h.b16 %v1770
        %v2506 = vunpack.c.l.b16 %v1771
        %v2507 = vunpack.c.h.b16 %v1771
        %v2508 = vunpack.c.l.b16 %v1772
        %v2509 = vunpack.c.h.b16 %v1772
        %v2510 = vunpack.c.l.b16 %v1773
        %v2511 = vunpack.c.h.b16 %v1773
        %v2512 = vunpack.c.l.b16 %v1774
        %v2513 = vunpack.c.h.b16 %v1774
        %v2514 = vunpack.c.l.b16 %v1775
        %v2515 = vunpack.c.h.b16 %v1775
        %v2516 = vunpack.c.l.b16 %v1776
        %v2517 = vunpack.c.h.b16 %v1776
        %v2518 = vunpack.c.l.b16 %v1777
        %v2519 = vunpack.c.h.b16 %v1777
        %v2520 = vunpack.c.l.b16 %v1778
        %v2521 = vunpack.c.h.b16 %v1778
        %v2522 = vunpack.c.l.b16 %v1779
        %v2523 = vunpack.c.h.b16 %v1779
        %v2524 = vunpack.c.l.b16 %v1780
        %v2525 = vunpack.c.h.b16 %v1780
        %v2526 = vunpack.c.l.b16 %v1781
        %v2527 = vunpack.c.h.b16 %v1781
        %v2528 = vunpack.c.l.b16 %v1782
        %v2529 = vunpack.c.h.b16 %v1782
        %v2530 = vunpack.c.l.b16 %v1783
        %v2531 = vunpack.c.h.b16 %v1783
        %v2532 = vunpack.c.l.b16 %v1784
        %v2533 = vunpack.c.h.b16 %v1784
        %v2534 = vunpack.c.l.b16 %v1785
        %v2535 = vunpack.c.h.b16 %v1785
        %v2536 = vunpack.c.l.b16 %v1786
        %v2537 = vunpack.c.h.b16 %v1786
        %v2538 = vunpack.c.l.b16 %v1787
        %v2539 = vunpack.c.h.b16 %v1787
        %v2540 = vunpack.c.l.b16 %v1788
        %v2541 = vunpack.c.h.b16 %v1788
        %v2542 = vunpack.c.l.b16 %v1789
        %v2543 = vunpack.c.h.b16 %v1789
        %v2544 = vunpack.c.l.b16 %v1790
        %v2545 = vunpack.c.h.b16 %v1790
        %v2546 = vunpack.c.l.b16 %v1791
        %v2547 = vunpack.c.h.b16 %v1791
        %v2548 = vunpack.c.l.b16 %v1792
        %v2549 = vunpack.c.h.b16 %v1792
        %v2550 = vunpack.c.l.b16 %v1793
        %v2551 = vunpack.c.h.b16 %v1793
        %v2552 = vunpack.c.l.b16 %v1794
        %v2553 = vunpack.c.h.b16 %v1794
        %v2554 = vunpack.c.l.b16 %v1795
        %v2555 = vunpack.c.h.b16 %v1795
        %v2556 = vunpack.c.l.b16 %v1796
        %v2557 = vunpack.c.h.b16 %v1796
        %v2558 = vunpack.c.l.b16 %v1797
        %v2559 = vunpack.c.h.b16 %v1797
        %v2560 = vunpack.c.l.b16 %v1798
        %v2561 = vunpack.c.h.b16 %v1798
        %v2562 = vunpack.c.l.b16 %v1799
        %v2563 = vunpack.c.h.b16 %v1799
        %v2564 = vunpack.c.l.b16 %v1800
        %v2565 = vunpack.c.h.b16 %v1800
        %v2566 = vunpack.c.l.b16 %v1801
        %v2567 = vunpack.c.h.b16 %v1801
        %v2568 = vunpack.c.l.b16 %v1802
        %v2569 = vunpack.c.h.b16 %v1802
        %v2570 = vunpack.c.l.b16 %v1803
        %v2571 = vunpack.c.h.b16 %v1803
        %v2572 = vpack.c.b16 %v2068, %v2060
        %v2573 = vpack.c.b16 %v2069, %v2061
        %v2574 = vpack.c.b16 %v2070, %v2062
        %v2575 = vpack.c.b16 %v2071, %v2063
        %v2576 = vpack.c.b16 %v2072, %v2064
        %v2577 = vpack.c.b16 %v2073, %v2065
        %v2578 = vpack.c.b16 %v2074, %v2066
        %v2579 = vpack.c.b16 %v2075, %v2067
        %v2580 = vpack.c.b16 %v2084, %v2076
        %v2581 = vpack.c.b16 %v2085, %v2077
        %v2582 = vpack.c.b16 %v2086, %v2078
        %v2583 = vpack.c.b16 %v2087, %v2079
        %v2584 = vpack.c.b16 %v2088, %v2080
        %v2585 = vpack.c.b16 %v2089, %v2081
        %v2586 = vpack.c.b16 %v2090, %v2082
        %v2587 = vpack.c.b16 %v2091, %v2083
        %v2588 = vpack.c.b16 %v2100, %v2092
        %v2589 = vpack.c.b16 %v2101, %v2093
        %v2590 = vpack.c.b16 %v2102, %v2094
        %v2591 = vpack.c.b16 %v2103, %v2095
        %v2592 = vpack.c.b16 %v2104, %v2096
        %v2593 = vpack.c.b16 %v2105, %v2097
        %v2594 = vpack.c.b16 %v2106, %v2098
        %v2595 = vpack.c.b16 %v2107, %v2099
        %v2596 = vpack.c.b16 %v2116, %v2108
        %v2597 = vpack.c.b16 %v2117, %v2109
        %v2598 = vpack.c.b16 %v2118, %v2110
        %v2599 = vpack.c.b16 %v2119, %v2111
        %v2600 = vpack.c.b16 %v2120, %v2112
        %v2601 = vpack.c.b16 %v2121, %v2113
        %v2602 = vpack.c.b16 %v2122, %v2114
        %v2603 = vpack.c.b16 %v2123, %v2115
        %v2604 = vpack.c.b16 %v2132, %v2124
        %v2605 = vpack.c.b16 %v2133, %v2125
        %v2606 = vpack.c.b16 %v2134, %v2126
        %v2607 = vpack.c.b16 %v2135, %v2127
        %v2608 = vpack.c.b16 %v2136, %v2128
        %v2609 = vpack.c.b16 %v2137, %v2129
        %v2610 = vpack.c.b16 %v2138, %v2130
        %v2611 = vpack.c.b16 %v2139, %v2131
        %v2612 = vpack.c.b16 %v2148, %v2140
        %v2613 = vpack.c.b16 %v2149, %v2141
        %v2614 = vpack.c.b16 %v2150, %v2142
        %v2615 = vpack.c.b16 %v2151, %v2143
        %v2616 = vpack.c.b16 %v2152, %v2144
        %v2617 = vpack.c.b16 %v2153, %v2145
        %v2618 = vpack.c.b16 %v2154, %v2146
        %v2619 = vpack.c.b16 %v2155, %v2147
        %v2620 = vpack.c.b16 %v2164, %v2156
        %v2621 = vpack.c.b16 %v2165, %v2157
        %v2622 = vpack.c.b16 %v2166, %v2158
        %v2623 = vpack.c.b16 %v2167, %v2159
        %v2624 = vpack.c.b16 %v2168, %v2160
        %v2625 = vpack.c.b16 %v2169, %v2161
        %v2626 = vpack.c.b16 %v2170, %v2162
        %v2627 = vpack.c.b16 %v2171, %v2163
        %v2628 = vpack.c.b16 %v2180, %v2172
        %v2629 = vpack.c.b16 %v2181, %v2173
        %v2630 = vpack.c.b16 %v2182, %v2174
        %v2631 = vpack.c.b16 %v2183, %v2175
        %v2632 = vpack.c.b16 %v2184, %v2176
        %v2633 = vpack.c.b16 %v2185, %v2177
        %v2634 = vpack.c.b16 %v2186, %v2178
        %v2635 = vpack.c.b16 %v2187, %v2179
        %v2636 = vpack.c.b16 %v2196, %v2188
        %v2637 = vpack.c.b16 %v2197, %v2189
        %v2638 = vpack.c.b16 %v2198, %v2190
        %v2639 = vpack.c.b16 %v2199, %v2191
        %v2640 = vpack.c.b16 %v2200, %v2192
        %v2641 = vpack.c.b16 %v2201, %v2193
        %v2642 = vpack.c.b16 %v2202, %v2194
        %v2643 = vpack.c.b16 %v2203, %v2195
        %v2644 = vpack.c.b16 %v2212, %v2204
        %v2645 = vpack.c.b16 %v2213, %v2205
        %v2646 = vpack.c.b16 %v2214, %v2206
        %v2647 = vpack.c.b16 %v2215, %v2207
        %v2648 = vpack.c.b16 %v2216, %v2208
        %v2649 = vpack.c.b16 %v2217, %v2209
        %v2650 = vpack.c.b16 %v2218, %v2210
        %v2651 = vpack.c.b16 %v2219, %v2211
        %v2652 = vpack.c.b16 %v2228, %v2220
        %v2653 = vpack.c.b16 %v2229, %v2221
        %v2654 = vpack.c.b16 %v2230, %v2222
        %v2655 = vpack.c.b16 %v2231, %v2223
        %v2656 = vpack.c.b16 %v2232, %v2224
        %v2657 = vpack.c.b16 %v2233, %v2225
        %v2658 = vpack.c.b16 %v2234, %v2226
        %v2659 = vpack.c.b16 %v2235, %v2227
        %v2660 = vpack.c.b16 %v2244, %v2236
        %v2661 = vpack.c.b16 %v2245, %v2237
        %v2662 = vpack.c.b16 %v2246, %v2238
        %v2663 = vpack.c.b16 %v2247, %v2239
        %v2664 = vpack.c.b16 %v2248, %v2240
        %v2665 = vpack.c.b16 %v2249, %v2241
        %v2666 = vpack.c.b16 %v2250, %v2242
        %v2667 = vpack.c.b16 %v2251, %v2243
        %v2668 = vpack.c.b16 %v2260, %v2252
        %v2669 = vpack.c.b16 %v2261, %v2253
        %v2670 = vpack.c.b16 %v2262, %v2254
        %v2671 = vpack.c.b16 %v2263, %v2255
        %v2672 = vpack.c.b16 %v2264, %v2256
        %v2673 = vpack.c.b16 %v2265, %v2257
        %v2674 = vpack.c.b16 %v2266, %v2258
        %v2675 = vpack.c.b16 %v2267, %v2259
        %v2676 = vpack.c.b16 %v2276, %v2268
        %v2677 = vpack.c.b16 %v2277, %v2269
        %v2678 = vpack.c.b16 %v2278, %v2270
        %v2679 = vpack.c.b16 %v2279, %v2271
        %v2680 = vpack.c.b16 %v2280, %v2272
        %v2681 = vpack.c.b16 %v2281, %v2273
        %v2682 = vpack.c.b16 %v2282, %v2274
        %v2683 = vpack.c.b16 %v2283, %v2275
        %v2684 = vpack.c.b16 %v2292, %v2284
        %v2685 = vpack.c.b16 %v2293, %v2285
        %v2686 = vpack.c.b16 %v2294, %v2286
        %v2687 = vpack.c.b16 %v2295, %v2287
        %v2688 = vpack.c.b16 %v2296, %v2288
        %v2689 = vpack.c.b16 %v2297, %v2289
        %v2690 = vpack.c.b16 %v2298, %v2290
        %v2691 = vpack.c.b16 %v2299, %v2291
        %v2692 = vpack.c.b16 %v2308, %v2300
        %v2693 = vpack.c.b16 %v2309, %v2301
        %v2694 = vpack.c.b16 %v2310, %v2302
        %v2695 = vpack.c.b16 %v2311, %v2303
        %v2696 = vpack.c.b16 %v2312, %v2304
        %v2697 = vpack.c.b16 %v2313, %v2305
        %v2698 = vpack.c.b16 %v2314, %v2306
        %v2699 = vpack.c.b16 %v2315, %v2307
        %v2700 = vpack.c.b16 %v2324, %v2316
        %v2701 = vpack.c.b16 %v2325, %v2317
        %v2702 = vpack.c.b16 %v2326, %v2318
        %v2703 = vpack.c.b16 %v2327, %v2319
        %v2704 = vpack.c.b16 %v2328, %v2320
        %v2705 = vpack.c.b16 %v2329, %v2321
        %v2706 = vpack.c.b16 %v2330, %v2322
        %v2707 = vpack.c.b16 %v2331, %v2323
        %v2708 = vpack.c.b16 %v2340, %v2332
        %v2709 = vpack.c.b16 %v2341, %v2333
        %v2710 = vpack.c.b16 %v2342, %v2334
        %v2711 = vpack.c.b16 %v2343, %v2335
        %v2712 = vpack.c.b16 %v2344, %v2336
        %v2713 = vpack.c.b16 %v2345, %v2337
        %v2714 = vpack.c.b16 %v2346, %v2338
        %v2715 = vpack.c.b16 %v2347, %v2339
        %v2716 = vpack.c.b16 %v2356, %v2348
        %v2717 = vpack.c.b16 %v2357, %v2349
        %v2718 = vpack.c.b16 %v2358, %v2350
        %v2719 = vpack.c.b16 %v2359, %v2351
        %v2720 = vpack.c.b16 %v2360, %v2352
        %v2721 = vpack.c.b16 %v2361, %v2353
        %v2722 = vpack.c.b16 %v2362, %v2354
        %v2723 = vpack.c.b16 %v2363, %v2355
        %v2724 = vpack.c.b16 %v2372, %v2364
        %v2725 = vpack.c.b16 %v2373, %v2365
        %v2726 = vpack.c.b16 %v2374, %v2366
        %v2727 = vpack.c.b16 %v2375, %v2367
        %v2728 = vpack.c.b16 %v2376, %v2368
        %v2729 = vpack.c.b16 %v2377, %v2369
        %v2730 = vpack.c.b16 %v2378, %v2370
        %v2731 = vpack.c.b16 %v2379, %v2371
        %v2732 = vpack.c.b16 %v2388, %v2380
        %v2733 = vpack.c.b16 %v2389, %v2381
        %v2734 = vpack.c.b16 %v2390, %v2382
        %v2735 = vpack.c.b16 %v2391, %v2383
        %v2736 = vpack.c.b16 %v2392, %v2384
        %v2737 = vpack.c.b16 %v2393, %v2385
        %v2738 = vpack.c.b16 %v2394, %v2386
        %v2739 = vpack.c.b16 %v2395, %v2387
        %v2740 = vpack.c.b16 %v2404, %v2396
        %v2741 = vpack.c.b16 %v2405, %v2397
        %v2742 = vpack.c.b16 %v2406, %v2398
        %v2743 = vpack.c.b16 %v2407, %v2399
        %v2744 = vpack.c.b16 %v2408, %v2400
        %v2745 = vpack.c.b16 %v2409, %v2401
        %v2746 = vpack.c.b16 %v2410, %v2402
        %v2747 = vpack.c.b16 %v2411, %v2403
        %v2748 = vpack.c.b16 %v2420, %v2412
        %v2749 = vpack.c.b16 %v2421, %v2413
        %v2750 = vpack.c.b16 %v2422, %v2414
        %v2751 = vpack.c.b16 %v2423, %v2415
        %v2752 = vpack.c.b16 %v2424, %v2416
        %v2753 = vpack.c.b16 %v2425, %v2417
        %v2754 = vpack.c.b16 %v2426, %v2418
        %v2755 = vpack.c.b16 %v2427, %v2419
        %v2756 = vpack.c.b16 %v2436, %v2428
        %v2757 = vpack.c.b16 %v2437, %v2429
        %v2758 = vpack.c.b16 %v2438, %v2430
        %v2759 = vpack.c.b16 %v2439, %v2431
        %v2760 = vpack.c.b16 %v2440, %v2432
        %v2761 = vpack.c.b16 %v2441, %v2433
        %v2762 = vpack.c.b16 %v2442, %v2434
        %v2763 = vpack.c.b16 %v2443, %v2435
        %v2764 = vpack.c.b16 %v2452, %v2444
        %v2765 = vpack.c.b16 %v2453, %v2445
        %v2766 = vpack.c.b16 %v2454, %v2446
        %v2767 = vpack.c.b16 %v2455, %v2447
        %v2768 = vpack.c.b16 %v2456, %v2448
        %v2769 = vpack.c.b16 %v2457, %v2449
        %v2770 = vpack.c.b16 %v2458, %v2450
        %v2771 = vpack.c.b16 %v2459, %v2451
        %v2772 = vpack.c.b16 %v2468, %v2460
        %v2773 = vpack.c.b16 %v2469, %v2461
        %v2774 = vpack.c.b16 %v2470, %v2462
        %v2775 = vpack.c.b16 %v2471, %v2463
        %v2776 = vpack.c.b16 %v2472, %v2464
        %v2777 = vpack.c.b16 %v2473, %v2465
        %v2778 = vpack.c.b16 %v2474, %v2466
        %v2779 = vpack.c.b16 %v2475, %v2467
        %v2780 = vpack.c.b16 %v2484, %v2476
        %v2781 = vpack.c.b16 %v2485, %v2477
        %v2782 = vpack.c.b16 %v2486, %v2478
        %v2783 = vpack.c.b16 %v2487, %v2479
        %v2784 = vpack.c.b16 %v2488, %v2480
        %v2785 = vpack.c.b16 %v2489, %v2481
        %v2786 = vpack.c.b16 %v2490, %v2482
        %v2787 = vpack.c.b16 %v2491, %v2483
        %v2788 = vpack.c.b16 %v2500, %v2492
        %v2789 = vpack.c.b16 %v2501, %v2493
        %v2790 = vpack.c.b16 %v2502, %v2494
        %v2791 = vpack.c.b16 %v2503, %v2495
        %v2792 = vpack.c.b16 %v2504, %v2496
        %v2793 = vpack.c.b16 %v2505, %v2497
        %v2794 = vpack.c.b16 %v2506, %v2498
        %v2795 = vpack.c.b16 %v2507, %v2499
        %v2796 = vpack.c.b16 %v2516, %v2508
        %v2797 = vpack.c.b16 %v2517, %v2509
        %v2798 = vpack.c.b16 %v2518, %v2510
        %v2799 = vpack.c.b16 %v2519, %v2511
        %v2800 = vpack.c.b16 %v2520, %v2512
        %v2801 = vpack.c.b16 %v2521, %v2513
        %v2802 = vpack.c.b16 %v2522, %v2514
        %v2803 = vpack.c.b16 %v2523, %v2515
        %v2804 = vpack.c.b16 %v2532, %v2524
        %v2805 = vpack.c.b16 %v2533, %v2525
        %v2806 = vpack.c.b16 %v2534, %v2526
        %v2807 = vpack.c.b16 %v2535, %v2527
        %v2808 = vpack.c.b16 %v2536, %v2528
        %v2809 = vpack.c.b16 %v2537, %v2529
        %v2810 = vpack.c.b16 %v2538, %v2530
        %v2811 = vpack.c.b16 %v2539, %v2531
        %v2812 = vpack.c.b16 %v2548, %v2540
        %v2813 = vpack.c.b16 %v2549, %v2541
        %v2814 = vpack.c.b16 %v2550, %v2542
        %v2815 = vpack.c.b16 %v2551, %v2543
        %v2816 = vpack.c.b16 %v2552, %v2544
        %v2817 = vpack.c.b16 %v2553, %v2545
        %v2818 = vpack.c.b16 %v2554, %v2546
        %v2819 = vpack.c.b16 %v2555, %v2547
        %v2820 = vpack.c.b16 %v2564, %v2556
        %v2821 = vpack.c.b16 %v2565, %v2557
        %v2822 = vpack.c.b16 %v2566, %v2558
        %v2823 = vpack.c.b16 %v2567, %v2559
        %v2824 = vpack.c.b16 %v2568, %v2560
        %v2825 = vpack.c.b16 %v2569, %v2561
        %v2826 = vpack.c.b16 %v2570, %v2562
        %v2827 = vpack.c.b16 %v2571, %v2563
        %3084 = vmatprep.subr.bf16.mxu0 %v2573
        %3085 = vmatpush1.bf16.msra.mxu0 %v2572
        %3086 = vmatprep.subr.bf16.mxu0 %v2581
        %3087 = vmatpush1.bf16.msra.mxu0 %v2580
        %3088 = vmatprep.subr.bf16.mxu0 %v2589
        %3089 = vmatpush1.bf16.msra.mxu0 %v2588
        %3090 = vmatprep.subr.bf16.mxu0 %v2597
        %3091 = vmatpush1.bf16.msra.mxu0 %v2596
        %3092 = vmatprep.subr.bf16.mxu0 %v2605
        %3093 = vmatpush1.bf16.msra.mxu0 %v2604
        %3094 = vmatprep.subr.bf16.mxu0 %v2613
        %3095 = vmatpush1.bf16.msra.mxu0 %v2612
        %3096 = vmatprep.subr.bf16.mxu0 %v2621
        %3097 = vmatpush1.bf16.msra.mxu0 %v2620
        %3098 = vmatprep.subr.bf16.mxu0 %v2629
        %3099 = vmatpush1.bf16.msra.mxu0 %v2628
        %3100 = vmatprep.subr.bf16.mxu0 %v2637
        %3101 = vmatpush1.bf16.msra.mxu0 %v2636
        %3102 = vmatprep.subr.bf16.mxu0 %v2645
        %3103 = vmatpush1.bf16.msra.mxu0 %v2644
        %3104 = vmatprep.subr.bf16.mxu0 %v2653
        %3105 = vmatpush1.bf16.msra.mxu0 %v2652
        %3106 = vmatprep.subr.bf16.mxu0 %v2661
        %3107 = vmatpush1.bf16.msra.mxu0 %v2660
        %3108 = vmatprep.subr.bf16.mxu0 %v2669
        %3109 = vmatpush1.bf16.msra.mxu0 %v2668
        %3110 = vmatprep.subr.bf16.mxu0 %v2677
        %3111 = vmatpush1.bf16.msra.mxu0 %v2676
        %3112 = vmatprep.subr.bf16.mxu0 %v2685
        %3113 = vmatpush1.bf16.msra.mxu0 %v2684
        %3114 = vmatprep.subr.bf16.mxu0 %v2693
        %3115 = vmatpush1.bf16.msra.mxu0 %v2692
        %3116 = vmatprep.mubr.bf16.mxu0 %v1541
        %3117 = vmatmul.mubr.bf16.gmra.mrb[0].mxu0 %v1540
        %v3118 = vpop.f32.mrb[0].mxu0
        %v3119 = vadd.f32 0.0, %v3118
        %v3120 = vpop.f32.mrb[0].mxu0
        %v3121 = vadd.f32 0.0, %v3120
        %v3122 = vpop.f32.mrb[0].mxu0
        %v3123 = vadd.f32 0.0, %v3122
        %v3124 = vpop.f32.mrb[0].mxu0
        %v3125 = vadd.f32 0.0, %v3124
        %3126 = vmatprep.mubr.bf16.mxu0 %v1545
        %3127 = vmatmul.mubr.bf16.gmra.mrb[0].mxu0 %v1544
        %v3128 = vpop.f32.mrb[0].mxu0
        %v3129 = vadd.f32 0.0, %v3128
        %v3130 = vpop.f32.mrb[0].mxu0
        %v3131 = vadd.f32 0.0, %v3130
        %v3132 = vpop.f32.mrb[0].mxu0
        %v3133 = vadd.f32 0.0, %v3132
        %v3134 = vpop.f32.mrb[0].mxu0
        %v3135 = vadd.f32 0.0, %v3134
        %3136 = vdwg.mxu0
        %3137 = vmatprep.subr.bf16.mxu0 %v2701
        %3138 = vmatpush1.bf16.msra.mxu0 %v2700
        %3139 = vmatprep.subr.bf16.mxu0 %v2709
        %3140 = vmatpush1.bf16.msra.mxu0 %v2708
        %3141 = vmatprep.subr.bf16.mxu0 %v2717
        %3142 = vmatpush1.bf16.msra.mxu0 %v2716
        %3143 = vmatprep.subr.bf16.mxu0 %v2725
        %3144 = vmatpush1.bf16.msra.mxu0 %v2724
        %3145 = vmatprep.subr.bf16.mxu0 %v2733
        %3146 = vmatpush1.bf16.msra.mxu0 %v2732
        %3147 = vmatprep.subr.bf16.mxu0 %v2741
        %3148 = vmatpush1.bf16.msra.mxu0 %v2740
        %3149 = vmatprep.subr.bf16.mxu0 %v2749
        %3150 = vmatpush1.bf16.msra.mxu0 %v2748
        %3151 = vmatprep.subr.bf16.mxu0 %v2757
        %3152 = vmatpush1.bf16.msra.mxu0 %v2756
        %3153 = vmatprep.subr.bf16.mxu0 %v2765
        %3154 = vmatpush1.bf16.msra.mxu0 %v2764
        %3155 = vmatprep.subr.bf16.mxu0 %v2773
        %3156 = vmatpush1.bf16.msra.mxu0 %v2772
        %3157 = vmatprep.subr.bf16.mxu0 %v2781
        %3158 = vmatpush1.bf16.msra.mxu0 %v2780
        %3159 = vmatprep.subr.bf16.mxu0 %v2789
        %3160 = vmatpush1.bf16.msra.mxu0 %v2788
        %3161 = vmatprep.subr.bf16.mxu0 %v2797
        %3162 = vmatpush1.bf16.msra.mxu0 %v2796
        %3163 = vmatprep.subr.bf16.mxu0 %v2805
        %3164 = vmatpush1.bf16.msra.mxu0 %v2804
        %3165 = vmatprep.subr.bf16.mxu0 %v2813
        %3166 = vmatpush1.bf16.msra.mxu0 %v2812
        %3167 = vmatprep.subr.bf16.mxu0 %v2821
        %3168 = vmatpush1.bf16.msra.mxu0 %v2820
        %3169 = vmatprep.mubr.bf16.mxu0 %v1543
        %3170 = vmatmul.mubr.bf16.gmra.mrb[0].mxu0 %v1542
        %v3171 = vpop.f32.mrb[0].mxu0
        %v3172 = vadd.f32 %v3119, %v3171
        %v3173 = vpop.f32.mrb[0].mxu0
        %v3174 = vadd.f32 %v3121, %v3173
        %v3175 = vpop.f32.mrb[0].mxu0
        %v3176 = vadd.f32 %v3123, %v3175
        %v3177 = vpop.f32.mrb[0].mxu0
        %v3178 = vadd.f32 %v3125, %v3177
        %3179 = vmatprep.mubr.bf16.mxu0 %v1547
        %3180 = vmatmul.mubr.bf16.gmra.mrb[0].mxu0 %v1546
        %v3181 = vpop.f32.mrb[0].mxu0
        %v3182 = vadd.f32 %v3129, %v3181
        %v3183 = vpop.f32.mrb[0].mxu0
        %v3184 = vadd.f32 %v3131, %v3183
        %v3185 = vpop.f32.mrb[0].mxu0
        %v3186 = vadd.f32 %v3133, %v3185
        %v3187 = vpop.f32.mrb[0].mxu0
        %v3188 = vadd.f32 %v3135, %v3187
        %3189 = vdwg.mxu0
        %3190 = vmatprep.subr.bf16.mxu0 %v2575
        %3191 = vmatpush1.bf16.msra.mxu0 %v2574
        %3192 = vmatprep.subr.bf16.mxu0 %v2583
        %3193 = vmatpush1.bf16.msra.mxu0 %v2582
        %3194 = vmatprep.subr.bf16.mxu0 %v2591
        %3195 = vmatpush1.bf16.msra.mxu0 %v2590
        %3196 = vmatprep.subr.bf16.mxu0 %v2599
        %3197 = vmatpush1.bf16.msra.mxu0 %v2598
        %3198 = vmatprep.subr.bf16.mxu0 %v2607
        %3199 = vmatpush1.bf16.msra.mxu0 %v2606
        %3200 = vmatprep.subr.bf16.mxu0 %v2615
        %3201 = vmatpush1.bf16.msra.mxu0 %v2614
        %3202 = vmatprep.subr.bf16.mxu0 %v2623
        %3203 = vmatpush1.bf16.msra.mxu0 %v2622
        %3204 = vmatprep.subr.bf16.mxu0 %v2631
        %3205 = vmatpush1.bf16.msra.mxu0 %v2630
        %3206 = vmatprep.subr.bf16.mxu0 %v2639
        %3207 = vmatpush1.bf16.msra.mxu0 %v2638
        %3208 = vmatprep.subr.bf16.mxu0 %v2647
        %3209 = vmatpush1.bf16.msra.mxu0 %v2646
        %3210 = vmatprep.subr.bf16.mxu0 %v2655
        %3211 = vmatpush1.bf16.msra.mxu0 %v2654
        %3212 = vmatprep.subr.bf16.mxu0 %v2663
        %3213 = vmatpush1.bf16.msra.mxu0 %v2662
        %3214 = vmatprep.subr.bf16.mxu0 %v2671
        %3215 = vmatpush1.bf16.msra.mxu0 %v2670
        %3216 = vmatprep.subr.bf16.mxu0 %v2679
        %3217 = vmatpush1.bf16.msra.mxu0 %v2678
        %3218 = vmatprep.subr.bf16.mxu0 %v2687
        %3219 = vmatpush1.bf16.msra.mxu0 %v2686
        %3220 = vmatprep.subr.bf16.mxu0 %v2695
        %3221 = vmatpush1.bf16.msra.mxu0 %v2694
        %3222 = vmatprep.mubr.bf16.mxu0 %v1541
        %3223 = vmatmul.mubr.bf16.gmra.mrb[0].mxu0 %v1540
        %v3224 = vpop.f32.mrb[0].mxu0
        %v3225 = vadd.f32 0.0, %v3224
        %v3226 = vpop.f32.mrb[0].mxu0
        %v3227 = vadd.f32 0.0, %v3226
        %v3228 = vpop.f32.mrb[0].mxu0
        %v3229 = vadd.f32 0.0, %v3228
        %v3230 = vpop.f32.mrb[0].mxu0
        %v3231 = vadd.f32 0.0, %v3230
        %3232 = vmatprep.mubr.bf16.mxu0 %v1545
        %3233 = vmatmul.mubr.bf16.gmra.mrb[0].mxu0 %v1544
        %v3234 = vpop.f32.mrb[0].mxu0
        %v3235 = vadd.f32 0.0, %v3234
        %v3236 = vpop.f32.mrb[0].mxu0
        %v3237 = vadd.f32 0.0, %v3236
        %v3238 = vpop.f32.mrb[0].mxu0
        %v3239 = vadd.f32 0.0, %v3238
        %v3240 = vpop.f32.mrb[0].mxu0
        %v3241 = vadd.f32 0.0, %v3240
        %3242 = vdwg.mxu0
        %3243 = vmatprep.subr.bf16.mxu0 %v2703
        %3244 = vmatpush1.bf16.msra.mxu0 %v2702
        %3245 = vmatprep.subr.bf16.mxu0 %v2711
        %3246 = vmatpush1.bf16.msra.mxu0 %v2710
        %3247 = vmatprep.subr.bf16.mxu0 %v2719
        %3248 = vmatpush1.bf16.msra.mxu0 %v2718
        %3249 = vmatprep.subr.bf16.mxu0 %v2727
        %3250 = vmatpush1.bf16.msra.mxu0 %v2726
        %3251 = vmatprep.subr.bf16.mxu0 %v2735
        %3252 = vmatpush1.bf16.msra.mxu0 %v2734
        %3253 = vmatprep.subr.bf16.mxu0 %v2743
        %3254 = vmatpush1.bf16.msra.mxu0 %v2742
        %3255 = vmatprep.subr.bf16.mxu0 %v2751
        %3256 = vmatpush1.bf16.msra.mxu0 %v2750
        %3257 = vmatprep.subr.bf16.mxu0 %v2759
        %3258 = vmatpush1.bf16.msra.mxu0 %v2758
        %3259 = vmatprep.subr.bf16.mxu0 %v2767
        %3260 = vmatpush1.bf16.msra.mxu0 %v2766
        %3261 = vmatprep.subr.bf16.mxu0 %v2775
        %3262 = vmatpush1.bf16.msra.mxu0 %v2774
        %3263 = vmatprep.subr.bf16.mxu0 %v2783
        %3264 = vmatpush1.bf16.msra.mxu0 %v2782
        %3265 = vmatprep.subr.bf16.mxu0 %v2791
        %3266 = vmatpush1.bf16.msra.mxu0 %v2790
        %3267 = vmatprep.subr.bf16.mxu0 %v2799
        %3268 = vmatpush1.bf16.msra.mxu0 %v2798
        %3269 = vmatprep.subr.bf16.mxu0 %v2807
        %3270 = vmatpush1.bf16.msra.mxu0 %v2806
        %3271 = vmatprep.subr.bf16.mxu0 %v2815
        %3272 = vmatpush1.bf16.msra.mxu0 %v2814
        %3273 = vmatprep.subr.bf16.mxu0 %v2823
        %3274 = vmatpush1.bf16.msra.mxu0 %v2822
        %3275 = vmatprep.mubr.bf16.mxu0 %v1543
        %3276 = vmatmul.mubr.bf16.gmra.mrb[0].mxu0 %v1542
        %v3277 = vpop.f32.mrb[0].mxu0
        %v3278 = vadd.f32 %v3225, %v3277
        %v3279 = vpop.f32.mrb[0].mxu0
        %v3280 = vadd.f32 %v3227, %v3279
        %v3281 = vpop.f32.mrb[0].mxu0
        %v3282 = vadd.f32 %v3229, %v3281
        %v3283 = vpop.f32.mrb[0].mxu0
        %v3284 = vadd.f32 %v3231, %v3283
        %3285 = vmatprep.mubr.bf16.mxu0 %v1547
        %3286 = vmatmul.mubr.bf16.gmra.mrb[0].mxu0 %v1546
        %v3287 = vpop.f32.mrb[0].mxu0
        %v3288 = vadd.f32 %v3235, %v3287
        %v3289 = vpop.f32.mrb[0].mxu0
        %v3290 = vadd.f32 %v3237, %v3289
        %v3291 = vpop.f32.mrb[0].mxu0
        %v3292 = vadd.f32 %v3239, %v3291
        %v3293 = vpop.f32.mrb[0].mxu0
        %v3294 = vadd.f32 %v3241, %v3293
        %3295 = vdwg.mxu0
        %3296 = vmatprep.subr.bf16.mxu0 %v2577
        %3297 = vmatpush1.bf16.msra.mxu0 %v2576
        %3298 = vmatprep.subr.bf16.mxu0 %v2585
        %3299 = vmatpush1.bf16.msra.mxu0 %v2584
        %3300 = vmatprep.subr.bf16.mxu0 %v2593
        %3301 = vmatpush1.bf16.msra.mxu0 %v2592
        %3302 = vmatprep.subr.bf16.mxu0 %v2601
        %3303 = vmatpush1.bf16.msra.mxu0 %v2600
        %3304 = vmatprep.subr.bf16.mxu0 %v2609
        %3305 = vmatpush1.bf16.msra.mxu0 %v2608
        %3306 = vmatprep.subr.bf16.mxu0 %v2617
        %3307 = vmatpush1.bf16.msra.mxu0 %v2616
        %3308 = vmatprep.subr.bf16.mxu0 %v2625
        %3309 = vmatpush1.bf16.msra.mxu0 %v2624
        %3310 = vmatprep.subr.bf16.mxu0 %v2633
        %3311 = vmatpush1.bf16.msra.mxu0 %v2632
        %3312 = vmatprep.subr.bf16.mxu0 %v2641
        %3313 = vmatpush1.bf16.msra.mxu0 %v2640
        %3314 = vmatprep.subr.bf16.mxu0 %v2649
        %3315 = vmatpush1.bf16.msra.mxu0 %v2648
        %3316 = vmatprep.subr.bf16.mxu0 %v2657
        %3317 = vmatpush1.bf16.msra.mxu0 %v2656
        %3318 = vmatprep.subr.bf16.mxu0 %v2665
        %3319 = vmatpush1.bf16.msra.mxu0 %v2664
        %3320 = vmatprep.subr.bf16.mxu0 %v2673
        %3321 = vmatpush1.bf16.msra.mxu0 %v2672
        %3322 = vmatprep.subr.bf16.mxu0 %v2681
        %3323 = vmatpush1.bf16.msra.mxu0 %v2680
        %3324 = vmatprep.subr.bf16.mxu0 %v2689
        %3325 = vmatpush1.bf16.msra.mxu0 %v2688
        %3326 = vmatprep.subr.bf16.mxu0 %v2697
        %3327 = vmatpush1.bf16.msra.mxu0 %v2696
        %3328 = vmatprep.mubr.bf16.mxu0 %v1541
        %3329 = vmatmul.mubr.bf16.gmra.mrb[0].mxu0 %v1540
        %v3330 = vpop.f32.mrb[0].mxu0
        %v3331 = vadd.f32 0.0, %v3330
        %v3332 = vpop.f32.mrb[0].mxu0
        %v3333 = vadd.f32 0.0, %v3332
        %v3334 = vpop.f32.mrb[0].mxu0
        %v3335 = vadd.f32 0.0, %v3334
        %v3336 = vpop.f32.mrb[0].mxu0
        %v3337 = vadd.f32 0.0, %v3336
        %3338 = vmatprep.mubr.bf16.mxu0 %v1545
        %3339 = vmatmul.mubr.bf16.gmra.mrb[0].mxu0 %v1544
        %v3340 = vpop.f32.mrb[0].mxu0
        %v3341 = vadd.f32 0.0, %v3340
        %v3342 = vpop.f32.mrb[0].mxu0
        %v3343 = vadd.f32 0.0, %v3342
        %v3344 = vpop.f32.mrb[0].mxu0
        %v3345 = vadd.f32 0.0, %v3344
        %v3346 = vpop.f32.mrb[0].mxu0
        %v3347 = vadd.f32 0.0, %v3346
        %3348 = vdwg.mxu0
        %3349 = vmatprep.subr.bf16.mxu0 %v2705
        %3350 = vmatpush1.bf16.msra.mxu0 %v2704
        %3351 = vmatprep.subr.bf16.mxu0 %v2713
        %3352 = vmatpush1.bf16.msra.mxu0 %v2712
        %3353 = vmatprep.subr.bf16.mxu0 %v2721
        %3354 = vmatpush1.bf16.msra.mxu0 %v2720
        %3355 = vmatprep.subr.bf16.mxu0 %v2729
        %3356 = vmatpush1.bf16.msra.mxu0 %v2728
        %3357 = vmatprep.subr.bf16.mxu0 %v2737
        %3358 = vmatpush1.bf16.msra.mxu0 %v2736
        %3359 = vmatprep.subr.bf16.mxu0 %v2745
        %3360 = vmatpush1.bf16.msra.mxu0 %v2744
        %3361 = vmatprep.subr.bf16.mxu0 %v2753
        %3362 = vmatpush1.bf16.msra.mxu0 %v2752
        %3363 = vmatprep.subr.bf16.mxu0 %v2761
        %3364 = vmatpush1.bf16.msra.mxu0 %v2760
        %3365 = vmatprep.subr.bf16.mxu0 %v2769
        %3366 = vmatpush1.bf16.msra.mxu0 %v2768
        %3367 = vmatprep.subr.bf16.mxu0 %v2777
        %3368 = vmatpush1.bf16.msra.mxu0 %v2776
        %3369 = vmatprep.subr.bf16.mxu0 %v2785
        %3370 = vmatpush1.bf16.msra.mxu0 %v2784
        %3371 = vmatprep.subr.bf16.mxu0 %v2793
        %3372 = vmatpush1.bf16.msra.mxu0 %v2792
        %3373 = vmatprep.subr.bf16.mxu0 %v2801
        %3374 = vmatpush1.bf16.msra.mxu0 %v2800
        %3375 = vmatprep.subr.bf16.mxu0 %v2809
        %3376 = vmatpush1.bf16.msra.mxu0 %v2808
        %3377 = vmatprep.subr.bf16.mxu0 %v2817
        %3378 = vmatpush1.bf16.msra.mxu0 %v2816
        %3379 = vmatprep.subr.bf16.mxu0 %v2825
        %3380 = vmatpush1.bf16.msra.mxu0 %v2824
        %3381 = vmatprep.mubr.bf16.mxu0 %v1543
        %3382 = vmatmul.mubr.bf16.gmra.mrb[0].mxu0 %v1542
        %v3383 = vpop.f32.mrb[0].mxu0
        %v3384 = vadd.f32 %v3331, %v3383
        %v3385 = vpop.f32.mrb[0].mxu0
        %v3386 = vadd.f32 %v3333, %v3385
        %v3387 = vpop.f32.mrb[0].mxu0
        %v3388 = vadd.f32 %v3335, %v3387
        %v3389 = vpop.f32.mrb[0].mxu0
        %v3390 = vadd.f32 %v3337, %v3389
        %3391 = vmatprep.mubr.bf16.mxu0 %v1547
        %3392 = vmatmul.mubr.bf16.gmra.mrb[0].mxu0 %v1546
        %v3393 = vpop.f32.mrb[0].mxu0
        %v3394 = vadd.f32 %v3341, %v3393
        %v3395 = vpop.f32.mrb[0].mxu0
        %v3396 = vadd.f32 %v3343, %v3395
        %v3397 = vpop.f32.mrb[0].mxu0
        %v3398 = vadd.f32 %v3345, %v3397
        %v3399 = vpop.f32.mrb[0].mxu0
        %v3400 = vadd.f32 %v3347, %v3399
        %3401 = vdwg.mxu0
        %3402 = vmatprep.subr.bf16.mxu0 %v2579
        %3403 = vmatpush1.bf16.msra.mxu0 %v2578
        %3404 = vmatprep.subr.bf16.mxu0 %v2587
        %3405 = vmatpush1.bf16.msra.mxu0 %v2586
        %3406 = vmatprep.subr.bf16.mxu0 %v2595
        %3407 = vmatpush1.bf16.msra.mxu0 %v2594
        %3408 = vmatprep.subr.bf16.mxu0 %v2603
        %3409 = vmatpush1.bf16.msra.mxu0 %v2602
        %3410 = vmatprep.subr.bf16.mxu0 %v2611
        %3411 = vmatpush1.bf16.msra.mxu0 %v2610
        %3412 = vmatprep.subr.bf16.mxu0 %v2619
        %3413 = vmatpush1.bf16.msra.mxu0 %v2618
        %3414 = vmatprep.subr.bf16.mxu0 %v2627
        %3415 = vmatpush1.bf16.msra.mxu0 %v2626
        %3416 = vmatprep.subr.bf16.mxu0 %v2635
        %3417 = vmatpush1.bf16.msra.mxu0 %v2634
        %3418 = vmatprep.subr.bf16.mxu0 %v2643
        %3419 = vmatpush1.bf16.msra.mxu0 %v2642
        %3420 = vmatprep.subr.bf16.mxu0 %v2651
        %3421 = vmatpush1.bf16.msra.mxu0 %v2650
        %3422 = vmatprep.subr.bf16.mxu0 %v2659
        %3423 = vmatpush1.bf16.msra.mxu0 %v2658
        %3424 = vmatprep.subr.bf16.mxu0 %v2667
        %3425 = vmatpush1.bf16.msra.mxu0 %v2666
        %3426 = vmatprep.subr.bf16.mxu0 %v2675
        %3427 = vmatpush1.bf16.msra.mxu0 %v2674
        %3428 = vmatprep.subr.bf16.mxu0 %v2683
        %3429 = vmatpush1.bf16.msra.mxu0 %v2682
        %3430 = vmatprep.subr.bf16.mxu0 %v2691
        %3431 = vmatpush1.bf16.msra.mxu0 %v2690
        %3432 = vmatprep.subr.bf16.mxu0 %v2699
        %3433 = vmatpush1.bf16.msra.mxu0 %v2698
        %3434 = vmatprep.mubr.bf16.mxu0 %v1541
        %3435 = vmatmul.mubr.bf16.gmra.mrb[0].mxu0 %v1540
        %v3436 = vpop.f32.mrb[0].mxu0
        %v3437 = vadd.f32 0.0, %v3436
        %v3438 = vpop.f32.mrb[0].mxu0
        %v3439 = vadd.f32 0.0, %v3438
        %v3440 = vpop.f32.mrb[0].mxu0
        %v3441 = vadd.f32 0.0, %v3440
        %v3442 = vpop.f32.mrb[0].mxu0
        %v3443 = vadd.f32 0.0, %v3442
        %3444 = vmatprep.mubr.bf16.mxu0 %v1545
        %3445 = vmatmul.mubr.bf16.gmra.mrb[0].mxu0 %v1544
        %v3446 = vpop.f32.mrb[0].mxu0
        %v3447 = vadd.f32 0.0, %v3446
        %v3448 = vpop.f32.mrb[0].mxu0
        %v3449 = vadd.f32 0.0, %v3448
        %v3450 = vpop.f32.mrb[0].mxu0
        %v3451 = vadd.f32 0.0, %v3450
        %v3452 = vpop.f32.mrb[0].mxu0
        %v3453 = vadd.f32 0.0, %v3452
        %3454 = vdwg.mxu0
        %3455 = vmatprep.subr.bf16.mxu0 %v2707
        %3456 = vmatpush1.bf16.msra.mxu0 %v2706
        %3457 = vmatprep.subr.bf16.mxu0 %v2715
        %3458 = vmatpush1.bf16.msra.mxu0 %v2714
        %3459 = vmatprep.subr.bf16.mxu0 %v2723
        %3460 = vmatpush1.bf16.msra.mxu0 %v2722
        %3461 = vmatprep.subr.bf16.mxu0 %v2731
        %3462 = vmatpush1.bf16.msra.mxu0 %v2730
        %3463 = vmatprep.subr.bf16.mxu0 %v2739
        %3464 = vmatpush1.bf16.msra.mxu0 %v2738
        %3465 = vmatprep.subr.bf16.mxu0 %v2747
        %3466 = vmatpush1.bf16.msra.mxu0 %v2746
        %3467 = vmatprep.subr.bf16.mxu0 %v2755
        %3468 = vmatpush1.bf16.msra.mxu0 %v2754
        %3469 = vmatprep.subr.bf16.mxu0 %v2763
        %3470 = vmatpush1.bf16.msra.mxu0 %v2762
        %3471 = vmatprep.subr.bf16.mxu0 %v2771
        %3472 = vmatpush1.bf16.msra.mxu0 %v2770
        %3473 = vmatprep.subr.bf16.mxu0 %v2779
        %3474 = vmatpush1.bf16.msra.mxu0 %v2778
        %3475 = vmatprep.subr.bf16.mxu0 %v2787
        %3476 = vmatpush1.bf16.msra.mxu0 %v2786
        %3477 = vmatprep.subr.bf16.mxu0 %v2795
        %3478 = vmatpush1.bf16.msra.mxu0 %v2794
        %3479 = vmatprep.subr.bf16.mxu0 %v2803
        %3480 = vmatpush1.bf16.msra.mxu0 %v2802
        %3481 = vmatprep.subr.bf16.mxu0 %v2811
        %3482 = vmatpush1.bf16.msra.mxu0 %v2810
        %3483 = vmatprep.subr.bf16.mxu0 %v2819
        %3484 = vmatpush1.bf16.msra.mxu0 %v2818
        %3485 = vmatprep.subr.bf16.mxu0 %v2827
        %3486 = vmatpush1.bf16.msra.mxu0 %v2826
        %3487 = vmatprep.mubr.bf16.mxu0 %v1543
        %3488 = vmatmul.mubr.bf16.gmra.mrb[0].mxu0 %v1542
        %v3489 = vpop.f32.mrb[0].mxu0
        %v3490 = vadd.f32 %v3437, %v3489
        %v3491 = vpop.f32.mrb[0].mxu0
        %v3492 = vadd.f32 %v3439, %v3491
        %v3493 = vpop.f32.mrb[0].mxu0
        %v3494 = vadd.f32 %v3441, %v3493
        %v3495 = vpop.f32.mrb[0].mxu0
        %v3496 = vadd.f32 %v3443, %v3495
        %3497 = vmatprep.mubr.bf16.mxu0 %v1547
        %3498 = vmatmul.mubr.bf16.gmra.mrb[0].mxu0 %v1546
        %v3499 = vpop.f32.mrb[0].mxu0
        %v3500 = vadd.f32 %v3447, %v3499
        %v3501 = vpop.f32.mrb[0].mxu0
        %v3502 = vadd.f32 %v3449, %v3501
        %v3503 = vpop.f32.mrb[0].mxu0
        %v3504 = vadd.f32 %v3451, %v3503
        %v3505 = vpop.f32.mrb[0].mxu0
        %v3506 = vadd.f32 %v3453, %v3505
        %3507 = vdwg.mxu0
        %v3508 = vld [vmem:[#allocation4 + $0xf] sm:$0xff]
        %v3509 = vld [vmem:[#allocation4 + $0x17] sm:$0xff]
        %v3510 = vadd.f32 %v3172, %v3176
        %v3511 = vadd.f32 %v3510, %v3182
        %v3512 = vadd.f32 %v3511, %v3186
        %v3513 = vrot.slane %v3512, 4
        %v3514 = vadd.f32 %v3512, %v3513
        %v3515 = vrot.slane %v3514, 2
        %v3516 = vadd.f32 %v3514, %v3515
        %v3517 = vrot.slane %v3516, 1
        %v3518 = vadd.f32 %v3516, %v3517
        %v3519 = vadd.f32 %v3174, %v3178
        %v3520 = vadd.f32 %v3519, %v3184
        %v3521 = vadd.f32 %v3520, %v3188
        %v3522 = vrot.slane %v3521, 4
        %v3523 = vadd.f32 %v3521, %v3522
        %v3524 = vrot.slane %v3523, 2
        %v3525 = vadd.f32 %v3523, %v3524
        %v3526 = vrot.slane %v3525, 1
        %v3527 = vadd.f32 %v3525, %v3526
        %v3528 = vadd.f32 %v3278, %v3282
        %v3529 = vadd.f32 %v3528, %v3288
        %v3530 = vadd.f32 %v3529, %v3292
        %v3531 = vrot.slane %v3530, 4
        %v3532 = vadd.f32 %v3530, %v3531
        %v3533 = vrot.slane %v3532, 2
        %v3534 = vadd.f32 %v3532, %v3533
        %v3535 = vrot.slane %v3534, 1
        %v3536 = vadd.f32 %v3534, %v3535
        %v3537 = vadd.f32 %v3280, %v3284
        %v3538 = vadd.f32 %v3537, %v3290
        %v3539 = vadd.f32 %v3538, %v3294
        %v3540 = vrot.slane %v3539, 4
        %v3541 = vadd.f32 %v3539, %v3540
        %v3542 = vrot.slane %v3541, 2
        %v3543 = vadd.f32 %v3541, %v3542
        %v3544 = vrot.slane %v3543, 1
        %v3545 = vadd.f32 %v3543, %v3544
        %v3546 = vadd.f32 %v3384, %v3388
        %v3547 = vadd.f32 %v3546, %v3394
        %v3548 = vadd.f32 %v3547, %v3398
        %v3549 = vrot.slane %v3548, 4
        %v3550 = vadd.f32 %v3548, %v3549
        %v3551 = vrot.slane %v3550, 2
        %v3552 = vadd.f32 %v3550, %v3551
        %v3553 = vrot.slane %v3552, 1
        %v3554 = vadd.f32 %v3552, %v3553
        %v3555 = vadd.f32 %v3386, %v3390
        %v3556 = vadd.f32 %v3555, %v3396
        %v3557 = vadd.f32 %v3556, %v3400
        %v3558 = vrot.slane %v3557, 4
        %v3559 = vadd.f32 %v3557, %v3558
        %v3560 = vrot.slane %v3559, 2
        %v3561 = vadd.f32 %v3559, %v3560
        %v3562 = vrot.slane %v3561, 1
        %v3563 = vadd.f32 %v3561, %v3562
        %v3564 = vadd.f32 %v3490, %v3494
        %v3565 = vadd.f32 %v3564, %v3500
        %v3566 = vadd.f32 %v3565, %v3504
        %v3567 = vrot.slane %v3566, 4
        %v3568 = vadd.f32 %v3566, %v3567
        %v3569 = vrot.slane %v3568, 2
        %v3570 = vadd.f32 %v3568, %v3569
        %v3571 = vrot.slane %v3570, 1
        %v3572 = vadd.f32 %v3570, %v3571
        %v3573 = vadd.f32 %v3492, %v3496
        %v3574 = vadd.f32 %v3573, %v3502
        %v3575 = vadd.f32 %v3574, %v3506
        %v3576 = vrot.slane %v3575, 4
        %v3577 = vadd.f32 %v3575, %v3576
        %v3578 = vrot.slane %v3577, 2
        %v3579 = vadd.f32 %v3577, %v3578
        %v3580 = vrot.slane %v3579, 1
        %v3581 = vadd.f32 %v3579, %v3580
        %v3582 = vmul.f32 %v3518, %v673
        %v3583 = vmul.f32 %v3527, %v673
        %v3584 = vmul.f32 %v3536, %v673
        %v3585 = vmul.f32 %v3545, %v673
        %v3586 = vmul.f32 %v3554, %v673
        %v3587 = vmul.f32 %v3563, %v673
        %v3588 = vmul.f32 %v3572, %v673
        %v3589 = vmul.f32 %v3581, %v673
        %v3590 = vsub.f32 %v3172, %v3582
        %v3591 = vsub.f32 %v3174, %v3583
        %v3592 = vsub.f32 %v3278, %v3584
        %v3593 = vsub.f32 %v3280, %v3585
        %v3594 = vsub.f32 %v3384, %v3586
        %v3595 = vsub.f32 %v3386, %v3587
        %v3596 = vsub.f32 %v3490, %v3588
        %v3597 = vsub.f32 %v3492, %v3589
        %v3598 = vsub.f32 %v3176, %v3582
        %v3599 = vsub.f32 %v3178, %v3583
        %v3600 = vsub.f32 %v3282, %v3584
        %v3601 = vsub.f32 %v3284, %v3585
        %v3602 = vsub.f32 %v3388, %v3586
        %v3603 = vsub.f32 %v3390, %v3587
        %v3604 = vsub.f32 %v3494, %v3588
        %v3605 = vsub.f32 %v3496, %v3589
        %v3606 = vsub.f32 %v3182, %v3582
        %v3607 = vsub.f32 %v3184, %v3583
        %v3608 = vsub.f32 %v3288, %v3584
        %v3609 = vsub.f32 %v3290, %v3585
        %v3610 = vsub.f32 %v3394, %v3586
        %v3611 = vsub.f32 %v3396, %v3587
        %v3612 = vsub.f32 %v3500, %v3588
        %v3613 = vsub.f32 %v3502, %v3589
        %v3614 = vsub.f32 %v3186, %v3582
        %v3615 = vsub.f32 %v3188, %v3583
        %v3616 = vsub.f32 %v3292, %v3584
        %v3617 = vsub.f32 %v3294, %v3585
        %v3618 = vsub.f32 %v3398, %v3586
        %v3619 = vsub.f32 %v3400, %v3587
        %v3620 = vsub.f32 %v3504, %v3588
        %v3621 = vsub.f32 %v3506, %v3589
        %v3622 = vmul.f32 %v3590, %v3590
        %v3623 = vmul.f32 %v3591, %v3591
        %v3624 = vmul.f32 %v3592, %v3592
        %v3625 = vmul.f32 %v3593, %v3593
        %v3626 = vmul.f32 %v3594, %v3594
        %v3627 = vmul.f32 %v3595, %v3595
        %v3628 = vmul.f32 %v3596, %v3596
        %v3629 = vmul.f32 %v3597, %v3597
        %v3630 = vmul.f32 %v3598, %v3598
        %v3631 = vmul.f32 %v3599, %v3599
        %v3632 = vmul.f32 %v3600, %v3600
        %v3633 = vmul.f32 %v3601, %v3601
        %v3634 = vmul.f32 %v3602, %v3602
        %v3635 = vmul.f32 %v3603, %v3603
        %v3636 = vmul.f32 %v3604, %v3604
        %v3637 = vmul.f32 %v3605, %v3605
        %v3638 = vmul.f32 %v3606, %v3606
        %v3639 = vmul.f32 %v3607, %v3607
        %v3640 = vmul.f32 %v3608, %v3608
        %v3641 = vmul.f32 %v3609, %v3609
        %v3642 = vmul.f32 %v3610, %v3610
        %v3643 = vmul.f32 %v3611, %v3611
        %v3644 = vmul.f32 %v3612, %v3612
        %v3645 = vmul.f32 %v3613, %v3613
        %v3646 = vmul.f32 %v3614, %v3614
        %v3647 = vmul.f32 %v3615, %v3615
        %v3648 = vmul.f32 %v3616, %v3616
        %v3649 = vmul.f32 %v3617, %v3617
        %v3650 = vmul.f32 %v3618, %v3618
        %v3651 = vmul.f32 %v3619, %v3619
        %v3652 = vmul.f32 %v3620, %v3620
        %v3653 = vmul.f32 %v3621, %v3621
        %v3654 = vadd.f32 %v3622, %v3630
        %v3655 = vadd.f32 %v3654, %v3638
        %v3656 = vadd.f32 %v3655, %v3646
        %v3657 = vrot.slane %v3656, 4
        %v3658 = vadd.f32 %v3656, %v3657
        %v3659 = vrot.slane %v3658, 2
        %v3660 = vadd.f32 %v3658, %v3659
        %v3661 = vrot.slane %v3660, 1
        %v3662 = vadd.f32 %v3660, %v3661
        %v3663 = vadd.f32 %v3623, %v3631
        %v3664 = vadd.f32 %v3663, %v3639
        %v3665 = vadd.f32 %v3664, %v3647
        %v3666 = vrot.slane %v3665, 4
        %v3667 = vadd.f32 %v3665, %v3666
        %v3668 = vrot.slane %v3667, 2
        %v3669 = vadd.f32 %v3667, %v3668
        %v3670 = vrot.slane %v3669, 1
        %v3671 = vadd.f32 %v3669, %v3670
        %v3672 = vadd.f32 %v3624, %v3632
        %v3673 = vadd.f32 %v3672, %v3640
        %v3674 = vadd.f32 %v3673, %v3648
        %v3675 = vrot.slane %v3674, 4
        %v3676 = vadd.f32 %v3674, %v3675
        %v3677 = vrot.slane %v3676, 2
        %v3678 = vadd.f32 %v3676, %v3677
        %v3679 = vrot.slane %v3678, 1
        %v3680 = vadd.f32 %v3678, %v3679
        %v3681 = vadd.f32 %v3625, %v3633
        %v3682 = vadd.f32 %v3681, %v3641
        %v3683 = vadd.f32 %v3682, %v3649
        %v3684 = vrot.slane %v3683, 4
        %v3685 = vadd.f32 %v3683, %v3684
        %v3686 = vrot.slane %v3685, 2
        %v3687 = vadd.f32 %v3685, %v3686
        %v3688 = vrot.slane %v3687, 1
        %v3689 = vadd.f32 %v3687, %v3688
        %v3690 = vadd.f32 %v3626, %v3634
        %v3691 = vadd.f32 %v3690, %v3642
        %v3692 = vadd.f32 %v3691, %v3650
        %v3693 = vrot.slane %v3692, 4
        %v3694 = vadd.f32 %v3692, %v3693
        %v3695 = vrot.slane %v3694, 2
        %v3696 = vadd.f32 %v3694, %v3695
        %v3697 = vrot.slane %v3696, 1
        %v3698 = vadd.f32 %v3696, %v3697
        %v3699 = vadd.f32 %v3627, %v3635
        %v3700 = vadd.f32 %v3699, %v3643
        %v3701 = vadd.f32 %v3700, %v3651
        %v3702 = vrot.slane %v3701, 4
        %v3703 = vadd.f32 %v3701, %v3702
        %v3704 = vrot.slane %v3703, 2
        %v3705 = vadd.f32 %v3703, %v3704
        %v3706 = vrot.slane %v3705, 1
        %v3707 = vadd.f32 %v3705, %v3706
        %v3708 = vadd.f32 %v3628, %v3636
        %v3709 = vadd.f32 %v3708, %v3644
        %v3710 = vadd.f32 %v3709, %v3652
        %v3711 = vrot.slane %v3710, 4
        %v3712 = vadd.f32 %v3710, %v3711
        %v3713 = vrot.slane %v3712, 2
        %v3714 = vadd.f32 %v3712, %v3713
        %v3715 = vrot.slane %v3714, 1
        %v3716 = vadd.f32 %v3714, %v3715
        %v3717 = vadd.f32 %v3629, %v3637
        %v3718 = vadd.f32 %v3717, %v3645
        %v3719 = vadd.f32 %v3718, %v3653
        %v3720 = vrot.slane %v3719, 4
        %v3721 = vadd.f32 %v3719, %v3720
        %v3722 = vrot.slane %v3721, 2
        %v3723 = vadd.f32 %v3721, %v3722
        %v3724 = vrot.slane %v3723, 1
        %v3725 = vadd.f32 %v3723, %v3724
        %v3726 = vmul.f32 %v3662, %v673
        %v3727 = vmul.f32 %v3671, %v673
        %v3728 = vmul.f32 %v3680, %v673
        %v3729 = vmul.f32 %v3689, %v673
        %v3730 = vmul.f32 %v3698, %v673
        %v3731 = vmul.f32 %v3707, %v673
        %v3732 = vmul.f32 %v3716, %v673
        %v3733 = vmul.f32 %v3725, %v673
        %v3734 = vadd.f32 %v3726, 0.8
        %v3735 = vadd.f32 %v3727, 0.8
        %v3736 = vadd.f32 %v3728, 0.8
        %v3737 = vadd.f32 %v3729, 0.8
        %v3738 = vadd.f32 %v3730, 0.8
        %v3739 = vadd.f32 %v3731, 0.8
        %v3740 = vadd.f32 %v3732, 0.8
        %v3741 = vadd.f32 %v3733, 0.8
        %v3742 = vrsqrt.pop %v3734
        %v3743 = vrsqrt.pop %v3735
        %v3744 = vrsqrt.pop %v3736
        %v3745 = vrsqrt.pop %v3737
        %v3746 = vrsqrt.pop %v3738
        %v3747 = vrsqrt.pop %v3739
        %v3748 = vrsqrt.pop %v3740
        %v3749 = vrsqrt.pop %v3741
        %v3750 = vmul.f32 %v3590, %v3742
        %v3751 = vmul.f32 %v3591, %v3743
        %v3752 = vmul.f32 %v3592, %v3744
        %v3753 = vmul.f32 %v3593, %v3745
        %v3754 = vmul.f32 %v3594, %v3746
        %v3755 = vmul.f32 %v3595, %v3747
        %v3756 = vmul.f32 %v3596, %v3748
        %v3757 = vmul.f32 %v3597, %v3749
        %v3758 = vmul.f32 %v3598, %v3742
        %v3759 = vmul.f32 %v3599, %v3743
        %v3760 = vmul.f32 %v3600, %v3744
        %v3761 = vmul.f32 %v3601, %v3745
        %v3762 = vmul.f32 %v3602, %v3746
        %v3763 = vmul.f32 %v3603, %v3747
        %v3764 = vmul.f32 %v3604, %v3748
        %v3765 = vmul.f32 %v3605, %v3749
        %v3766 = vmul.f32 %v3606, %v3742
        %v3767 = vmul.f32 %v3607, %v3743
        %v3768 = vmul.f32 %v3608, %v3744
        %v3769 = vmul.f32 %v3609, %v3745
        %v3770 = vmul.f32 %v3610, %v3746
        %v3771 = vmul.f32 %v3611, %v3747
        %v3772 = vmul.f32 %v3612, %v3748
        %v3773 = vmul.f32 %v3613, %v3749
        %v3774 = vmul.f32 %v3614, %v3742
        %v3775 = vmul.f32 %v3615, %v3743
        %v3776 = vmul.f32 %v3616, %v3744
        %v3777 = vmul.f32 %v3617, %v3745
        %v3778 = vmul.f32 %v3618, %v3746
        %v3779 = vmul.f32 %v3619, %v3747
        %v3780 = vmul.f32 %v3620, %v3748
        %v3781 = vmul.f32 %v3621, %v3749
        %v3783 = vlaneseq
        %v3784 = vshrl.u32 %v3783, 7
        %v3785 = vsub.s32 0, %v3784
        %v3786 = vrot.slane %v3508, %v3785
        %v3787 = vlaneseq
        %v3788 = vshrl.u32 %v3787, 7
        %v3789 = vsub.s32 1, %v3788
        %v3790 = vrot.slane %v3508, %v3789
        %v3791 = vlaneseq
        %v3792 = vshrl.u32 %v3791, 7
        %v3793 = vsub.s32 2, %v3792
        %v3794 = vrot.slane %v3508, %v3793
        %v3795 = vlaneseq
        %v3796 = vshrl.u32 %v3795, 7
        %v3797 = vsub.s32 3, %v3796
        %v3798 = vrot.slane %v3508, %v3797
        %v3799 = vlaneseq
        %v3800 = vshrl.u32 %v3799, 7
        %v3801 = vsub.s32 4, %v3800
        %v3802 = vrot.slane %v3508, %v3801
        %v3803 = vlaneseq
        %v3804 = vshrl.u32 %v3803, 7
        %v3805 = vsub.s32 5, %v3804
        %v3806 = vrot.slane %v3508, %v3805
        %v3807 = vlaneseq
        %v3808 = vshrl.u32 %v3807, 7
        %v3809 = vsub.s32 6, %v3808
        %v3810 = vrot.slane %v3508, %v3809
        %v3811 = vlaneseq
        %v3812 = vshrl.u32 %v3811, 7
        %v3813 = vsub.s32 7, %v3812
        %v3814 = vrot.slane %v3508, %v3813
        %v3823 = vmul.f32 %v3750, %v3786
        %v3824 = vmul.f32 %v3751, %v3790
        %v3825 = vmul.f32 %v3752, %v3794
        %v3826 = vmul.f32 %v3753, %v3798
        %v3827 = vmul.f32 %v3754, %v3802
        %v3828 = vmul.f32 %v3755, %v3806
        %v3829 = vmul.f32 %v3756, %v3810
        %v3830 = vmul.f32 %v3757, %v3814
        %v3831 = vmul.f32 %v3758, %v3786
        %v3832 = vmul.f32 %v3759, %v3790
        %v3833 = vmul.f32 %v3760, %v3794
        %v3834 = vmul.f32 %v3761, %v3798
        %v3835 = vmul.f32 %v3762, %v3802
        %v3836 = vmul.f32 %v3763, %v3806
        %v3837 = vmul.f32 %v3764, %v3810
        %v3838 = vmul.f32 %v3765, %v3814
        %v3839 = vmul.f32 %v3766, %v3786
        %v3840 = vmul.f32 %v3767, %v3790
        %v3841 = vmul.f32 %v3768, %v3794
        %v3842 = vmul.f32 %v3769, %v3798
        %v3843 = vmul.f32 %v3770, %v3802
        %v3844 = vmul.f32 %v3771, %v3806
        %v3845 = vmul.f32 %v3772, %v3810
        %v3846 = vmul.f32 %v3773, %v3814
        %v3847 = vmul.f32 %v3774, %v3786
        %v3848 = vmul.f32 %v3775, %v3790
        %v3849 = vmul.f32 %v3776, %v3794
        %v3850 = vmul.f32 %v3777, %v3798
        %v3851 = vmul.f32 %v3778, %v3802
        %v3852 = vmul.f32 %v3779, %v3806
        %v3853 = vmul.f32 %v3780, %v3810
        %v3854 = vmul.f32 %v3781, %v3814
        %v3856 = vlaneseq
        %v3857 = vshrl.u32 %v3856, 7
        %v3858 = vsub.s32 0, %v3857
        %v3859 = vrot.slane %v3509, %v3858
        %v3860 = vlaneseq
        %v3861 = vshrl.u32 %v3860, 7
        %v3862 = vsub.s32 1, %v3861
        %v3863 = vrot.slane %v3509, %v3862
        %v3864 = vlaneseq
        %v3865 = vshrl.u32 %v3864, 7
        %v3866 = vsub.s32 2, %v3865
        %v3867 = vrot.slane %v3509, %v3866
        %v3868 = vlaneseq
        %v3869 = vshrl.u32 %v3868, 7
        %v3870 = vsub.s32 3, %v3869
        %v3871 = vrot.slane %v3509, %v3870
        %v3872 = vlaneseq
        %v3873 = vshrl.u32 %v3872, 7
        %v3874 = vsub.s32 4, %v3873
        %v3875 = vrot.slane %v3509, %v3874
        %v3876 = vlaneseq
        %v3877 = vshrl.u32 %v3876, 7
        %v3878 = vsub.s32 5, %v3877
        %v3879 = vrot.slane %v3509, %v3878
        %v3880 = vlaneseq
        %v3881 = vshrl.u32 %v3880, 7
        %v3882 = vsub.s32 6, %v3881
        %v3883 = vrot.slane %v3509, %v3882
        %v3884 = vlaneseq
        %v3885 = vshrl.u32 %v3884, 7
        %v3886 = vsub.s32 7, %v3885
        %v3887 = vrot.slane %v3509, %v3886
        %v3896 = vadd.f32 %v3823, %v3859
        %v3897 = vadd.f32 %v3824, %v3863
        %v3898 = vadd.f32 %v3825, %v3867
        %v3899 = vadd.f32 %v3826, %v3871
        %v3900 = vadd.f32 %v3827, %v3875
        %v3901 = vadd.f32 %v3828, %v3879
        %v3902 = vadd.f32 %v3829, %v3883
        %v3903 = vadd.f32 %v3830, %v3887
        %v3904 = vadd.f32 %v3831, %v3859
        %v3905 = vadd.f32 %v3832, %v3863
        %v3906 = vadd.f32 %v3833, %v3867
        %v3907 = vadd.f32 %v3834, %v3871
        %v3908 = vadd.f32 %v3835, %v3875
        %v3909 = vadd.f32 %v3836, %v3879
        %v3910 = vadd.f32 %v3837, %v3883
        %v3911 = vadd.f32 %v3838, %v3887
        %v3912 = vadd.f32 %v3839, %v3859
        %v3913 = vadd.f32 %v3840, %v3863
        %v3914 = vadd.f32 %v3841, %v3867
        %v3915 = vadd.f32 %v3842, %v3871
        %v3916 = vadd.f32 %v3843, %v3875
        %v3917 = vadd.f32 %v3844, %v3879
        %v3918 = vadd.f32 %v3845, %v3883
        %v3919 = vadd.f32 %v3846, %v3887
        %v3920 = vadd.f32 %v3847, %v3859
        %v3921 = vadd.f32 %v3848, %v3863
        %v3922 = vadd.f32 %v3849, %v3867
        %v3923 = vadd.f32 %v3850, %v3871
        %v3924 = vadd.f32 %v3851, %v3875
        %v3925 = vadd.f32 %v3852, %v3879
        %v3926 = vadd.f32 %v3853, %v3883
        %v3927 = vadd.f32 %v3854, %v3887
        %vm3928 = vcmp.gt.f32.partialorder %v3896, 0.0
        %vm3929 = vcmp.gt.f32.partialorder %v3897, 0.0
        %vm3930 = vcmp.gt.f32.partialorder %v3898, 0.0
        %vm3931 = vcmp.gt.f32.partialorder %v3899, 0.0
        %vm3932 = vcmp.gt.f32.partialorder %v3900, 0.0
        %vm3933 = vcmp.gt.f32.partialorder %v3901, 0.0
        %vm3934 = vcmp.gt.f32.partialorder %v3902, 0.0
        %vm3935 = vcmp.gt.f32.partialorder %v3903, 0.0
        %vm3936 = vcmp.gt.f32.partialorder %v3904, 0.0
        %vm3937 = vcmp.gt.f32.partialorder %v3905, 0.0
        %vm3938 = vcmp.gt.f32.partialorder %v3906, 0.0
        %vm3939 = vcmp.gt.f32.partialorder %v3907, 0.0
        %vm3940 = vcmp.gt.f32.partialorder %v3908, 0.0
        %vm3941 = vcmp.gt.f32.partialorder %v3909, 0.0
        %vm3942 = vcmp.gt.f32.partialorder %v3910, 0.0
        %vm3943 = vcmp.gt.f32.partialorder %v3911, 0.0
        %vm3944 = vcmp.gt.f32.partialorder %v3912, 0.0
        %vm3945 = vcmp.gt.f32.partialorder %v3913, 0.0
        %vm3946 = vcmp.gt.f32.partialorder %v3914, 0.0
        %vm3947 = vcmp.gt.f32.partialorder %v3915, 0.0
        %vm3948 = vcmp.gt.f32.partialorder %v3916, 0.0
        %vm3949 = vcmp.gt.f32.partialorder %v3917, 0.0
        %vm3950 = vcmp.gt.f32.partialorder %v3918, 0.0
        %vm3951 = vcmp.gt.f32.partialorder %v3919, 0.0
        %vm3952 = vcmp.gt.f32.partialorder %v3920, 0.0
        %vm3953 = vcmp.gt.f32.partialorder %v3921, 0.0
        %vm3954 = vcmp.gt.f32.partialorder %v3922, 0.0
        %vm3955 = vcmp.gt.f32.partialorder %v3923, 0.0
        %vm3956 = vcmp.gt.f32.partialorder %v3924, 0.0
        %vm3957 = vcmp.gt.f32.partialorder %v3925, 0.0
        %vm3958 = vcmp.gt.f32.partialorder %v3926, 0.0
        %vm3959 = vcmp.gt.f32.partialorder %v3927, 0.0
        %v3960 = vmul.f32 %v3896, 0.2
        %v3961 = vmul.f32 %v3897, 0.2
        %v3962 = vmul.f32 %v3898, 0.2
        %v3963 = vmul.f32 %v3899, 0.2
        %v3964 = vmul.f32 %v3900, 0.2
        %v3965 = vmul.f32 %v3901, 0.2
        %v3966 = vmul.f32 %v3902, 0.2
        %v3967 = vmul.f32 %v3903, 0.2
        %v3968 = vmul.f32 %v3904, 0.2
        %v3969 = vmul.f32 %v3905, 0.2
        %v3970 = vmul.f32 %v3906, 0.2
        %v3971 = vmul.f32 %v3907, 0.2
        %v3972 = vmul.f32 %v3908, 0.2
        %v3973 = vmul.f32 %v3909, 0.2
        %v3974 = vmul.f32 %v3910, 0.2
        %v3975 = vmul.f32 %v3911, 0.2
        %v3976 = vmul.f32 %v3912, 0.2
        %v3977 = vmul.f32 %v3913, 0.2
        %v3978 = vmul.f32 %v3914, 0.2
        %v3979 = vmul.f32 %v3915, 0.2
        %v3980 = vmul.f32 %v3916, 0.2
        %v3981 = vmul.f32 %v3917, 0.2
        %v3982 = vmul.f32 %v3918, 0.2
        %v3983 = vmul.f32 %v3919, 0.2
        %v3984 = vmul.f32 %v3920, 0.2
        %v3985 = vmul.f32 %v3921, 0.2
        %v3986 = vmul.f32 %v3922, 0.2
        %v3987 = vmul.f32 %v3923, 0.2
        %v3988 = vmul.f32 %v3924, 0.2
        %v3989 = vmul.f32 %v3925, 0.2
        %v3990 = vmul.f32 %v3926, 0.2
        %v3991 = vmul.f32 %v3927, 0.2
        %v3992 = vsel %vm3928, %v3896, %v3960
        %v3993 = vsel %vm3929, %v3897, %v3961
        %v3994 = vsel %vm3930, %v3898, %v3962
        %v3995 = vsel %vm3931, %v3899, %v3963
        %v3996 = vsel %vm3932, %v3900, %v3964
        %v3997 = vsel %vm3933, %v3901, %v3965
        %v3998 = vsel %vm3934, %v3902, %v3966
        %v3999 = vsel %vm3935, %v3903, %v3967
        %v4000 = vsel %vm3936, %v3904, %v3968
        %v4001 = vsel %vm3937, %v3905, %v3969
        %v4002 = vsel %vm3938, %v3906, %v3970
        %v4003 = vsel %vm3939, %v3907, %v3971
        %v4004 = vsel %vm3940, %v3908, %v3972
        %v4005 = vsel %vm3941, %v3909, %v3973
        %v4006 = vsel %vm3942, %v3910, %v3974
        %v4007 = vsel %vm3943, %v3911, %v3975
        %v4008 = vsel %vm3944, %v3912, %v3976
        %v4009 = vsel %vm3945, %v3913, %v3977
        %v4010 = vsel %vm3946, %v3914, %v3978
        %v4011 = vsel %vm3947, %v3915, %v3979
        %v4012 = vsel %vm3948, %v3916, %v3980
        %v4013 = vsel %vm3949, %v3917, %v3981
        %v4014 = vsel %vm3950, %v3918, %v3982
        %v4015 = vsel %vm3951, %v3919, %v3983
        %v4016 = vsel %vm3952, %v3920, %v3984
        %v4017 = vsel %vm3953, %v3921, %v3985
        %v4018 = vsel %vm3954, %v3922, %v3986
        %v4019 = vsel %vm3955, %v3923, %v3987
        %v4020 = vsel %vm3956, %v3924, %v3988
        %v4021 = vsel %vm3957, %v3925, %v3989
        %v4022 = vsel %vm3958, %v3926, %v3990
        %v4023 = vsel %vm3959, %v3927, %v3991
        %v4024 = vpack.c.bf16 %v4000, %v3992
        %v4025 = vpack.c.bf16 %v4001, %v3993
        %v4026 = vpack.c.bf16 %v4002, %v3994
        %v4027 = vpack.c.bf16 %v4003, %v3995
        %v4028 = vpack.c.bf16 %v4004, %v3996
        %v4029 = vpack.c.bf16 %v4005, %v3997
        %v4030 = vpack.c.bf16 %v4006, %v3998
        %v4031 = vpack.c.bf16 %v4007, %v3999
        %v4032 = vpack.c.bf16 %v4016, %v4008
        %v4033 = vpack.c.bf16 %v4017, %v4009
        %v4034 = vpack.c.bf16 %v4018, %v4010
        %v4035 = vpack.c.bf16 %v4019, %v4011
        %v4036 = vpack.c.bf16 %v4020, %v4012
        %v4037 = vpack.c.bf16 %v4021, %v4013
        %v4038 = vpack.c.bf16 %v4022, %v4014
        %v4039 = vpack.c.bf16 %v4023, %v4015
        %v4040 = vld [vmem:[#allocation12] sm:$0xff]
        %v4041 = vld [vmem:[#allocation12 + $0x8] sm:$0xff]
        %v4042 = vld [vmem:[#allocation12 + $0x10] sm:$0xff]
        %v4043 = vld [vmem:[#allocation12 + $0x18] sm:$0xff]
        %v4044 = vld [vmem:[#allocation12 + $0x20] sm:$0xff]
        %v4045 = vld [vmem:[#allocation12 + $0x28] sm:$0xff]
        %v4046 = vld [vmem:[#allocation12 + $0x30] sm:$0xff]
        %v4047 = vld [vmem:[#allocation12 + $0x38] sm:$0xff]
        %v4048 = vld [vmem:[#allocation12 + $0x40] sm:$0xff]
        %v4049 = vld [vmem:[#allocation12 + $0x48] sm:$0xff]
        %v4050 = vld [vmem:[#allocation12 + $0x50] sm:$0xff]
        %v4051 = vld [vmem:[#allocation12 + $0x58] sm:$0xff]
        %v4052 = vld [vmem:[#allocation12 + $0x60] sm:$0xff]
        %v4053 = vld [vmem:[#allocation12 + $0x68] sm:$0xff]
        %v4054 = vld [vmem:[#allocation12 + $0x70] sm:$0xff]
        %v4055 = vld [vmem:[#allocation12 + $0x78] sm:$0xff]
        %v4056 = vld [vmem:[#allocation12 + $0x80] sm:$0xff]
        %v4057 = vld [vmem:[#allocation12 + $0x88] sm:$0xff]
        %v4058 = vld [vmem:[#allocation12 + $0x90] sm:$0xff]
        %v4059 = vld [vmem:[#allocation12 + $0x98] sm:$0xff]
        %v4060 = vld [vmem:[#allocation12 + $0xa0] sm:$0xff]
        %v4061 = vld [vmem:[#allocation12 + $0xa8] sm:$0xff]
        %v4062 = vld [vmem:[#allocation12 + $0xb0] sm:$0xff]
        %v4063 = vld [vmem:[#allocation12 + $0xb8] sm:$0xff]
        %v4064 = vld [vmem:[#allocation12 + $0xc0] sm:$0xff]
        %v4065 = vld [vmem:[#allocation12 + $0xc8] sm:$0xff]
        %v4066 = vld [vmem:[#allocation12 + $0xd0] sm:$0xff]
        %v4067 = vld [vmem:[#allocation12 + $0xd8] sm:$0xff]
        %v4068 = vld [vmem:[#allocation12 + $0xe0] sm:$0xff]
        %v4069 = vld [vmem:[#allocation12 + $0xe8] sm:$0xff]
        %v4070 = vld [vmem:[#allocation12 + $0xf0] sm:$0xff]
        %v4071 = vld [vmem:[#allocation12 + $0xf8] sm:$0xff]
        %v4072 = vld [vmem:[#allocation12 + $0x100] sm:$0xff]
        %v4073 = vld [vmem:[#allocation12 + $0x108] sm:$0xff]
        %v4074 = vld [vmem:[#allocation12 + $0x110] sm:$0xff]
        %v4075 = vld [vmem:[#allocation12 + $0x118] sm:$0xff]
        %v4076 = vld [vmem:[#allocation12 + $0x120] sm:$0xff]
        %v4077 = vld [vmem:[#allocation12 + $0x128] sm:$0xff]
        %v4078 = vld [vmem:[#allocation12 + $0x130] sm:$0xff]
        %v4079 = vld [vmem:[#allocation12 + $0x138] sm:$0xff]
        %v4080 = vld [vmem:[#allocation12 + $0x140] sm:$0xff]
        %v4081 = vld [vmem:[#allocation12 + $0x148] sm:$0xff]
        %v4082 = vld [vmem:[#allocation12 + $0x150] sm:$0xff]
        %v4083 = vld [vmem:[#allocation12 + $0x158] sm:$0xff]
        %v4084 = vld [vmem:[#allocation12 + $0x160] sm:$0xff]
        %v4085 = vld [vmem:[#allocation12 + $0x168] sm:$0xff]
        %v4086 = vld [vmem:[#allocation12 + $0x170] sm:$0xff]
        %v4087 = vld [vmem:[#allocation12 + $0x178] sm:$0xff]
        %v4088 = vld [vmem:[#allocation12 + $0x180] sm:$0xff]
        %v4089 = vld [vmem:[#allocation12 + $0x188] sm:$0xff]
        %v4090 = vld [vmem:[#allocation12 + $0x190] sm:$0xff]
        %v4091 = vld [vmem:[#allocation12 + $0x198] sm:$0xff]
        %v4092 = vld [vmem:[#allocation12 + $0x1a0] sm:$0xff]
        %v4093 = vld [vmem:[#allocation12 + $0x1a8] sm:$0xff]
        %v4094 = vld [vmem:[#allocation12 + $0x1b0] sm:$0xff]
        %v4095 = vld [vmem:[#allocation12 + $0x1b8] sm:$0xff]
        %v4096 = vld [vmem:[#allocation12 + $0x1c0] sm:$0xff]
        %v4097 = vld [vmem:[#allocation12 + $0x1c8] sm:$0xff]
        %v4098 = vld [vmem:[#allocation12 + $0x1d0] sm:$0xff]
        %v4099 = vld [vmem:[#allocation12 + $0x1d8] sm:$0xff]
        %v4100 = vld [vmem:[#allocation12 + $0x1e0] sm:$0xff]
        %v4101 = vld [vmem:[#allocation12 + $0x1e8] sm:$0xff]
        %v4102 = vld [vmem:[#allocation12 + $0x1f0] sm:$0xff]
        %v4103 = vld [vmem:[#allocation12 + $0x1f8] sm:$0xff]
        %v4104 = vld [vmem:[#allocation12 + $0x200] sm:$0xff]
        %v4105 = vld [vmem:[#allocation12 + $0x208] sm:$0xff]
        %v4106 = vld [vmem:[#allocation12 + $0x210] sm:$0xff]
        %v4107 = vld [vmem:[#allocation12 + $0x218] sm:$0xff]
        %v4108 = vld [vmem:[#allocation12 + $0x220] sm:$0xff]
        %v4109 = vld [vmem:[#allocation12 + $0x228] sm:$0xff]
        %v4110 = vld [vmem:[#allocation12 + $0x230] sm:$0xff]
        %v4111 = vld [vmem:[#allocation12 + $0x238] sm:$0xff]
        %v4112 = vld [vmem:[#allocation12 + $0x240] sm:$0xff]
        %v4113 = vld [vmem:[#allocation12 + $0x248] sm:$0xff]
        %v4114 = vld [vmem:[#allocation12 + $0x250] sm:$0xff]
        %v4115 = vld [vmem:[#allocation12 + $0x258] sm:$0xff]
        %v4116 = vld [vmem:[#allocation12 + $0x260] sm:$0xff]
        %v4117 = vld [vmem:[#allocation12 + $0x268] sm:$0xff]
        %v4118 = vld [vmem:[#allocation12 + $0x270] sm:$0xff]
        %v4119 = vld [vmem:[#allocation12 + $0x278] sm:$0xff]
        %v4120 = vld [vmem:[#allocation12 + $0x280] sm:$0xff]
        %v4121 = vld [vmem:[#allocation12 + $0x288] sm:$0xff]
        %v4122 = vld [vmem:[#allocation12 + $0x290] sm:$0xff]
        %v4123 = vld [vmem:[#allocation12 + $0x298] sm:$0xff]
        %v4124 = vld [vmem:[#allocation12 + $0x2a0] sm:$0xff]
        %v4125 = vld [vmem:[#allocation12 + $0x2a8] sm:$0xff]
        %v4126 = vld [vmem:[#allocation12 + $0x2b0] sm:$0xff]
        %v4127 = vld [vmem:[#allocation12 + $0x2b8] sm:$0xff]
        %v4128 = vld [vmem:[#allocation12 + $0x2c0] sm:$0xff]
        %v4129 = vld [vmem:[#allocation12 + $0x2c8] sm:$0xff]
        %v4130 = vld [vmem:[#allocation12 + $0x2d0] sm:$0xff]
        %v4131 = vld [vmem:[#allocation12 + $0x2d8] sm:$0xff]
        %v4132 = vld [vmem:[#allocation12 + $0x2e0] sm:$0xff]
        %v4133 = vld [vmem:[#allocation12 + $0x2e8] sm:$0xff]
        %v4134 = vld [vmem:[#allocation12 + $0x2f0] sm:$0xff]
        %v4135 = vld [vmem:[#allocation12 + $0x2f8] sm:$0xff]
        %v4136 = vld [vmem:[#allocation12 + $0x300] sm:$0xff]
        %v4137 = vld [vmem:[#allocation12 + $0x308] sm:$0xff]
        %v4138 = vld [vmem:[#allocation12 + $0x310] sm:$0xff]
        %v4139 = vld [vmem:[#allocation12 + $0x318] sm:$0xff]
        %v4140 = vld [vmem:[#allocation12 + $0x320] sm:$0xff]
        %v4141 = vld [vmem:[#allocation12 + $0x328] sm:$0xff]
        %v4142 = vld [vmem:[#allocation12 + $0x330] sm:$0xff]
        %v4143 = vld [vmem:[#allocation12 + $0x338] sm:$0xff]
        %v4144 = vld [vmem:[#allocation12 + $0x340] sm:$0xff]
        %v4145 = vld [vmem:[#allocation12 + $0x348] sm:$0xff]
        %v4146 = vld [vmem:[#allocation12 + $0x350] sm:$0xff]
        %v4147 = vld [vmem:[#allocation12 + $0x358] sm:$0xff]
        %v4148 = vld [vmem:[#allocation12 + $0x360] sm:$0xff]
        %v4149 = vld [vmem:[#allocation12 + $0x368] sm:$0xff]
        %v4150 = vld [vmem:[#allocation12 + $0x370] sm:$0xff]
        %v4151 = vld [vmem:[#allocation12 + $0x378] sm:$0xff]
        %v4152 = vld [vmem:[#allocation12 + $0x380] sm:$0xff]
        %v4153 = vld [vmem:[#allocation12 + $0x388] sm:$0xff]
        %v4154 = vld [vmem:[#allocation12 + $0x390] sm:$0xff]
        %v4155 = vld [vmem:[#allocation12 + $0x398] sm:$0xff]
        %v4156 = vld [vmem:[#allocation12 + $0x3a0] sm:$0xff]
        %v4157 = vld [vmem:[#allocation12 + $0x3a8] sm:$0xff]
        %v4158 = vld [vmem:[#allocation12 + $0x3b0] sm:$0xff]
        %v4159 = vld [vmem:[#allocation12 + $0x3b8] sm:$0xff]
        %v4160 = vld [vmem:[#allocation12 + $0x3c0] sm:$0xff]
        %v4161 = vld [vmem:[#allocation12 + $0x3c8] sm:$0xff]
        %v4162 = vld [vmem:[#allocation12 + $0x3d0] sm:$0xff]
        %v4163 = vld [vmem:[#allocation12 + $0x3d8] sm:$0xff]
        %v4164 = vld [vmem:[#allocation12 + $0x3e0] sm:$0xff]
        %v4165 = vld [vmem:[#allocation12 + $0x3e8] sm:$0xff]
        %v4166 = vld [vmem:[#allocation12 + $0x3f0] sm:$0xff]
        %v4167 = vld [vmem:[#allocation12 + $0x3f8] sm:$0xff]
        %v4168 = vld [vmem:[#allocation4 + $0x1] sm:$0x3]
        %v4170 = vlaneseq
        %v4171 = vshrl.u32 %v4170, 7
        %v4172 = vsub.s32 0, %v4171
        %v4173 = vrot.slane %v4168, %v4172
        %v4174 = vlaneseq
        %v4175 = vshrl.u32 %v4174, 7
        %v4176 = vsub.s32 1, %v4175
        %v4177 = vrot.slane %v4168, %v4176
        %v4308 = vunpack.c.l.b16 %v4040
        %v4309 = vunpack.c.h.b16 %v4040
        %v4310 = vunpack.c.l.b16 %v4041
        %v4311 = vunpack.c.h.b16 %v4041
        %v4312 = vunpack.c.l.b16 %v4042
        %v4313 = vunpack.c.h.b16 %v4042
        %v4314 = vunpack.c.l.b16 %v4043
        %v4315 = vunpack.c.h.b16 %v4043
        %v4316 = vunpack.c.l.b16 %v4044
        %v4317 = vunpack.c.h.b16 %v4044
        %v4318 = vunpack.c.l.b16 %v4045
        %v4319 = vunpack.c.h.b16 %v4045
        %v4320 = vunpack.c.l.b16 %v4046
        %v4321 = vunpack.c.h.b16 %v4046
        %v4322 = vunpack.c.l.b16 %v4047
        %v4323 = vunpack.c.h.b16 %v4047
        %v4324 = vunpack.c.l.b16 %v4048
        %v4325 = vunpack.c.h.b16 %v4048
        %v4326 = vunpack.c.l.b16 %v4049
        %v4327 = vunpack.c.h.b16 %v4049
        %v4328 = vunpack.c.l.b16 %v4050
        %v4329 = vunpack.c.h.b16 %v4050
        %v4330 = vunpack.c.l.b16 %v4051
        %v4331 = vunpack.c.h.b16 %v4051
        %v4332 = vunpack.c.l.b16 %v4052
        %v4333 = vunpack.c.h.b16 %v4052
        %v4334 = vunpack.c.l.b16 %v4053
        %v4335 = vunpack.c.h.b16 %v4053
        %v4336 = vunpack.c.l.b16 %v4054
        %v4337 = vunpack.c.h.b16 %v4054
        %v4338 = vunpack.c.l.b16 %v4055
        %v4339 = vunpack.c.h.b16 %v4055
        %v4340 = vunpack.c.l.b16 %v4056
        %v4341 = vunpack.c.h.b16 %v4056
        %v4342 = vunpack.c.l.b16 %v4057
        %v4343 = vunpack.c.h.b16 %v4057
        %v4344 = vunpack.c.l.b16 %v4058
        %v4345 = vunpack.c.h.b16 %v4058
        %v4346 = vunpack.c.l.b16 %v4059
        %v4347 = vunpack.c.h.b16 %v4059
        %v4348 = vunpack.c.l.b16 %v4060
        %v4349 = vunpack.c.h.b16 %v4060
        %v4350 = vunpack.c.l.b16 %v4061
        %v4351 = vunpack.c.h.b16 %v4061
        %v4352 = vunpack.c.l.b16 %v4062
        %v4353 = vunpack.c.h.b16 %v4062
        %v4354 = vunpack.c.l.b16 %v4063
        %v4355 = vunpack.c.h.b16 %v4063
        %v4356 = vunpack.c.l.b16 %v4064
        %v4357 = vunpack.c.h.b16 %v4064
        %v4358 = vunpack.c.l.b16 %v4065
        %v4359 = vunpack.c.h.b16 %v4065
        %v4360 = vunpack.c.l.b16 %v4066
        %v4361 = vunpack.c.h.b16 %v4066
        %v4362 = vunpack.c.l.b16 %v4067
        %v4363 = vunpack.c.h.b16 %v4067
        %v4364 = vunpack.c.l.b16 %v4068
        %v4365 = vunpack.c.h.b16 %v4068
        %v4366 = vunpack.c.l.b16 %v4069
        %v4367 = vunpack.c.h.b16 %v4069
        %v4368 = vunpack.c.l.b16 %v4070
        %v4369 = vunpack.c.h.b16 %v4070
        %v4370 = vunpack.c.l.b16 %v4071
        %v4371 = vunpack.c.h.b16 %v4071
        %v4372 = vunpack.c.l.b16 %v4072
        %v4373 = vunpack.c.h.b16 %v4072
        %v4374 = vunpack.c.l.b16 %v4073
        %v4375 = vunpack.c.h.b16 %v4073
        %v4376 = vunpack.c.l.b16 %v4074
        %v4377 = vunpack.c.h.b16 %v4074
        %v4378 = vunpack.c.l.b16 %v4075
        %v4379 = vunpack.c.h.b16 %v4075
        %v4380 = vunpack.c.l.b16 %v4076
        %v4381 = vunpack.c.h.b16 %v4076
        %v4382 = vunpack.c.l.b16 %v4077
        %v4383 = vunpack.c.h.b16 %v4077
        %v4384 = vunpack.c.l.b16 %v4078
        %v4385 = vunpack.c.h.b16 %v4078
        %v4386 = vunpack.c.l.b16 %v4079
        %v4387 = vunpack.c.h.b16 %v4079
        %v4388 = vunpack.c.l.b16 %v4080
        %v4389 = vunpack.c.h.b16 %v4080
        %v4390 = vunpack.c.l.b16 %v4081
        %v4391 = vunpack.c.h.b16 %v4081
        %v4392 = vunpack.c.l.b16 %v4082
        %v4393 = vunpack.c.h.b16 %v4082
        %v4394 = vunpack.c.l.b16 %v4083
        %v4395 = vunpack.c.h.b16 %v4083
        %v4396 = vunpack.c.l.b16 %v4084
        %v4397 = vunpack.c.h.b16 %v4084
        %v4398 = vunpack.c.l.b16 %v4085
        %v4399 = vunpack.c.h.b16 %v4085
        %v4400 = vunpack.c.l.b16 %v4086
        %v4401 = vunpack.c.h.b16 %v4086
        %v4402 = vunpack.c.l.b16 %v4087
        %v4403 = vunpack.c.h.b16 %v4087
        %v4404 = vunpack.c.l.b16 %v4088
        %v4405 = vunpack.c.h.b16 %v4088
        %v4406 = vunpack.c.l.b16 %v4089
        %v4407 = vunpack.c.h.b16 %v4089
        %v4408 = vunpack.c.l.b16 %v4090
        %v4409 = vunpack.c.h.b16 %v4090
        %v4410 = vunpack.c.l.b16 %v4091
        %v4411 = vunpack.c.h.b16 %v4091
        %v4412 = vunpack.c.l.b16 %v4092
        %v4413 = vunpack.c.h.b16 %v4092
        %v4414 = vunpack.c.l.b16 %v4093
        %v4415 = vunpack.c.h.b16 %v4093
        %v4416 = vunpack.c.l.b16 %v4094
        %v4417 = vunpack.c.h.b16 %v4094
        %v4418 = vunpack.c.l.b16 %v4095
        %v4419 = vunpack.c.h.b16 %v4095
        %v4420 = vunpack.c.l.b16 %v4096
        %v4421 = vunpack.c.h.b16 %v4096
        %v4422 = vunpack.c.l.b16 %v4097
        %v4423 = vunpack.c.h.b16 %v4097
        %v4424 = vunpack.c.l.b16 %v4098
        %v4425 = vunpack.c.h.b16 %v4098
        %v4426 = vunpack.c.l.b16 %v4099
        %v4427 = vunpack.c.h.b16 %v4099
        %v4428 = vunpack.c.l.b16 %v4100
        %v4429 = vunpack.c.h.b16 %v4100
        %v4430 = vunpack.c.l.b16 %v4101
        %v4431 = vunpack.c.h.b16 %v4101
        %v4432 = vunpack.c.l.b16 %v4102
        %v4433 = vunpack.c.h.b16 %v4102
        %v4434 = vunpack.c.l.b16 %v4103
        %v4435 = vunpack.c.h.b16 %v4103
        %v4436 = vunpack.c.l.b16 %v4104
        %v4437 = vunpack.c.h.b16 %v4104
        %v4438 = vunpack.c.l.b16 %v4105
        %v4439 = vunpack.c.h.b16 %v4105
        %v4440 = vunpack.c.l.b16 %v4106
        %v4441 = vunpack.c.h.b16 %v4106
        %v4442 = vunpack.c.l.b16 %v4107
        %v4443 = vunpack.c.h.b16 %v4107
        %v4444 = vunpack.c.l.b16 %v4108
        %v4445 = vunpack.c.h.b16 %v4108
        %v4446 = vunpack.c.l.b16 %v4109
        %v4447 = vunpack.c.h.b16 %v4109
        %v4448 = vunpack.c.l.b16 %v4110
        %v4449 = vunpack.c.h.b16 %v4110
        %v4450 = vunpack.c.l.b16 %v4111
        %v4451 = vunpack.c.h.b16 %v4111
        %v4452 = vunpack.c.l.b16 %v4112
        %v4453 = vunpack.c.h.b16 %v4112
        %v4454 = vunpack.c.l.b16 %v4113
        %v4455 = vunpack.c.h.b16 %v4113
        %v4456 = vunpack.c.l.b16 %v4114
        %v4457 = vunpack.c.h.b16 %v4114
        %v4458 = vunpack.c.l.b16 %v4115
        %v4459 = vunpack.c.h.b16 %v4115
        %v4460 = vunpack.c.l.b16 %v4116
        %v4461 = vunpack.c.h.b16 %v4116
        %v4462 = vunpack.c.l.b16 %v4117
        %v4463 = vunpack.c.h.b16 %v4117
        %v4464 = vunpack.c.l.b16 %v4118
        %v4465 = vunpack.c.h.b16 %v4118
        %v4466 = vunpack.c.l.b16 %v4119
        %v4467 = vunpack.c.h.b16 %v4119
        %v4468 = vunpack.c.l.b16 %v4120
        %v4469 = vunpack.c.h.b16 %v4120
        %v4470 = vunpack.c.l.b16 %v4121
        %v4471 = vunpack.c.h.b16 %v4121
        %v4472 = vunpack.c.l.b16 %v4122
        %v4473 = vunpack.c.h.b16 %v4122
        %v4474 = vunpack.c.l.b16 %v4123
        %v4475 = vunpack.c.h.b16 %v4123
        %v4476 = vunpack.c.l.b16 %v4124
        %v4477 = vunpack.c.h.b16 %v4124
        %v4478 = vunpack.c.l.b16 %v4125
        %v4479 = vunpack.c.h.b16 %v4125
        %v4480 = vunpack.c.l.b16 %v4126
        %v4481 = vunpack.c.h.b16 %v4126
        %v4482 = vunpack.c.l.b16 %v4127
        %v4483 = vunpack.c.h.b16 %v4127
        %v4484 = vunpack.c.l.b16 %v4128
        %v4485 = vunpack.c.h.b16 %v4128
        %v4486 = vunpack.c.l.b16 %v4129
        %v4487 = vunpack.c.h.b16 %v4129
        %v4488 = vunpack.c.l.b16 %v4130
        %v4489 = vunpack.c.h.b16 %v4130
        %v4490 = vunpack.c.l.b16 %v4131
        %v4491 = vunpack.c.h.b16 %v4131
        %v4492 = vunpack.c.l.b16 %v4132
        %v4493 = vunpack.c.h.b16 %v4132
        %v4494 = vunpack.c.l.b16 %v4133
        %v4495 = vunpack.c.h.b16 %v4133
        %v4496 = vunpack.c.l.b16 %v4134
        %v4497 = vunpack.c.h.b16 %v4134
        %v4498 = vunpack.c.l.b16 %v4135
        %v4499 = vunpack.c.h.b16 %v4135
        %v4500 = vunpack.c.l.b16 %v4136
        %v4501 = vunpack.c.h.b16 %v4136
        %v4502 = vunpack.c.l.b16 %v4137
        %v4503 = vunpack.c.h.b16 %v4137
        %v4504 = vunpack.c.l.b16 %v4138
        %v4505 = vunpack.c.h.b16 %v4138
        %v4506 = vunpack.c.l.b16 %v4139
        %v4507 = vunpack.c.h.b16 %v4139
        %v4508 = vunpack.c.l.b16 %v4140
        %v4509 = vunpack.c.h.b16 %v4140
        %v4510 = vunpack.c.l.b16 %v4141
        %v4511 = vunpack.c.h.b16 %v4141
        %v4512 = vunpack.c.l.b16 %v4142
        %v4513 = vunpack.c.h.b16 %v4142
        %v4514 = vunpack.c.l.b16 %v4143
        %v4515 = vunpack.c.h.b16 %v4143
        %v4516 = vunpack.c.l.b16 %v4144
        %v4517 = vunpack.c.h.b16 %v4144
        %v4518 = vunpack.c.l.b16 %v4145
        %v4519 = vunpack.c.h.b16 %v4145
        %v4520 = vunpack.c.l.b16 %v4146
        %v4521 = vunpack.c.h.b16 %v4146
        %v4522 = vunpack.c.l.b16 %v4147
        %v4523 = vunpack.c.h.b16 %v4147
        %v4524 = vunpack.c.l.b16 %v4148
        %v4525 = vunpack.c.h.b16 %v4148
        %v4526 = vunpack.c.l.b16 %v4149
        %v4527 = vunpack.c.h.b16 %v4149
        %v4528 = vunpack.c.l.b16 %v4150
        %v4529 = vunpack.c.h.b16 %v4150
        %v4530 = vunpack.c.l.b16 %v4151
        %v4531 = vunpack.c.h.b16 %v4151
        %v4532 = vunpack.c.l.b16 %v4152
        %v4533 = vunpack.c.h.b16 %v4152
        %v4534 = vunpack.c.l.b16 %v4153
        %v4535 = vunpack.c.h.b16 %v4153
        %v4536 = vunpack.c.l.b16 %v4154
        %v4537 = vunpack.c.h.b16 %v4154
        %v4538 = vunpack.c.l.b16 %v4155
        %v4539 = vunpack.c.h.b16 %v4155
        %v4540 = vunpack.c.l.b16 %v4156
        %v4541 = vunpack.c.h.b16 %v4156
        %v4542 = vunpack.c.l.b16 %v4157
        %v4543 = vunpack.c.h.b16 %v4157
        %v4544 = vunpack.c.l.b16 %v4158
        %v4545 = vunpack.c.h.b16 %v4158
        %v4546 = vunpack.c.l.b16 %v4159
        %v4547 = vunpack.c.h.b16 %v4159
        %v4548 = vunpack.c.l.b16 %v4160
        %v4549 = vunpack.c.h.b16 %v4160
        %v4550 = vunpack.c.l.b16 %v4161
        %v4551 = vunpack.c.h.b16 %v4161
        %v4552 = vunpack.c.l.b16 %v4162
        %v4553 = vunpack.c.h.b16 %v4162
        %v4554 = vunpack.c.l.b16 %v4163
        %v4555 = vunpack.c.h.b16 %v4163
        %v4556 = vunpack.c.l.b16 %v4164
        %v4557 = vunpack.c.h.b16 %v4164
        %v4558 = vunpack.c.l.b16 %v4165
        %v4559 = vunpack.c.h.b16 %v4165
        %v4560 = vunpack.c.l.b16 %v4166
        %v4561 = vunpack.c.h.b16 %v4166
        %v4562 = vunpack.c.l.b16 %v4167
        %v4563 = vunpack.c.h.b16 %v4167
        %v4564 = vpack.c.b16 %v4310, %v4308
        %v4565 = vpack.c.b16 %v4311, %v4309
        %v4566 = vpack.c.b16 %v4314, %v4312
        %v4567 = vpack.c.b16 %v4315, %v4313
        %v4568 = vpack.c.b16 %v4318, %v4316
        %v4569 = vpack.c.b16 %v4319, %v4317
        %v4570 = vpack.c.b16 %v4322, %v4320
        %v4571 = vpack.c.b16 %v4323, %v4321
        %v4572 = vpack.c.b16 %v4326, %v4324
        %v4573 = vpack.c.b16 %v4327, %v4325
        %v4574 = vpack.c.b16 %v4330, %v4328
        %v4575 = vpack.c.b16 %v4331, %v4329
        %v4576 = vpack.c.b16 %v4334, %v4332
        %v4577 = vpack.c.b16 %v4335, %v4333
        %v4578 = vpack.c.b16 %v4338, %v4336
        %v4579 = vpack.c.b16 %v4339, %v4337
        %v4580 = vpack.c.b16 %v4342, %v4340
        %v4581 = vpack.c.b16 %v4343, %v4341
        %v4582 = vpack.c.b16 %v4346, %v4344
        %v4583 = vpack.c.b16 %v4347, %v4345
        %v4584 = vpack.c.b16 %v4350, %v4348
        %v4585 = vpack.c.b16 %v4351, %v4349
        %v4586 = vpack.c.b16 %v4354, %v4352
        %v4587 = vpack.c.b16 %v4355, %v4353
        %v4588 = vpack.c.b16 %v4358, %v4356
        %v4589 = vpack.c.b16 %v4359, %v4357
        %v4590 = vpack.c.b16 %v4362, %v4360
        %v4591 = vpack.c.b16 %v4363, %v4361
        %v4592 = vpack.c.b16 %v4366, %v4364
        %v4593 = vpack.c.b16 %v4367, %v4365
        %v4594 = vpack.c.b16 %v4370, %v4368
        %v4595 = vpack.c.b16 %v4371, %v4369
        %v4596 = vpack.c.b16 %v4374, %v4372
        %v4597 = vpack.c.b16 %v4375, %v4373
        %v4598 = vpack.c.b16 %v4378, %v4376
        %v4599 = vpack.c.b16 %v4379, %v4377
        %v4600 = vpack.c.b16 %v4382, %v4380
        %v4601 = vpack.c.b16 %v4383, %v4381
        %v4602 = vpack.c.b16 %v4386, %v4384
        %v4603 = vpack.c.b16 %v4387, %v4385
        %v4604 = vpack.c.b16 %v4390, %v4388
        %v4605 = vpack.c.b16 %v4391, %v4389
        %v4606 = vpack.c.b16 %v4394, %v4392
        %v4607 = vpack.c.b16 %v4395, %v4393
        %v4608 = vpack.c.b16 %v4398, %v4396
        %v4609 = vpack.c.b16 %v4399, %v4397
        %v4610 = vpack.c.b16 %v4402, %v4400
        %v4611 = vpack.c.b16 %v4403, %v4401
        %v4612 = vpack.c.b16 %v4406, %v4404
        %v4613 = vpack.c.b16 %v4407, %v4405
        %v4614 = vpack.c.b16 %v4410, %v4408
        %v4615 = vpack.c.b16 %v4411, %v4409
        %v4616 = vpack.c.b16 %v4414, %v4412
        %v4617 = vpack.c.b16 %v4415, %v4413
        %v4618 = vpack.c.b16 %v4418, %v4416
        %v4619 = vpack.c.b16 %v4419, %v4417
        %v4620 = vpack.c.b16 %v4422, %v4420
        %v4621 = vpack.c.b16 %v4423, %v4421
        %v4622 = vpack.c.b16 %v4426, %v4424
        %v4623 = vpack.c.b16 %v4427, %v4425
        %v4624 = vpack.c.b16 %v4430, %v4428
        %v4625 = vpack.c.b16 %v4431, %v4429
        %v4626 = vpack.c.b16 %v4434, %v4432
        %v4627 = vpack.c.b16 %v4435, %v4433
        %v4628 = vpack.c.b16 %v4438, %v4436
        %v4629 = vpack.c.b16 %v4439, %v4437
        %v4630 = vpack.c.b16 %v4442, %v4440
        %v4631 = vpack.c.b16 %v4443, %v4441
        %v4632 = vpack.c.b16 %v4446, %v4444
        %v4633 = vpack.c.b16 %v4447, %v4445
        %v4634 = vpack.c.b16 %v4450, %v4448
        %v4635 = vpack.c.b16 %v4451, %v4449
        %v4636 = vpack.c.b16 %v4454, %v4452
        %v4637 = vpack.c.b16 %v4455, %v4453
        %v4638 = vpack.c.b16 %v4458, %v4456
        %v4639 = vpack.c.b16 %v4459, %v4457
        %v4640 = vpack.c.b16 %v4462, %v4460
        %v4641 = vpack.c.b16 %v4463, %v4461
        %v4642 = vpack.c.b16 %v4466, %v4464
        %v4643 = vpack.c.b16 %v4467, %v4465
        %v4644 = vpack.c.b16 %v4470, %v4468
        %v4645 = vpack.c.b16 %v4471, %v4469
        %v4646 = vpack.c.b16 %v4474, %v4472
        %v4647 = vpack.c.b16 %v4475, %v4473
        %v4648 = vpack.c.b16 %v4478, %v4476
        %v4649 = vpack.c.b16 %v4479, %v4477
        %v4650 = vpack.c.b16 %v4482, %v4480
        %v4651 = vpack.c.b16 %v4483, %v4481
        %v4652 = vpack.c.b16 %v4486, %v4484
        %v4653 = vpack.c.b16 %v4487, %v4485
        %v4654 = vpack.c.b16 %v4490, %v4488
        %v4655 = vpack.c.b16 %v4491, %v4489
        %v4656 = vpack.c.b16 %v4494, %v4492
        %v4657 = vpack.c.b16 %v4495, %v4493
        %v4658 = vpack.c.b16 %v4498, %v4496
        %v4659 = vpack.c.b16 %v4499, %v4497
        %v4660 = vpack.c.b16 %v4502, %v4500
        %v4661 = vpack.c.b16 %v4503, %v4501
        %v4662 = vpack.c.b16 %v4506, %v4504
        %v4663 = vpack.c.b16 %v4507, %v4505
        %v4664 = vpack.c.b16 %v4510, %v4508
        %v4665 = vpack.c.b16 %v4511, %v4509
        %v4666 = vpack.c.b16 %v4514, %v4512
        %v4667 = vpack.c.b16 %v4515, %v4513
        %v4668 = vpack.c.b16 %v4518, %v4516
        %v4669 = vpack.c.b16 %v4519, %v4517
        %v4670 = vpack.c.b16 %v4522, %v4520
        %v4671 = vpack.c.b16 %v4523, %v4521
        %v4672 = vpack.c.b16 %v4526, %v4524
        %v4673 = vpack.c.b16 %v4527, %v4525
        %v4674 = vpack.c.b16 %v4530, %v4528
        %v4675 = vpack.c.b16 %v4531, %v4529
        %v4676 = vpack.c.b16 %v4534, %v4532
        %v4677 = vpack.c.b16 %v4535, %v4533
        %v4678 = vpack.c.b16 %v4538, %v4536
        %v4679 = vpack.c.b16 %v4539, %v4537
        %v4680 = vpack.c.b16 %v4542, %v4540
        %v4681 = vpack.c.b16 %v4543, %v4541
        %v4682 = vpack.c.b16 %v4546, %v4544
        %v4683 = vpack.c.b16 %v4547, %v4545
        %v4684 = vpack.c.b16 %v4550, %v4548
        %v4685 = vpack.c.b16 %v4551, %v4549
        %v4686 = vpack.c.b16 %v4554, %v4552
        %v4687 = vpack.c.b16 %v4555, %v4553
        %v4688 = vpack.c.b16 %v4558, %v4556
        %v4689 = vpack.c.b16 %v4559, %v4557
        %v4690 = vpack.c.b16 %v4562, %v4560
        %v4691 = vpack.c.b16 %v4563, %v4561
        %4820 = vmatprep.subr.bf16.mxu0 %v4565
        %4821 = vmatpush1.bf16.msra.mxu0 %v4564
        %4822 = vmatprep.subr.bf16.mxu0 %v4567
        %4823 = vmatpush1.bf16.msra.mxu0 %v4566
        %4824 = vmatprep.subr.bf16.mxu0 %v4569
        %4825 = vmatpush1.bf16.msra.mxu0 %v4568
        %4826 = vmatprep.subr.bf16.mxu0 %v4571
        %4827 = vmatpush1.bf16.msra.mxu0 %v4570
        %4828 = vmatprep.subr.bf16.mxu0 %v4573
        %4829 = vmatpush1.bf16.msra.mxu0 %v4572
        %4830 = vmatprep.subr.bf16.mxu0 %v4575
        %4831 = vmatpush1.bf16.msra.mxu0 %v4574
        %4832 = vmatprep.subr.bf16.mxu0 %v4577
        %4833 = vmatpush1.bf16.msra.mxu0 %v4576
        %4834 = vmatprep.subr.bf16.mxu0 %v4579
        %4835 = vmatpush1.bf16.msra.mxu0 %v4578
        %4836 = vmatprep.subr.bf16.mxu0 %v4581
        %4837 = vmatpush1.bf16.msra.mxu0 %v4580
        %4838 = vmatprep.subr.bf16.mxu0 %v4583
        %4839 = vmatpush1.bf16.msra.mxu0 %v4582
        %4840 = vmatprep.subr.bf16.mxu0 %v4585
        %4841 = vmatpush1.bf16.msra.mxu0 %v4584
        %4842 = vmatprep.subr.bf16.mxu0 %v4587
        %4843 = vmatpush1.bf16.msra.mxu0 %v4586
        %4844 = vmatprep.subr.bf16.mxu0 %v4589
        %4845 = vmatpush1.bf16.msra.mxu0 %v4588
        %4846 = vmatprep.subr.bf16.mxu0 %v4591
        %4847 = vmatpush1.bf16.msra.mxu0 %v4590
        %4848 = vmatprep.subr.bf16.mxu0 %v4593
        %4849 = vmatpush1.bf16.msra.mxu0 %v4592
        %4850 = vmatprep.subr.bf16.mxu0 %v4595
        %4851 = vmatpush1.bf16.msra.mxu0 %v4594
        %4852 = vmatprep.mubr.bf16.mxu0 %v4025
        %4853 = vmatmul.mubr.bf16.gmra.mrb[0].mxu0 %v4024
        %v4854 = vpop.f32.mrb[0].mxu0
        %v4855 = vadd.f32 %v4173, %v4854
        %v4856 = vpop.f32.mrb[0].mxu0
        %v4857 = vadd.f32 %v4177, %v4856
        %v4858 = vpop.f32.mrb[0].mxu0
        %v4859 = vadd.f32 %v4173, %v4858
        %v4860 = vpop.f32.mrb[0].mxu0
        %v4861 = vadd.f32 %v4177, %v4860
        %4862 = vmatprep.mubr.bf16.mxu0 %v4033
        %4863 = vmatmul.mubr.bf16.gmra.mrb[0].mxu0 %v4032
        %v4864 = vpop.f32.mrb[0].mxu0
        %v4865 = vadd.f32 %v4173, %v4864
        %v4866 = vpop.f32.mrb[0].mxu0
        %v4867 = vadd.f32 %v4177, %v4866
        %v4868 = vpop.f32.mrb[0].mxu0
        %v4869 = vadd.f32 %v4173, %v4868
        %v4870 = vpop.f32.mrb[0].mxu0
        %v4871 = vadd.f32 %v4177, %v4870
        %4872 = vdwg.mxu0
        %4873 = vmatprep.subr.bf16.mxu0 %v4597
        %4874 = vmatpush1.bf16.msra.mxu0 %v4596
        %4875 = vmatprep.subr.bf16.mxu0 %v4599
        %4876 = vmatpush1.bf16.msra.mxu0 %v4598
        %4877 = vmatprep.subr.bf16.mxu0 %v4601
        %4878 = vmatpush1.bf16.msra.mxu0 %v4600
        %4879 = vmatprep.subr.bf16.mxu0 %v4603
        %4880 = vmatpush1.bf16.msra.mxu0 %v4602
        %4881 = vmatprep.subr.bf16.mxu0 %v4605
        %4882 = vmatpush1.bf16.msra.mxu0 %v4604
        %4883 = vmatprep.subr.bf16.mxu0 %v4607
        %4884 = vmatpush1.bf16.msra.mxu0 %v4606
        %4885 = vmatprep.subr.bf16.mxu0 %v4609
        %4886 = vmatpush1.bf16.msra.mxu0 %v4608
        %4887 = vmatprep.subr.bf16.mxu0 %v4611
        %4888 = vmatpush1.bf16.msra.mxu0 %v4610
        %4889 = vmatprep.subr.bf16.mxu0 %v4613
        %4890 = vmatpush1.bf16.msra.mxu0 %v4612
        %4891 = vmatprep.subr.bf16.mxu0 %v4615
        %4892 = vmatpush1.bf16.msra.mxu0 %v4614
        %4893 = vmatprep.subr.bf16.mxu0 %v4617
        %4894 = vmatpush1.bf16.msra.mxu0 %v4616
        %4895 = vmatprep.subr.bf16.mxu0 %v4619
        %4896 = vmatpush1.bf16.msra.mxu0 %v4618
        %4897 = vmatprep.subr.bf16.mxu0 %v4621
        %4898 = vmatpush1.bf16.msra.mxu0 %v4620
        %4899 = vmatprep.subr.bf16.mxu0 %v4623
        %4900 = vmatpush1.bf16.msra.mxu0 %v4622
        %4901 = vmatprep.subr.bf16.mxu0 %v4625
        %4902 = vmatpush1.bf16.msra.mxu0 %v4624
        %4903 = vmatprep.subr.bf16.mxu0 %v4627
        %4904 = vmatpush1.bf16.msra.mxu0 %v4626
        %4905 = vmatprep.mubr.bf16.mxu0 %v4027
        %4906 = vmatmul.mubr.bf16.gmra.mrb[0].mxu0 %v4026
        %v4907 = vpop.f32.mrb[0].mxu0
        %v4908 = vadd.f32 %v4855, %v4907
        %v4909 = vpop.f32.mrb[0].mxu0
        %v4910 = vadd.f32 %v4857, %v4909
        %v4911 = vpop.f32.mrb[0].mxu0
        %v4912 = vadd.f32 %v4859, %v4911
        %v4913 = vpop.f32.mrb[0].mxu0
        %v4914 = vadd.f32 %v4861, %v4913
        %4915 = vmatprep.mubr.bf16.mxu0 %v4035
        %4916 = vmatmul.mubr.bf16.gmra.mrb[0].mxu0 %v4034
        %v4917 = vpop.f32.mrb[0].mxu0
        %v4918 = vadd.f32 %v4865, %v4917
        %v4919 = vpop.f32.mrb[0].mxu0
        %v4920 = vadd.f32 %v4867, %v4919
        %v4921 = vpop.f32.mrb[0].mxu0
        %v4922 = vadd.f32 %v4869, %v4921
        %v4923 = vpop.f32.mrb[0].mxu0
        %v4924 = vadd.f32 %v4871, %v4923
        %4925 = vdwg.mxu0
        %4926 = vmatprep.subr.bf16.mxu0 %v4629
        %4927 = vmatpush1.bf16.msra.mxu0 %v4628
        %4928 = vmatprep.subr.bf16.mxu0 %v4631
        %4929 = vmatpush1.bf16.msra.mxu0 %v4630
        %4930 = vmatprep.subr.bf16.mxu0 %v4633
        %4931 = vmatpush1.bf16.msra.mxu0 %v4632
        %4932 = vmatprep.subr.bf16.mxu0 %v4635
        %4933 = vmatpush1.bf16.msra.mxu0 %v4634
        %4934 = vmatprep.subr.bf16.mxu0 %v4637
        %4935 = vmatpush1.bf16.msra.mxu0 %v4636
        %4936 = vmatprep.subr.bf16.mxu0 %v4639
        %4937 = vmatpush1.bf16.msra.mxu0 %v4638
        %4938 = vmatprep.subr.bf16.mxu0 %v4641
        %4939 = vmatpush1.bf16.msra.mxu0 %v4640
        %4940 = vmatprep.subr.bf16.mxu0 %v4643
        %4941 = vmatpush1.bf16.msra.mxu0 %v4642
        %4942 = vmatprep.subr.bf16.mxu0 %v4645
        %4943 = vmatpush1.bf16.msra.mxu0 %v4644
        %4944 = vmatprep.subr.bf16.mxu0 %v4647
        %4945 = vmatpush1.bf16.msra.mxu0 %v4646
        %4946 = vmatprep.subr.bf16.mxu0 %v4649
        %4947 = vmatpush1.bf16.msra.mxu0 %v4648
        %4948 = vmatprep.subr.bf16.mxu0 %v4651
        %4949 = vmatpush1.bf16.msra.mxu0 %v4650
        %4950 = vmatprep.subr.bf16.mxu0 %v4653
        %4951 = vmatpush1.bf16.msra.mxu0 %v4652
        %4952 = vmatprep.subr.bf16.mxu0 %v4655
        %4953 = vmatpush1.bf16.msra.mxu0 %v4654
        %4954 = vmatprep.subr.bf16.mxu0 %v4657
        %4955 = vmatpush1.bf16.msra.mxu0 %v4656
        %4956 = vmatprep.subr.bf16.mxu0 %v4659
        %4957 = vmatpush1.bf16.msra.mxu0 %v4658
        %4958 = vmatprep.mubr.bf16.mxu0 %v4029
        %4959 = vmatmul.mubr.bf16.gmra.mrb[0].mxu0 %v4028
        %v4960 = vpop.f32.mrb[0].mxu0
        %v4961 = vadd.f32 %v4908, %v4960
        %v4962 = vpop.f32.mrb[0].mxu0
        %v4963 = vadd.f32 %v4910, %v4962
        %v4964 = vpop.f32.mrb[0].mxu0
        %v4965 = vadd.f32 %v4912, %v4964
        %v4966 = vpop.f32.mrb[0].mxu0
        %v4967 = vadd.f32 %v4914, %v4966
        %4968 = vmatprep.mubr.bf16.mxu0 %v4037
        %4969 = vmatmul.mubr.bf16.gmra.mrb[0].mxu0 %v4036
        %v4970 = vpop.f32.mrb[0].mxu0
        %v4971 = vadd.f32 %v4918, %v4970
        %v4972 = vpop.f32.mrb[0].mxu0
        %v4973 = vadd.f32 %v4920, %v4972
        %v4974 = vpop.f32.mrb[0].mxu0
        %v4975 = vadd.f32 %v4922, %v4974
        %v4976 = vpop.f32.mrb[0].mxu0
        %v4977 = vadd.f32 %v4924, %v4976
        %4978 = vdwg.mxu0
        %4979 = vmatprep.subr.bf16.mxu0 %v4661
        %4980 = vmatpush1.bf16.msra.mxu0 %v4660
        %4981 = vmatprep.subr.bf16.mxu0 %v4663
        %4982 = vmatpush1.bf16.msra.mxu0 %v4662
        %4983 = vmatprep.subr.bf16.mxu0 %v4665
        %4984 = vmatpush1.bf16.msra.mxu0 %v4664
        %4985 = vmatprep.subr.bf16.mxu0 %v4667
        %4986 = vmatpush1.bf16.msra.mxu0 %v4666
        %4987 = vmatprep.subr.bf16.mxu0 %v4669
        %4988 = vmatpush1.bf16.msra.mxu0 %v4668
        %4989 = vmatprep.subr.bf16.mxu0 %v4671
        %4990 = vmatpush1.bf16.msra.mxu0 %v4670
        %4991 = vmatprep.subr.bf16.mxu0 %v4673
        %4992 = vmatpush1.bf16.msra.mxu0 %v4672
        %4993 = vmatprep.subr.bf16.mxu0 %v4675
        %4994 = vmatpush1.bf16.msra.mxu0 %v4674
        %4995 = vmatprep.subr.bf16.mxu0 %v4677
        %4996 = vmatpush1.bf16.msra.mxu0 %v4676
        %4997 = vmatprep.subr.bf16.mxu0 %v4679
        %4998 = vmatpush1.bf16.msra.mxu0 %v4678
        %4999 = vmatprep.subr.bf16.mxu0 %v4681
        %5000 = vmatpush1.bf16.msra.mxu0 %v4680
        %5001 = vmatprep.subr.bf16.mxu0 %v4683
        %5002 = vmatpush1.bf16.msra.mxu0 %v4682
        %5003 = vmatprep.subr.bf16.mxu0 %v4685
        %5004 = vmatpush1.bf16.msra.mxu0 %v4684
        %5005 = vmatprep.subr.bf16.mxu0 %v4687
        %5006 = vmatpush1.bf16.msra.mxu0 %v4686
        %5007 = vmatprep.subr.bf16.mxu0 %v4689
        %5008 = vmatpush1.bf16.msra.mxu0 %v4688
        %5009 = vmatprep.subr.bf16.mxu0 %v4691
        %5010 = vmatpush1.bf16.msra.mxu0 %v4690
        %5011 = vmatprep.mubr.bf16.mxu0 %v4031
        %5012 = vmatmul.mubr.bf16.gmra.mrb[0].mxu0 %v4030
        %v5013 = vpop.f32.mrb[0].mxu0
        %v5014 = vadd.f32 %v4961, %v5013
        %v5015 = vpop.f32.mrb[0].mxu0
        %v5016 = vadd.f32 %v4963, %v5015
        %v5017 = vpop.f32.mrb[0].mxu0
        %v5018 = vadd.f32 %v4965, %v5017
        %v5019 = vpop.f32.mrb[0].mxu0
        %v5020 = vadd.f32 %v4967, %v5019
        %5021 = vmatprep.mubr.bf16.mxu0 %v4039
        %5022 = vmatmul.mubr.bf16.gmra.mrb[0].mxu0 %v4038
        %v5023 = vpop.f32.mrb[0].mxu0
        %v5024 = vadd.f32 %v4971, %v5023
        %v5025 = vpop.f32.mrb[0].mxu0
        %v5026 = vadd.f32 %v4973, %v5025
        %v5027 = vpop.f32.mrb[0].mxu0
        %v5028 = vadd.f32 %v4975, %v5027
        %v5029 = vpop.f32.mrb[0].mxu0
        %v5030 = vadd.f32 %v4977, %v5029
        %5031 = vdwg.mxu0
        %v5032 = vtanh.pop %v5014
        %v5033 = vtanh.pop %v5016
        %v5034 = vtanh.pop %v5018
        %v5035 = vtanh.pop %v5020
        %v5036 = vtanh.pop %v5024
        %v5037 = vtanh.pop %v5026
        %v5038 = vtanh.pop %v5028
        %v5039 = vtanh.pop %v5030
        %5040 = vst [vmem:[%s386] sm:$0xff] %v5032
        %5041 = vst [vmem:[%s386 + $0x8] sm:$0xff] %v5033
        %5042 = vst [vmem:[%s386 + $0x10] sm:$0xff] %v5034
        %5043 = vst [vmem:[%s386 + $0x18] sm:$0xff] %v5035
        %5044 = vst [vmem:[%s386 + $0x20] sm:$0xff] %v5036
        %5045 = vst [vmem:[%s386 + $0x28] sm:$0xff] %v5037
        %5046 = vst [vmem:[%s386 + $0x30] sm:$0xff] %v5038
        %5047 = vst [vmem:[%s386 + $0x38] sm:$0xff] %v5039
        %s5048 = smul.u32 4, %s24
        %p5049 = scmp.lt.s32.totalorder %s5048, 7
        %s5050 = scalar_select %p5049, %s5048, 7
        %s5051 = smul.addr %s5050, 2
        %s5052 = smul.addr %s5051, 8
        %s5053 = scalar_lea.vmem %s7, %s5052
        // Predicated region
        $region77: #{generator_forward.1} parent=47 // pred_check
          %p5054 = pneg %p194
        $region78: #{generator_forward.1} parent=47 // pred_check_branch
          %5056 = sbr.rel (%p5054) target = $region80
        $region79: #{generator_forward.1} parent=47 // pred_region
          %s5057 = smul.u32 4, %s24
        $region80: #{generator_forward.1} parent=47 // pred_fallthru
          _
      $region48: #{generator_forward.1} parent=5 // pred_fallthru
        _
      %p5058 = scmp.le.s32.totalorder 2, %s19
      // Predicated region
      $region81: #{generator_forward.1} parent=5 // pred_check
        %p5059 = pneg %p5058
      $region82: #{generator_forward.1} parent=5 // pred_check_branch
        %5061 = sbr.rel (%p5059) target = $region84
      $region83: #{generator_forward.1} parent=5 // pred_region
        %s5062 = ssub.s32 %s19, 2
        // Predicated region
        $region85: #{generator_forward.1} parent=83 // pred_check
          %p5063 = pneg %p200
        $region86: #{generator_forward.1} parent=83 // pred_check_branch
          %5065 = sbr.rel (%p5063) target = $region88
        $region87: #{generator_forward.1} parent=83 // pred_region
          %s5066 = smul.u32 4, %s25
          %p5067 = scmp.lt.s32.totalorder %s5066, 7
          %s5068 = scalar_select %p5067, %s5066, 7
          %s5069 = smul.addr %s5068, 2
          %s5070 = smul.addr %s5069, 8
          %s5071 = scalar_lea.vmem %s7, %s5070
        $region88: #{generator_forward.1} parent=83 // pred_fallthru
          _
      $region84: #{generator_forward.1} parent=5 // pred_fallthru
        _
    $region6: #{generator_forward.1} parent=1 // loop_footer
      %s23 = sadd.s32 1, %s19
    $region7: #{generator_forward.1} parent=1 // loop_footer_branch
      %18 = sbr.rel target = $region3
    $region8: #{generator_forward.1} parent=1 // loop_exit
      _
    %5072 = vsyncpa [#allocation3], 1
    %s5073 = scalar_lea.sflag [#allocation3], 1
    %5074 = vsyncpa %s5073, 1
    %5075 = vsyncpa [#allocation5], 1
    %5076 = vsyncpa [#allocation8], 1
    %5077 = vsyncpa [#allocation11], 1

</llo_original>
